<compile_context>
chip_gen: v6e
topology: v6e:2x2x1
jax: 0.10.0
libtpu: 0.0.40
codegen_flags: <defaults>
</compile_context>

<pallas_src>
import functools
import math

import jax
import jax.numpy as jnp
from jax.experimental import pallas as pl
from jax.experimental.pallas import tpu as pltpu


# ----------------------------- helpers ---------------------------------------


def _h_interp_coeffs(n_in, n_out):
    """Static (low_row, frac) pairs for bilinear x2, align_corners=True (py floats)."""
    out = []
    for y in range(n_out):
        pos = y * (n_in - 1) / (n_out - 1)
        lo = min(max(int(math.floor(pos)), 0), n_in - 2)
        out.append((lo, pos - lo))
    return out


def _bilinear_matrix(n_in, n_out):
    """(n_out, n_in) interpolation matrix for bilinear, align_corners=True."""
    pos = jnp.arange(n_out, dtype=jnp.float32) * ((n_in - 1) / (n_out - 1))
    lo = jnp.clip(jnp.floor(pos).astype(jnp.int32), 0, n_in - 2)
    frac = pos - lo.astype(jnp.float32)
    cols = jnp.arange(n_in, dtype=jnp.int32)
    one_lo = (cols[None, :] == lo[:, None]).astype(jnp.float32)
    one_hi = (cols[None, :] == (lo + 1)[:, None]).astype(jnp.float32)
    return one_lo * (1.0 - frac)[:, None] + one_hi * frac[:, None]


# ----------------------------- fused Pallas kernel ---------------------------


def _fused_up_res_block_kernel(x_ref, ux_ref, w1_ref, s1_ref, b1_ref,
                               w2_ref, s2_ref, b2_ref, noise_ref, out_ref,
                               up_scr, h_scr, *, H, W, Cin, C1, C2, Wp):
    """Upsample x2 -> {conv3x3+BN+ReLU, shortcut conv3x3+BN} -> conv3x3+BN+ReLU
    -> +noise -> +shortcut, all on one image (grid step = one batch element).

    Layout: channel-major; padded spatial plane (Ho+3, Wp) flattened onto the lane
    dimension, so a 3x3 tap is a static lane offset dy*Wp + dx and each conv is one
    im2col MXU matmul.
    """
    Ho, Wo = 2 * H, 2 * W
    Lw = Ho * Wp   # wide output length (Wp - Wo junk seam lanes per row)

    # ---- separable bilinear x2 upsample + zero 'same' padding ------------------
    # Width interpolation + horizontal zero pad in one small matmul.  Input rows are
    # ordered (h, c) so each output row's two source-row blocks are contiguous.
    a = jnp.dot(x_ref[0], ux_ref[...],
                preferred_element_type=jnp.float32)            # (H*Cin, Wp) f32

    up_scr[...] = jnp.zeros_like(up_scr)                       # zero borders
    for y, (h0, f) in enumerate(_h_interp_coeffs(H, Ho)):
        lo = a[h0 * Cin:(h0 + 1) * Cin, :]                     # (Cin, Wp)
        hi = a[(h0 + 1) * Cin:(h0 + 2) * Cin, :]
        row = lo * (1.0 - f) + hi * f
        q = y + 1                                              # +1: top border row
        up_scr[:, q * Wp:(q + 1) * Wp] = row.astype(up_scr.dtype)

    # ---- conv1 (main) + shortcut conv: one merged im2col matmul ---------------
    patches1 = jnp.concatenate(
        [up_scr[:, dy * Wp + dx: dy * Wp + dx + Lw]
         for dy in range(3) for dx in range(3)], axis=0)       # (9*Cin, Lw) bf16
    acc1 = jnp.dot(w1_ref[...], patches1,
                   preferred_element_type=jnp.float32)         # (C1+C2, Lw) f32
    z1 = acc1 * s1_ref[...] + b1_ref[...]                      # folded BN
    h = jnp.maximum(z1[:C1], 0.0)                              # main branch (C1, Lw)
    sc = z1[C1:]                                               # shortcut    (C2, Lw)

    # ---- place h (valid columns only) into a zero-bordered padded plane -------
    h_scr[...] = jnp.zeros_like(h_scr)
    for y in range(Ho):
        q = y + 1
        h_scr[:, q * Wp + 1: q * Wp + 1 + Wo] = (
            h[:, y * Wp: y * Wp + Wo].astype(h_scr.dtype))

    # ---- conv2 (main) + BN + ReLU ----------------------------------------------
    patches2 = jnp.concatenate(
        [h_scr[:, dy * Wp + dx: dy * Wp + dx + Lw]
         for dy in range(3) for dx in range(3)], axis=0)       # (9*C1, Lw) bf16
    acc2 = jnp.dot(w2_ref[...], patches2,
                   preferred_element_type=jnp.float32)         # (C2, Lw) f32
    y2 = jnp.maximum(acc2 * s2_ref[...] + b2_ref[...], 0.0)

    # ---- noise + residual shortcut ---------------------------------------------
    final = y2 + sc + noise_ref[0]                             # noise (1, Lw) bcast

    # ---- repack wide rows (stride Wp) into the dense lane-packed output -------
    for y in range(Ho):
        out_ref[0, :, y * Wo:(y + 1) * Wo] = (
            final[:, y * Wp: y * Wp + Wo].astype(out_ref.dtype))


# ----------------------------- public wrapper --------------------------------


def simple_noise_res_up_conv_block(x_nchw, params, *, noise_mode="random",
                                   noise_seed=0):
    """NCHW in, NCHW out; matches SimpleNoiseResUpConvBlock.forward (folded BN)."""
    N, Cin, H, W = x_nchw.shape
    Ho, Wo = 2 * H, 2 * W
    # Wide row stride: >= Wo+2 (one zero border column each side) and chosen so that
    # Lw = Ho*Wp is a multiple of 128 (lane-dense vregs / stores).
    step = 128 // math.gcd(Ho, 128)
    Wp = ((Wo + 2 + step - 1) // step) * step
    Hp = Ho + 3                      # top border + image + bottom border + slack row
    Lp, Lw, Lo = Hp * Wp, Ho * Wp, Ho * Wo

    C1 = params["w_m1"].shape[2]
    C2 = params["w_sc"].shape[2]
    assert params["w_m1"].shape[3] == Cin

    # Input rows ordered (h, c) so the in-kernel height lerp reads contiguous blocks.
    x_hc = jnp.transpose(x_nchw, (0, 2, 1, 3)).reshape(N, H * Cin, W)
    x_hc = x_hc.astype(jnp.bfloat16)

    # Width-interp matrix with horizontal zero padding baked in (bf16, MXU native).
    ux = _bilinear_matrix(W, Wo)                                       # (Wo, W)
    uxT_pad = jnp.zeros((W, Wp), jnp.float32).at[:, 1:Wo + 1].set(ux.T)
    uxT_pad = uxT_pad.astype(jnp.bfloat16)

    def merge_w(w_kkoi):   # (3, 3, O, I) -> (O, 9*I), tap-major (matches im2col)
        _, _, o, i = w_kkoi.shape
        return jnp.transpose(w_kkoi, (2, 0, 1, 3)).reshape(o, 9 * i)

    w1c = jnp.concatenate([merge_w(params["w_m1"]), merge_w(params["w_sc"])],
                          axis=0).astype(jnp.bfloat16)                 # (C1+C2, 9*Cin)
    s1c = jnp.concatenate([params["s_m1"], params["s_sc"]], 0).astype(jnp.float32)
    b1c = jnp.concatenate([params["b_m1"], params["b_sc"]], 0).astype(jnp.float32)
    w2 = merge_w(params["w_m2"]).astype(jnp.bfloat16)                  # (C2, 9*C1)
    s2 = params["s_m2"].astype(jnp.float32)
    b2 = params["b_m2"].astype(jnp.float32)

    strength = jnp.asarray(params["noise_strength"], jnp.float32)
    if noise_mode == "random":
        key = jax.random.PRNGKey(noise_seed)
        noise = jax.random.normal(key, (N, 1, Ho, Wo), jnp.float32) * strength
    elif noise_mode == "const":
        noise = jnp.broadcast_to(
            (params["noise_const"].astype(jnp.float32) * strength)[None, None],
            (N, 1, Ho, Wo))
    else:
        noise = jnp.zeros((N, 1, Ho, Wo), jnp.float32)
    noise_wide = jnp.pad(noise, ((0, 0), (0, 0), (0, 0), (0, Wp - Wo)))
    noise_wide = noise_wide.reshape(N, 1, Lw)

    kern = functools.partial(_fused_up_res_block_kernel,
                             H=H, W=W, Cin=Cin, C1=C1, C2=C2, Wp=Wp)

    out_flat = pl.pallas_call(
        kern,
        out_shape=jax.ShapeDtypeStruct((N, C2, Lo), jnp.float32),
        grid=(N,),
        in_specs=[
            pl.BlockSpec((1, H * Cin, W), lambda n: (n, 0, 0)),
            pl.BlockSpec((W, Wp), lambda n: (0, 0)),
            pl.BlockSpec((C1 + C2, 9 * Cin), lambda n: (0, 0)),
            pl.BlockSpec((C1 + C2, 1), lambda n: (0, 0)),
            pl.BlockSpec((C1 + C2, 1), lambda n: (0, 0)),
            pl.BlockSpec((C2, 9 * C1), lambda n: (0, 0)),
            pl.BlockSpec((C2, 1), lambda n: (0, 0)),
            pl.BlockSpec((C2, 1), lambda n: (0, 0)),
            pl.BlockSpec((1, 1, Lw), lambda n: (n, 0, 0)),
        ],
        out_specs=pl.BlockSpec((1, C2, Lo), lambda n: (n, 0, 0)),
        scratch_shapes=[
            pltpu.VMEM((Cin, Lp), jnp.bfloat16),   # padded upsampled plane
            pltpu.VMEM((C1, Lp), jnp.bfloat16),    # padded h plane
        ],
        compiler_params=pltpu.CompilerParams(dimension_semantics=("parallel",)),
    )(x_hc, uxT_pad, w1c, s1c, b1c, w2, s2, b2, noise_wide)

    # Metadata-only reshape back to NCHW (the kernel already wrote packed rows).
    return out_flat.reshape(N, C2, Ho, Wo)


# ----------------------------- parameters ------------------------------------


def make_params(key, imsize, nc1, nc2):
    ks = jax.random.split(key, 7)

    def conv_w(k, cin, cout):
        # torch layout (cout, cin, 3, 3) -> kernel layout (3, 3, cout, cin)
        w = jax.random.normal(k, (cout, cin, 3, 3), jnp.float32) / jnp.sqrt(9.0 * cin)
        return jnp.transpose(w, (2, 3, 0, 1))

    def bn_fold(k, c):
        kg, kb, km, kv = jax.random.split(k, 4)
        gamma = 1.0 + 0.1 * jax.random.normal(kg, (c,), jnp.float32)
        beta = 0.1 * jax.random.normal(kb, (c,), jnp.float32)
        mean = 0.1 * jax.random.normal(km, (c,), jnp.float32)
        var = 0.5 + jnp.abs(jax.random.normal(kv, (c,), jnp.float32))
        scale = gamma * jax.lax.rsqrt(var + 1e-5)
        bias = beta - mean * scale
        return scale.reshape(c, 1), bias.reshape(c, 1)

    s_m1, b_m1 = bn_fold(ks[3], nc1)
    s_m2, b_m2 = bn_fold(ks[4], nc2)
    s_sc, b_sc = bn_fold(ks[5], nc2)
    return dict(
        w_m1=conv_w(ks[0], nc1, nc1),
        w_m2=conv_w(ks[1], nc1, nc2),
        w_sc=conv_w(ks[2], nc1, nc2),
        s_m1=s_m1, b_m1=b_m1,
        s_m2=s_m2, b_m2=b_m2,
        s_sc=s_sc, b_sc=b_sc,
        noise_const=jax.random.normal(ks[6], (imsize, imsize), jnp.float32),
        # nn.Parameter(torch.zeros([])) at init; set nonzero so the noise path
        # actually contributes in the demo.
        noise_strength=jnp.float32(0.1),
    )


# ----------------------------- pure-JAX reference ----------------------------


def _reference_block(x_nchw, params, noise=None):
    """Independent (gather-upsample + lax.conv) reference, folded-BN inference."""
    def conv3x3(v, w_kkoi):
        w_oihw = jnp.transpose(w_kkoi, (2, 3, 0, 1))
        return jax.lax.conv_general_dilated(
            v, w_oihw, window_strides=(1, 1), padding=((1, 1), (1, 1)),
            dimension_numbers=("NCHW", "OIHW", "NCHW"))

    def bn(v, s, b):
        return v * s.reshape(1, -1, 1, 1) + b.reshape(1, -1, 1, 1)

    N, C, H, W = x_nchw.shape
    Ho, Wo = 2 * H, 2 * W

    def coords(n_in, n_out):
        pos = jnp.arange(n_out, dtype=jnp.float32) * (n_in - 1) / (n_out - 1)
        lo = jnp.clip(jnp.floor(pos).astype(jnp.int32), 0, n_in - 2)
        return lo, pos - lo.astype(jnp.float32)

    y0, fy = coords(H, Ho)
    x0, fx = coords(W, Wo)
    rows = (x_nchw[:, :, y0, :] * (1.0 - fy)[None, None, :, None]
            + x_nchw[:, :, y0 + 1, :] * fy[None, None, :, None])
    up = (rows[:, :, :, x0] * (1.0 - fx)[None, None, None, :]
          + rows[:, :, :, x0 + 1] * fx[None, None, None, :])

    h = jax.nn.relu(bn(conv3x3(up, params["w_m1"]), params["s_m1"], params["b_m1"]))
    y = jax.nn.relu(bn(conv3x3(h, params["w_m2"]), params["s_m2"], params["b_m2"]))
    sc = bn(conv3x3(up, params["w_sc"]), params["s_sc"], params["b_sc"])
    if noise is not None:
        y = y + noise
    return y + sc


# ----------------------------- demo -------------------------------------------


if __name__ == "__main__":
    N, nc1, nc2 = 2, 4, 8
    Hin = Win = 16
    imsize = 2 * Hin  # noise_const spatial size == upsampled spatial size

    root = jax.random.PRNGKey(0)
    kp, kx = jax.random.split(root)
    params = make_params(kp, imsize, nc1, nc2)
    x = jax.random.normal(kx, (N, nc1, Hin, Win), jnp.float32)  # NCHW like torch

    fwd = jax.jit(simple_noise_res_up_conv_block, static_argnames=("noise_mode",))

    # random-noise mode
    out = jax.block_until_ready(fwd(x, params, noise_mode="random", noise_seed=123))
    assert out.shape == (N, nc2, imsize, imsize), out.shape
    assert bool(jnp.isfinite(out).all())

    # deterministic modes checked against an independent pure-JAX reference
    out_none = jax.block_until_ready(fwd(x, params, noise_mode="none", noise_seed=0))
    ref_none = _reference_block(x, params)
    err_none = float(jnp.max(jnp.abs(out_none - ref_none)))
    assert err_none < 1e-1, f"max abs error (none) vs reference: {err_none}"

    out_const = jax.block_until_ready(fwd(x, params, noise_mode="const", noise_seed=0))
    ref_const = _reference_block(
        x, params,
        noise=(params["noise_const"] * params["noise_strength"])[None, None, :, :])
    err_const = float(jnp.max(jnp.abs(out_const - ref_const)))
    assert err_const < 1e-1, f"max abs error (const) vs reference: {err_const}"

    print("KERNEL_OK")
</pallas_src>

<mosaic_0001>
module attributes {stable_mosaic.version = 11 : i64} {
  func.func @_fused_up_res_block_kernel(%arg0: i32, %arg1: memref<1x64x16xbf16, #tpu.memory_space<vmem>>, %arg2: memref<16x36xbf16, #tpu.memory_space<vmem>>, %arg3: memref<12x36xbf16, #tpu.memory_space<vmem>>, %arg4: memref<12x1xf32, #tpu.memory_space<vmem>>, %arg5: memref<12x1xf32, #tpu.memory_space<vmem>>, %arg6: memref<8x36xbf16, #tpu.memory_space<vmem>>, %arg7: memref<8x1xf32, #tpu.memory_space<vmem>>, %arg8: memref<8x1xf32, #tpu.memory_space<vmem>>, %arg9: memref<1x1x1152xf32, #tpu.memory_space<vmem>>, %arg10: memref<1x8x1024xf32, #tpu.memory_space<vmem>>, %arg11: memref<4x1260xbf16, #tpu.memory_space<vmem>>, %arg12: memref<4x1260xbf16, #tpu.memory_space<vmem>>) attributes {dimension_semantics = [#tpu.dimension_semantics<parallel>], iteration_bounds = array<i64: 2>, scalar_prefetch = 0 : i64, scratch_operands = 2 : i64, tpu.core_type = #tpu.core_type<tc>, window_params = [{transform_indices = @transform_0, window_bounds = array<i64: 1, 64, 16>}, {pipeline_mode = #tpu.pipeline_mode<synchronous>, transform_indices = @transform_1, window_bounds = array<i64: 16, 36>}, {pipeline_mode = #tpu.pipeline_mode<synchronous>, transform_indices = @transform_2, window_bounds = array<i64: 12, 36>}, {pipeline_mode = #tpu.pipeline_mode<synchronous>, transform_indices = @transform_3, window_bounds = array<i64: 12, 1>}, {pipeline_mode = #tpu.pipeline_mode<synchronous>, transform_indices = @transform_4, window_bounds = array<i64: 12, 1>}, {pipeline_mode = #tpu.pipeline_mode<synchronous>, transform_indices = @transform_5, window_bounds = array<i64: 8, 36>}, {pipeline_mode = #tpu.pipeline_mode<synchronous>, transform_indices = @transform_6, window_bounds = array<i64: 8, 1>}, {pipeline_mode = #tpu.pipeline_mode<synchronous>, transform_indices = @transform_7, window_bounds = array<i64: 8, 1>}, {transform_indices = @transform_8, window_bounds = array<i64: 1, 1, 1152>}, {transform_indices = @transform_9, window_bounds = array<i64: 1, 8, 1024>}]} {
    %c0 = arith.constant 0 : index
    %c0_0 = arith.constant 0 : index
    %c0_1 = arith.constant 0 : index
    %0 = vector.load %arg1[%c0, %c0_0, %c0_1] : memref<1x64x16xbf16, #tpu.memory_space<vmem>>, vector<1x64x16xbf16>
    %1 = vector.shape_cast %0 : vector<1x64x16xbf16> to vector<64x16xbf16>
    %c0_2 = arith.constant 0 : index
    %c0_3 = arith.constant 0 : index
    %2 = vector.load %arg2[%c0_2, %c0_3] : memref<16x36xbf16, #tpu.memory_space<vmem>>, vector<16x36xbf16>
    %cst = arith.constant dense<0.000000e+00> : vector<64x36xf32>
    %3 = tpu.matmul %1, %2, %cst {dimension_numbers = #tpu.dot_dimension_numbers<[1], [0], [0], [1], [0, 0, 1, 1], [], []>} : vector<64x16xbf16>, vector<16x36xbf16>, vector<64x36xf32> -> vector<64x36xf32>
    %cst_4 = arith.constant 0.000000e+00 : bf16
    %4 = vector.broadcast %cst_4 : bf16 to vector<4x1260xbf16>
    %c0_5 = arith.constant 0 : index
    %c0_6 = arith.constant 0 : index
    %5 = vector.load %arg11[%c0_5, %c0_6] : memref<4x1260xbf16, #tpu.memory_space<vmem>>, vector<4x1260xbf16>
    tpu.vector_store %arg11[%c0_5, %c0_6], %4 {strides = array<i32>} : memref<4x1260xbf16, #tpu.memory_space<vmem>>, vector<4x1260xbf16>,
    %6 = vector.extract_strided_slice %3 {offsets = [0, 0], sizes = [4, 36], strides = [1, 1]} : vector<64x36xf32> to vector<4x36xf32>
    %7 = vector.extract_strided_slice %3 {offsets = [4, 0], sizes = [4, 36], strides = [1, 1]} : vector<64x36xf32> to vector<4x36xf32>
    %cst_7 = arith.constant 1.000000e+00 : f32
    %8 = vector.broadcast %cst_7 : f32 to vector<4x36xf32>
    %9 = arith.mulf %6, %8 : vector<4x36xf32>
    %cst_8 = arith.constant 0.000000e+00 : f32
    %10 = vector.broadcast %cst_8 : f32 to vector<4x36xf32>
    %11 = arith.mulf %7, %10 : vector<4x36xf32>
    %12 = arith.addf %9, %11 : vector<4x36xf32>
    %13 = arith.truncf %12 : vector<4x36xf32> to vector<4x36xbf16>
    %c0_9 = arith.constant 0 : index
    %c36 = arith.constant 36 : index
    %14 = vector.load %arg11[%c0_9, %c36] : memref<4x1260xbf16, #tpu.memory_space<vmem>>, vector<4x36xbf16>
    tpu.vector_store %arg11[%c0_9, %c36], %13 {strides = array<i32>} : memref<4x1260xbf16, #tpu.memory_space<vmem>>, vector<4x36xbf16>,
    %15 = vector.extract_strided_slice %3 {offsets = [0, 0], sizes = [4, 36], strides = [1, 1]} : vector<64x36xf32> to vector<4x36xf32>
    %16 = vector.extract_strided_slice %3 {offsets = [4, 0], sizes = [4, 36], strides = [1, 1]} : vector<64x36xf32> to vector<4x36xf32>
    %cst_10 = arith.constant 5.161290e-01 : f32
    %17 = vector.broadcast %cst_10 : f32 to vector<4x36xf32>
    %18 = arith.mulf %15, %17 : vector<4x36xf32>
    %cst_11 = arith.constant 0.483870953 : f32
    %19 = vector.broadcast %cst_11 : f32 to vector<4x36xf32>
    %20 = arith.mulf %16, %19 : vector<4x36xf32>
    %21 = arith.addf %18, %20 : vector<4x36xf32>
    %22 = arith.truncf %21 : vector<4x36xf32> to vector<4x36xbf16>
    %c0_12 = arith.constant 0 : index
    %c72 = arith.constant 72 : index
    %23 = vector.load %arg11[%c0_12, %c72] : memref<4x1260xbf16, #tpu.memory_space<vmem>>, vector<4x36xbf16>
    tpu.vector_store %arg11[%c0_12, %c72], %22 {strides = array<i32>} : memref<4x1260xbf16, #tpu.memory_space<vmem>>, vector<4x36xbf16>,
    %24 = vector.extract_strided_slice %3 {offsets = [0, 0], sizes = [4, 36], strides = [1, 1]} : vector<64x36xf32> to vector<4x36xf32>
    %25 = vector.extract_strided_slice %3 {offsets = [4, 0], sizes = [4, 36], strides = [1, 1]} : vector<64x36xf32> to vector<4x36xf32>
    %cst_13 = arith.constant 0.0322580636 : f32
    %26 = vector.broadcast %cst_13 : f32 to vector<4x36xf32>
    %27 = arith.mulf %24, %26 : vector<4x36xf32>
    %cst_14 = arith.constant 0.967741906 : f32
    %28 = vector.broadcast %cst_14 : f32 to vector<4x36xf32>
    %29 = arith.mulf %25, %28 : vector<4x36xf32>
    %30 = arith.addf %27, %29 : vector<4x36xf32>
    %31 = arith.truncf %30 : vector<4x36xf32> to vector<4x36xbf16>
    %c0_15 = arith.constant 0 : index
    %c108 = arith.constant 108 : index
    %32 = vector.load %arg11[%c0_15, %c108] : memref<4x1260xbf16, #tpu.memory_space<vmem>>, vector<4x36xbf16>
    tpu.vector_store %arg11[%c0_15, %c108], %31 {strides = array<i32>} : memref<4x1260xbf16, #tpu.memory_space<vmem>>, vector<4x36xbf16>,
    %33 = vector.extract_strided_slice %3 {offsets = [4, 0], sizes = [4, 36], strides = [1, 1]} : vector<64x36xf32> to vector<4x36xf32>
    %34 = vector.extract_strided_slice %3 {offsets = [8, 0], sizes = [4, 36], strides = [1, 1]} : vector<64x36xf32> to vector<4x36xf32>
    %cst_16 = arith.constant 0.54838711 : f32
    %35 = vector.broadcast %cst_16 : f32 to vector<4x36xf32>
    %36 = arith.mulf %33, %35 : vector<4x36xf32>
    %cst_17 = arith.constant 0.45161289 : f32
    %37 = vector.broadcast %cst_17 : f32 to vector<4x36xf32>
    %38 = arith.mulf %34, %37 : vector<4x36xf32>
    %39 = arith.addf %36, %38 : vector<4x36xf32>
    %40 = arith.truncf %39 : vector<4x36xf32> to vector<4x36xbf16>
    %c0_18 = arith.constant 0 : index
    %c144 = arith.constant 144 : index
    %41 = vector.load %arg11[%c0_18, %c144] : memref<4x1260xbf16, #tpu.memory_space<vmem>>, vector<4x36xbf16>
    tpu.vector_store %arg11[%c0_18, %c144], %40 {strides = array<i32>} : memref<4x1260xbf16, #tpu.memory_space<vmem>>, vector<4x36xbf16>,
    %42 = vector.extract_strided_slice %3 {offsets = [4, 0], sizes = [4, 36], strides = [1, 1]} : vector<64x36xf32> to vector<4x36xf32>
    %43 = vector.extract_strided_slice %3 {offsets = [8, 0], sizes = [4, 36], strides = [1, 1]} : vector<64x36xf32> to vector<4x36xf32>
    %cst_19 = arith.constant 0.0645161271 : f32
    %44 = vector.broadcast %cst_19 : f32 to vector<4x36xf32>
    %45 = arith.mulf %42, %44 : vector<4x36xf32>
    %cst_20 = arith.constant 0.935483872 : f32
    %46 = vector.broadcast %cst_20 : f32 to vector<4x36xf32>
    %47 = arith.mulf %43, %46 : vector<4x36xf32>
    %48 = arith.addf %45, %47 : vector<4x36xf32>
    %49 = arith.truncf %48 : vector<4x36xf32> to vector<4x36xbf16>
    %c0_21 = arith.constant 0 : index
    %c180 = arith.constant 180 : index
    %50 = vector.load %arg11[%c0_21, %c180] : memref<4x1260xbf16, #tpu.memory_space<vmem>>, vector<4x36xbf16>
    tpu.vector_store %arg11[%c0_21, %c180], %49 {strides = array<i32>} : memref<4x1260xbf16, #tpu.memory_space<vmem>>, vector<4x36xbf16>,
    %51 = vector.extract_strided_slice %3 {offsets = [8, 0], sizes = [4, 36], strides = [1, 1]} : vector<64x36xf32> to vector<4x36xf32>
    %52 = vector.extract_strided_slice %3 {offsets = [12, 0], sizes = [4, 36], strides = [1, 1]} : vector<64x36xf32> to vector<4x36xf32>
    %cst_22 = arith.constant 0.580645144 : f32
    %53 = vector.broadcast %cst_22 : f32 to vector<4x36xf32>
    %54 = arith.mulf %51, %53 : vector<4x36xf32>
    %cst_23 = arith.constant 0.419354826 : f32
    %55 = vector.broadcast %cst_23 : f32 to vector<4x36xf32>
    %56 = arith.mulf %52, %55 : vector<4x36xf32>
    %57 = arith.addf %54, %56 : vector<4x36xf32>
    %58 = arith.truncf %57 : vector<4x36xf32> to vector<4x36xbf16>
    %c0_24 = arith.constant 0 : index
    %c216 = arith.constant 216 : index
    %59 = vector.load %arg11[%c0_24, %c216] : memref<4x1260xbf16, #tpu.memory_space<vmem>>, vector<4x36xbf16>
    tpu.vector_store %arg11[%c0_24, %c216], %58 {strides = array<i32>} : memref<4x1260xbf16, #tpu.memory_space<vmem>>, vector<4x36xbf16>,
    %60 = vector.extract_strided_slice %3 {offsets = [8, 0], sizes = [4, 36], strides = [1, 1]} : vector<64x36xf32> to vector<4x36xf32>
    %61 = vector.extract_strided_slice %3 {offsets = [12, 0], sizes = [4, 36], strides = [1, 1]} : vector<64x36xf32> to vector<4x36xf32>
    %cst_25 = arith.constant 0.0967741906 : f32
    %62 = vector.broadcast %cst_25 : f32 to vector<4x36xf32>
    %63 = arith.mulf %60, %62 : vector<4x36xf32>
    %cst_26 = arith.constant 0.903225779 : f32
    %64 = vector.broadcast %cst_26 : f32 to vector<4x36xf32>
    %65 = arith.mulf %61, %64 : vector<4x36xf32>
    %66 = arith.addf %63, %65 : vector<4x36xf32>
    %67 = arith.truncf %66 : vector<4x36xf32> to vector<4x36xbf16>
    %c0_27 = arith.constant 0 : index
    %c252 = arith.constant 252 : index
    %68 = vector.load %arg11[%c0_27, %c252] : memref<4x1260xbf16, #tpu.memory_space<vmem>>, vector<4x36xbf16>
    tpu.vector_store %arg11[%c0_27, %c252], %67 {strides = array<i32>} : memref<4x1260xbf16, #tpu.memory_space<vmem>>, vector<4x36xbf16>,
    %69 = vector.extract_strided_slice %3 {offsets = [12, 0], sizes = [4, 36], strides = [1, 1]} : vector<64x36xf32> to vector<4x36xf32>
    %70 = vector.extract_strided_slice %3 {offsets = [16, 0], sizes = [4, 36], strides = [1, 1]} : vector<64x36xf32> to vector<4x36xf32>
    %cst_28 = arith.constant 0.612903237 : f32
    %71 = vector.broadcast %cst_28 : f32 to vector<4x36xf32>
    %72 = arith.mulf %69, %71 : vector<4x36xf32>
    %cst_29 = arith.constant 0.387096763 : f32
    %73 = vector.broadcast %cst_29 : f32 to vector<4x36xf32>
    %74 = arith.mulf %70, %73 : vector<4x36xf32>
    %75 = arith.addf %72, %74 : vector<4x36xf32>
    %76 = arith.truncf %75 : vector<4x36xf32> to vector<4x36xbf16>
    %c0_30 = arith.constant 0 : index
    %c288 = arith.constant 288 : index
    %77 = vector.load %arg11[%c0_30, %c288] : memref<4x1260xbf16, #tpu.memory_space<vmem>>, vector<4x36xbf16>
    tpu.vector_store %arg11[%c0_30, %c288], %76 {strides = array<i32>} : memref<4x1260xbf16, #tpu.memory_space<vmem>>, vector<4x36xbf16>,
    %78 = vector.extract_strided_slice %3 {offsets = [12, 0], sizes = [4, 36], strides = [1, 1]} : vector<64x36xf32> to vector<4x36xf32>
    %79 = vector.extract_strided_slice %3 {offsets = [16, 0], sizes = [4, 36], strides = [1, 1]} : vector<64x36xf32> to vector<4x36xf32>
    %cst_31 = arith.constant 0.129032254 : f32
    %80 = vector.broadcast %cst_31 : f32 to vector<4x36xf32>
    %81 = arith.mulf %78, %80 : vector<4x36xf32>
    %cst_32 = arith.constant 0.870967745 : f32
    %82 = vector.broadcast %cst_32 : f32 to vector<4x36xf32>
    %83 = arith.mulf %79, %82 : vector<4x36xf32>
    %84 = arith.addf %81, %83 : vector<4x36xf32>
    %85 = arith.truncf %84 : vector<4x36xf32> to vector<4x36xbf16>
    %c0_33 = arith.constant 0 : index
    %c324 = arith.constant 324 : index
    %86 = vector.load %arg11[%c0_33, %c324] : memref<4x1260xbf16, #tpu.memory_space<vmem>>, vector<4x36xbf16>
    tpu.vector_store %arg11[%c0_33, %c324], %85 {strides = array<i32>} : memref<4x1260xbf16, #tpu.memory_space<vmem>>, vector<4x36xbf16>,
    %87 = vector.extract_strided_slice %3 {offsets = [16, 0], sizes = [4, 36], strides = [1, 1]} : vector<64x36xf32> to vector<4x36xf32>
    %88 = vector.extract_strided_slice %3 {offsets = [20, 0], sizes = [4, 36], strides = [1, 1]} : vector<64x36xf32> to vector<4x36xf32>
    %cst_34 = arith.constant 0.645161271 : f32
    %89 = vector.broadcast %cst_34 : f32 to vector<4x36xf32>
    %90 = arith.mulf %87, %89 : vector<4x36xf32>
    %cst_35 = arith.constant 0.354838699 : f32
    %91 = vector.broadcast %cst_35 : f32 to vector<4x36xf32>
    %92 = arith.mulf %88, %91 : vector<4x36xf32>
    %93 = arith.addf %90, %92 : vector<4x36xf32>
    %94 = arith.truncf %93 : vector<4x36xf32> to vector<4x36xbf16>
    %c0_36 = arith.constant 0 : index
    %c360 = arith.constant 360 : index
    %95 = vector.load %arg11[%c0_36, %c360] : memref<4x1260xbf16, #tpu.memory_space<vmem>>, vector<4x36xbf16>
    tpu.vector_store %arg11[%c0_36, %c360], %94 {strides = array<i32>} : memref<4x1260xbf16, #tpu.memory_space<vmem>>, vector<4x36xbf16>,
    %96 = vector.extract_strided_slice %3 {offsets = [16, 0], sizes = [4, 36], strides = [1, 1]} : vector<64x36xf32> to vector<4x36xf32>
    %97 = vector.extract_strided_slice %3 {offsets = [20, 0], sizes = [4, 36], strides = [1, 1]} : vector<64x36xf32> to vector<4x36xf32>
    %cst_37 = arith.constant 0.161290318 : f32
    %98 = vector.broadcast %cst_37 : f32 to vector<4x36xf32>
    %99 = arith.mulf %96, %98 : vector<4x36xf32>
    %cst_38 = arith.constant 0.838709652 : f32
    %100 = vector.broadcast %cst_38 : f32 to vector<4x36xf32>
    %101 = arith.mulf %97, %100 : vector<4x36xf32>
    %102 = arith.addf %99, %101 : vector<4x36xf32>
    %103 = arith.truncf %102 : vector<4x36xf32> to vector<4x36xbf16>
    %c0_39 = arith.constant 0 : index
    %c396 = arith.constant 396 : index
    %104 = vector.load %arg11[%c0_39, %c396] : memref<4x1260xbf16, #tpu.memory_space<vmem>>, vector<4x36xbf16>
    tpu.vector_store %arg11[%c0_39, %c396], %103 {strides = array<i32>} : memref<4x1260xbf16, #tpu.memory_space<vmem>>, vector<4x36xbf16>,
    %105 = vector.extract_strided_slice %3 {offsets = [20, 0], sizes = [4, 36], strides = [1, 1]} : vector<64x36xf32> to vector<4x36xf32>
    %106 = vector.extract_strided_slice %3 {offsets = [24, 0], sizes = [4, 36], strides = [1, 1]} : vector<64x36xf32> to vector<4x36xf32>
    %cst_40 = arith.constant 0.677419364 : f32
    %107 = vector.broadcast %cst_40 : f32 to vector<4x36xf32>
    %108 = arith.mulf %105, %107 : vector<4x36xf32>
    %cst_41 = arith.constant 0.322580636 : f32
    %109 = vector.broadcast %cst_41 : f32 to vector<4x36xf32>
    %110 = arith.mulf %106, %109 : vector<4x36xf32>
    %111 = arith.addf %108, %110 : vector<4x36xf32>
    %112 = arith.truncf %111 : vector<4x36xf32> to vector<4x36xbf16>
    %c0_42 = arith.constant 0 : index
    %c432 = arith.constant 432 : index
    %113 = vector.load %arg11[%c0_42, %c432] : memref<4x1260xbf16, #tpu.memory_space<vmem>>, vector<4x36xbf16>
    tpu.vector_store %arg11[%c0_42, %c432], %112 {strides = array<i32>} : memref<4x1260xbf16, #tpu.memory_space<vmem>>, vector<4x36xbf16>,
    %114 = vector.extract_strided_slice %3 {offsets = [20, 0], sizes = [4, 36], strides = [1, 1]} : vector<64x36xf32> to vector<4x36xf32>
    %115 = vector.extract_strided_slice %3 {offsets = [24, 0], sizes = [4, 36], strides = [1, 1]} : vector<64x36xf32> to vector<4x36xf32>
    %cst_43 = arith.constant 0.193548381 : f32
    %116 = vector.broadcast %cst_43 : f32 to vector<4x36xf32>
    %117 = arith.mulf %114, %116 : vector<4x36xf32>
    %cst_44 = arith.constant 0.806451618 : f32
    %118 = vector.broadcast %cst_44 : f32 to vector<4x36xf32>
    %119 = arith.mulf %115, %118 : vector<4x36xf32>
    %120 = arith.addf %117, %119 : vector<4x36xf32>
    %121 = arith.truncf %120 : vector<4x36xf32> to vector<4x36xbf16>
    %c0_45 = arith.constant 0 : index
    %c468 = arith.constant 468 : index
    %122 = vector.load %arg11[%c0_45, %c468] : memref<4x1260xbf16, #tpu.memory_space<vmem>>, vector<4x36xbf16>
    tpu.vector_store %arg11[%c0_45, %c468], %121 {strides = array<i32>} : memref<4x1260xbf16, #tpu.memory_space<vmem>>, vector<4x36xbf16>,
    %123 = vector.extract_strided_slice %3 {offsets = [24, 0], sizes = [4, 36], strides = [1, 1]} : vector<64x36xf32> to vector<4x36xf32>
    %124 = vector.extract_strided_slice %3 {offsets = [28, 0], sizes = [4, 36], strides = [1, 1]} : vector<64x36xf32> to vector<4x36xf32>
    %cst_46 = arith.constant 0.709677398 : f32
    %125 = vector.broadcast %cst_46 : f32 to vector<4x36xf32>
    %126 = arith.mulf %123, %125 : vector<4x36xf32>
    %cst_47 = arith.constant 0.290322572 : f32
    %127 = vector.broadcast %cst_47 : f32 to vector<4x36xf32>
    %128 = arith.mulf %124, %127 : vector<4x36xf32>
    %129 = arith.addf %126, %128 : vector<4x36xf32>
    %130 = arith.truncf %129 : vector<4x36xf32> to vector<4x36xbf16>
    %c0_48 = arith.constant 0 : index
    %c504 = arith.constant 504 : index
    %131 = vector.load %arg11[%c0_48, %c504] : memref<4x1260xbf16, #tpu.memory_space<vmem>>, vector<4x36xbf16>
    tpu.vector_store %arg11[%c0_48, %c504], %130 {strides = array<i32>} : memref<4x1260xbf16, #tpu.memory_space<vmem>>, vector<4x36xbf16>,
    %132 = vector.extract_strided_slice %3 {offsets = [24, 0], sizes = [4, 36], strides = [1, 1]} : vector<64x36xf32> to vector<4x36xf32>
    %133 = vector.extract_strided_slice %3 {offsets = [28, 0], sizes = [4, 36], strides = [1, 1]} : vector<64x36xf32> to vector<4x36xf32>
    %cst_49 = arith.constant 0.225806445 : f32
    %134 = vector.broadcast %cst_49 : f32 to vector<4x36xf32>
    %135 = arith.mulf %132, %134 : vector<4x36xf32>
    %cst_50 = arith.constant 0.774193525 : f32
    %136 = vector.broadcast %cst_50 : f32 to vector<4x36xf32>
    %137 = arith.mulf %133, %136 : vector<4x36xf32>
    %138 = arith.addf %135, %137 : vector<4x36xf32>
    %139 = arith.truncf %138 : vector<4x36xf32> to vector<4x36xbf16>
    %c0_51 = arith.constant 0 : index
    %c540 = arith.constant 540 : index
    %140 = vector.load %arg11[%c0_51, %c540] : memref<4x1260xbf16, #tpu.memory_space<vmem>>, vector<4x36xbf16>
    tpu.vector_store %arg11[%c0_51, %c540], %139 {strides = array<i32>} : memref<4x1260xbf16, #tpu.memory_space<vmem>>, vector<4x36xbf16>,
    %141 = vector.extract_strided_slice %3 {offsets = [28, 0], sizes = [4, 36], strides = [1, 1]} : vector<64x36xf32> to vector<4x36xf32>
    %142 = vector.extract_strided_slice %3 {offsets = [32, 0], sizes = [4, 36], strides = [1, 1]} : vector<64x36xf32> to vector<4x36xf32>
    %cst_52 = arith.constant 0.741935492 : f32
    %143 = vector.broadcast %cst_52 : f32 to vector<4x36xf32>
    %144 = arith.mulf %141, %143 : vector<4x36xf32>
    %cst_53 = arith.constant 0.258064508 : f32
    %145 = vector.broadcast %cst_53 : f32 to vector<4x36xf32>
    %146 = arith.mulf %142, %145 : vector<4x36xf32>
    %147 = arith.addf %144, %146 : vector<4x36xf32>
    %148 = arith.truncf %147 : vector<4x36xf32> to vector<4x36xbf16>
    %c0_54 = arith.constant 0 : index
    %c576 = arith.constant 576 : index
    %149 = vector.load %arg11[%c0_54, %c576] : memref<4x1260xbf16, #tpu.memory_space<vmem>>, vector<4x36xbf16>
    tpu.vector_store %arg11[%c0_54, %c576], %148 {strides = array<i32>} : memref<4x1260xbf16, #tpu.memory_space<vmem>>, vector<4x36xbf16>,
    %150 = vector.extract_strided_slice %3 {offsets = [28, 0], sizes = [4, 36], strides = [1, 1]} : vector<64x36xf32> to vector<4x36xf32>
    %151 = vector.extract_strided_slice %3 {offsets = [32, 0], sizes = [4, 36], strides = [1, 1]} : vector<64x36xf32> to vector<4x36xf32>
    %cst_55 = arith.constant 0.258064508 : f32
    %152 = vector.broadcast %cst_55 : f32 to vector<4x36xf32>
    %153 = arith.mulf %150, %152 : vector<4x36xf32>
    %cst_56 = arith.constant 0.741935492 : f32
    %154 = vector.broadcast %cst_56 : f32 to vector<4x36xf32>
    %155 = arith.mulf %151, %154 : vector<4x36xf32>
    %156 = arith.addf %153, %155 : vector<4x36xf32>
    %157 = arith.truncf %156 : vector<4x36xf32> to vector<4x36xbf16>
    %c0_57 = arith.constant 0 : index
    %c612 = arith.constant 612 : index
    %158 = vector.load %arg11[%c0_57, %c612] : memref<4x1260xbf16, #tpu.memory_space<vmem>>, vector<4x36xbf16>
    tpu.vector_store %arg11[%c0_57, %c612], %157 {strides = array<i32>} : memref<4x1260xbf16, #tpu.memory_space<vmem>>, vector<4x36xbf16>,
    %159 = vector.extract_strided_slice %3 {offsets = [32, 0], sizes = [4, 36], strides = [1, 1]} : vector<64x36xf32> to vector<4x36xf32>
    %160 = vector.extract_strided_slice %3 {offsets = [36, 0], sizes = [4, 36], strides = [1, 1]} : vector<64x36xf32> to vector<4x36xf32>
    %cst_58 = arith.constant 0.774193525 : f32
    %161 = vector.broadcast %cst_58 : f32 to vector<4x36xf32>
    %162 = arith.mulf %159, %161 : vector<4x36xf32>
    %cst_59 = arith.constant 0.225806445 : f32
    %163 = vector.broadcast %cst_59 : f32 to vector<4x36xf32>
    %164 = arith.mulf %160, %163 : vector<4x36xf32>
    %165 = arith.addf %162, %164 : vector<4x36xf32>
    %166 = arith.truncf %165 : vector<4x36xf32> to vector<4x36xbf16>
    %c0_60 = arith.constant 0 : index
    %c648 = arith.constant 648 : index
    %167 = vector.load %arg11[%c0_60, %c648] : memref<4x1260xbf16, #tpu.memory_space<vmem>>, vector<4x36xbf16>
    tpu.vector_store %arg11[%c0_60, %c648], %166 {strides = array<i32>} : memref<4x1260xbf16, #tpu.memory_space<vmem>>, vector<4x36xbf16>,
    %168 = vector.extract_strided_slice %3 {offsets = [32, 0], sizes = [4, 36], strides = [1, 1]} : vector<64x36xf32> to vector<4x36xf32>
    %169 = vector.extract_strided_slice %3 {offsets = [36, 0], sizes = [4, 36], strides = [1, 1]} : vector<64x36xf32> to vector<4x36xf32>
    %cst_61 = arith.constant 0.290322572 : f32
    %170 = vector.broadcast %cst_61 : f32 to vector<4x36xf32>
    %171 = arith.mulf %168, %170 : vector<4x36xf32>
    %cst_62 = arith.constant 0.709677398 : f32
    %172 = vector.broadcast %cst_62 : f32 to vector<4x36xf32>
    %173 = arith.mulf %169, %172 : vector<4x36xf32>
    %174 = arith.addf %171, %173 : vector<4x36xf32>
    %175 = arith.truncf %174 : vector<4x36xf32> to vector<4x36xbf16>
    %c0_63 = arith.constant 0 : index
    %c684 = arith.constant 684 : index
    %176 = vector.load %arg11[%c0_63, %c684] : memref<4x1260xbf16, #tpu.memory_space<vmem>>, vector<4x36xbf16>
    tpu.vector_store %arg11[%c0_63, %c684], %175 {strides = array<i32>} : memref<4x1260xbf16, #tpu.memory_space<vmem>>, vector<4x36xbf16>,
    %177 = vector.extract_strided_slice %3 {offsets = [36, 0], sizes = [4, 36], strides = [1, 1]} : vector<64x36xf32> to vector<4x36xf32>
    %178 = vector.extract_strided_slice %3 {offsets = [40, 0], sizes = [4, 36], strides = [1, 1]} : vector<64x36xf32> to vector<4x36xf32>
    %cst_64 = arith.constant 0.806451618 : f32
    %179 = vector.broadcast %cst_64 : f32 to vector<4x36xf32>
    %180 = arith.mulf %177, %179 : vector<4x36xf32>
    %cst_65 = arith.constant 0.193548381 : f32
    %181 = vector.broadcast %cst_65 : f32 to vector<4x36xf32>
    %182 = arith.mulf %178, %181 : vector<4x36xf32>
    %183 = arith.addf %180, %182 : vector<4x36xf32>
    %184 = arith.truncf %183 : vector<4x36xf32> to vector<4x36xbf16>
    %c0_66 = arith.constant 0 : index
    %c720 = arith.constant 720 : index
    %185 = vector.load %arg11[%c0_66, %c720] : memref<4x1260xbf16, #tpu.memory_space<vmem>>, vector<4x36xbf16>
    tpu.vector_store %arg11[%c0_66, %c720], %184 {strides = array<i32>} : memref<4x1260xbf16, #tpu.memory_space<vmem>>, vector<4x36xbf16>,
    %186 = vector.extract_strided_slice %3 {offsets = [36, 0], sizes = [4, 36], strides = [1, 1]} : vector<64x36xf32> to vector<4x36xf32>
    %187 = vector.extract_strided_slice %3 {offsets = [40, 0], sizes = [4, 36], strides = [1, 1]} : vector<64x36xf32> to vector<4x36xf32>
    %cst_67 = arith.constant 0.322580636 : f32
    %188 = vector.broadcast %cst_67 : f32 to vector<4x36xf32>
    %189 = arith.mulf %186, %188 : vector<4x36xf32>
    %cst_68 = arith.constant 0.677419364 : f32
    %190 = vector.broadcast %cst_68 : f32 to vector<4x36xf32>
    %191 = arith.mulf %187, %190 : vector<4x36xf32>
    %192 = arith.addf %189, %191 : vector<4x36xf32>
    %193 = arith.truncf %192 : vector<4x36xf32> to vector<4x36xbf16>
    %c0_69 = arith.constant 0 : index
    %c756 = arith.constant 756 : index
    %194 = vector.load %arg11[%c0_69, %c756] : memref<4x1260xbf16, #tpu.memory_space<vmem>>, vector<4x36xbf16>
    tpu.vector_store %arg11[%c0_69, %c756], %193 {strides = array<i32>} : memref<4x1260xbf16, #tpu.memory_space<vmem>>, vector<4x36xbf16>,
    %195 = vector.extract_strided_slice %3 {offsets = [40, 0], sizes = [4, 36], strides = [1, 1]} : vector<64x36xf32> to vector<4x36xf32>
    %196 = vector.extract_strided_slice %3 {offsets = [44, 0], sizes = [4, 36], strides = [1, 1]} : vector<64x36xf32> to vector<4x36xf32>
    %cst_70 = arith.constant 0.838709652 : f32
    %197 = vector.broadcast %cst_70 : f32 to vector<4x36xf32>
    %198 = arith.mulf %195, %197 : vector<4x36xf32>
    %cst_71 = arith.constant 0.161290318 : f32
    %199 = vector.broadcast %cst_71 : f32 to vector<4x36xf32>
    %200 = arith.mulf %196, %199 : vector<4x36xf32>
    %201 = arith.addf %198, %200 : vector<4x36xf32>
    %202 = arith.truncf %201 : vector<4x36xf32> to vector<4x36xbf16>
    %c0_72 = arith.constant 0 : index
    %c792 = arith.constant 792 : index
    %203 = vector.load %arg11[%c0_72, %c792] : memref<4x1260xbf16, #tpu.memory_space<vmem>>, vector<4x36xbf16>
    tpu.vector_store %arg11[%c0_72, %c792], %202 {strides = array<i32>} : memref<4x1260xbf16, #tpu.memory_space<vmem>>, vector<4x36xbf16>,
    %204 = vector.extract_strided_slice %3 {offsets = [40, 0], sizes = [4, 36], strides = [1, 1]} : vector<64x36xf32> to vector<4x36xf32>
    %205 = vector.extract_strided_slice %3 {offsets = [44, 0], sizes = [4, 36], strides = [1, 1]} : vector<64x36xf32> to vector<4x36xf32>
    %cst_73 = arith.constant 0.354838699 : f32
    %206 = vector.broadcast %cst_73 : f32 to vector<4x36xf32>
    %207 = arith.mulf %204, %206 : vector<4x36xf32>
    %cst_74 = arith.constant 0.645161271 : f32
    %208 = vector.broadcast %cst_74 : f32 to vector<4x36xf32>
    %209 = arith.mulf %205, %208 : vector<4x36xf32>
    %210 = arith.addf %207, %209 : vector<4x36xf32>
    %211 = arith.truncf %210 : vector<4x36xf32> to vector<4x36xbf16>
    %c0_75 = arith.constant 0 : index
    %c828 = arith.constant 828 : index
    %212 = vector.load %arg11[%c0_75, %c828] : memref<4x1260xbf16, #tpu.memory_space<vmem>>, vector<4x36xbf16>
    tpu.vector_store %arg11[%c0_75, %c828], %211 {strides = array<i32>} : memref<4x1260xbf16, #tpu.memory_space<vmem>>, vector<4x36xbf16>,
    %213 = vector.extract_strided_slice %3 {offsets = [44, 0], sizes = [4, 36], strides = [1, 1]} : vector<64x36xf32> to vector<4x36xf32>
    %214 = vector.extract_strided_slice %3 {offsets = [48, 0], sizes = [4, 36], strides = [1, 1]} : vector<64x36xf32> to vector<4x36xf32>
    %cst_76 = arith.constant 0.870967745 : f32
    %215 = vector.broadcast %cst_76 : f32 to vector<4x36xf32>
    %216 = arith.mulf %213, %215 : vector<4x36xf32>
    %cst_77 = arith.constant 0.129032254 : f32
    %217 = vector.broadcast %cst_77 : f32 to vector<4x36xf32>
    %218 = arith.mulf %214, %217 : vector<4x36xf32>
    %219 = arith.addf %216, %218 : vector<4x36xf32>
    %220 = arith.truncf %219 : vector<4x36xf32> to vector<4x36xbf16>
    %c0_78 = arith.constant 0 : index
    %c864 = arith.constant 864 : index
    %221 = vector.load %arg11[%c0_78, %c864] : memref<4x1260xbf16, #tpu.memory_space<vmem>>, vector<4x36xbf16>
    tpu.vector_store %arg11[%c0_78, %c864], %220 {strides = array<i32>} : memref<4x1260xbf16, #tpu.memory_space<vmem>>, vector<4x36xbf16>,
    %222 = vector.extract_strided_slice %3 {offsets = [44, 0], sizes = [4, 36], strides = [1, 1]} : vector<64x36xf32> to vector<4x36xf32>
    %223 = vector.extract_strided_slice %3 {offsets = [48, 0], sizes = [4, 36], strides = [1, 1]} : vector<64x36xf32> to vector<4x36xf32>
    %cst_79 = arith.constant 0.387096763 : f32
    %224 = vector.broadcast %cst_79 : f32 to vector<4x36xf32>
    %225 = arith.mulf %222, %224 : vector<4x36xf32>
    %cst_80 = arith.constant 0.612903237 : f32
    %226 = vector.broadcast %cst_80 : f32 to vector<4x36xf32>
    %227 = arith.mulf %223, %226 : vector<4x36xf32>
    %228 = arith.addf %225, %227 : vector<4x36xf32>
    %229 = arith.truncf %228 : vector<4x36xf32> to vector<4x36xbf16>
    %c0_81 = arith.constant 0 : index
    %c900 = arith.constant 900 : index
    %230 = vector.load %arg11[%c0_81, %c900] : memref<4x1260xbf16, #tpu.memory_space<vmem>>, vector<4x36xbf16>
    tpu.vector_store %arg11[%c0_81, %c900], %229 {strides = array<i32>} : memref<4x1260xbf16, #tpu.memory_space<vmem>>, vector<4x36xbf16>,
    %231 = vector.extract_strided_slice %3 {offsets = [48, 0], sizes = [4, 36], strides = [1, 1]} : vector<64x36xf32> to vector<4x36xf32>
    %232 = vector.extract_strided_slice %3 {offsets = [52, 0], sizes = [4, 36], strides = [1, 1]} : vector<64x36xf32> to vector<4x36xf32>
    %cst_82 = arith.constant 0.903225779 : f32
    %233 = vector.broadcast %cst_82 : f32 to vector<4x36xf32>
    %234 = arith.mulf %231, %233 : vector<4x36xf32>
    %cst_83 = arith.constant 0.0967741906 : f32
    %235 = vector.broadcast %cst_83 : f32 to vector<4x36xf32>
    %236 = arith.mulf %232, %235 : vector<4x36xf32>
    %237 = arith.addf %234, %236 : vector<4x36xf32>
    %238 = arith.truncf %237 : vector<4x36xf32> to vector<4x36xbf16>
    %c0_84 = arith.constant 0 : index
    %c936 = arith.constant 936 : index
    %239 = vector.load %arg11[%c0_84, %c936] : memref<4x1260xbf16, #tpu.memory_space<vmem>>, vector<4x36xbf16>
    tpu.vector_store %arg11[%c0_84, %c936], %238 {strides = array<i32>} : memref<4x1260xbf16, #tpu.memory_space<vmem>>, vector<4x36xbf16>,
    %240 = vector.extract_strided_slice %3 {offsets = [48, 0], sizes = [4, 36], strides = [1, 1]} : vector<64x36xf32> to vector<4x36xf32>
    %241 = vector.extract_strided_slice %3 {offsets = [52, 0], sizes = [4, 36], strides = [1, 1]} : vector<64x36xf32> to vector<4x36xf32>
    %cst_85 = arith.constant 0.419354826 : f32
    %242 = vector.broadcast %cst_85 : f32 to vector<4x36xf32>
    %243 = arith.mulf %240, %242 : vector<4x36xf32>
    %cst_86 = arith.constant 0.580645144 : f32
    %244 = vector.broadcast %cst_86 : f32 to vector<4x36xf32>
    %245 = arith.mulf %241, %244 : vector<4x36xf32>
    %246 = arith.addf %243, %245 : vector<4x36xf32>
    %247 = arith.truncf %246 : vector<4x36xf32> to vector<4x36xbf16>
    %c0_87 = arith.constant 0 : index
    %c972 = arith.constant 972 : index
    %248 = vector.load %arg11[%c0_87, %c972] : memref<4x1260xbf16, #tpu.memory_space<vmem>>, vector<4x36xbf16>
    tpu.vector_store %arg11[%c0_87, %c972], %247 {strides = array<i32>} : memref<4x1260xbf16, #tpu.memory_space<vmem>>, vector<4x36xbf16>,
    %249 = vector.extract_strided_slice %3 {offsets = [52, 0], sizes = [4, 36], strides = [1, 1]} : vector<64x36xf32> to vector<4x36xf32>
    %250 = vector.extract_strided_slice %3 {offsets = [56, 0], sizes = [4, 36], strides = [1, 1]} : vector<64x36xf32> to vector<4x36xf32>
    %cst_88 = arith.constant 0.935483872 : f32
    %251 = vector.broadcast %cst_88 : f32 to vector<4x36xf32>
    %252 = arith.mulf %249, %251 : vector<4x36xf32>
    %cst_89 = arith.constant 0.0645161271 : f32
    %253 = vector.broadcast %cst_89 : f32 to vector<4x36xf32>
    %254 = arith.mulf %250, %253 : vector<4x36xf32>
    %255 = arith.addf %252, %254 : vector<4x36xf32>
    %256 = arith.truncf %255 : vector<4x36xf32> to vector<4x36xbf16>
    %c0_90 = arith.constant 0 : index
    %c1008 = arith.constant 1008 : index
    %257 = vector.load %arg11[%c0_90, %c1008] : memref<4x1260xbf16, #tpu.memory_space<vmem>>, vector<4x36xbf16>
    tpu.vector_store %arg11[%c0_90, %c1008], %256 {strides = array<i32>} : memref<4x1260xbf16, #tpu.memory_space<vmem>>, vector<4x36xbf16>,
    %258 = vector.extract_strided_slice %3 {offsets = [52, 0], sizes = [4, 36], strides = [1, 1]} : vector<64x36xf32> to vector<4x36xf32>
    %259 = vector.extract_strided_slice %3 {offsets = [56, 0], sizes = [4, 36], strides = [1, 1]} : vector<64x36xf32> to vector<4x36xf32>
    %cst_91 = arith.constant 0.45161289 : f32
    %260 = vector.broadcast %cst_91 : f32 to vector<4x36xf32>
    %261 = arith.mulf %258, %260 : vector<4x36xf32>
    %cst_92 = arith.constant 0.54838711 : f32
    %262 = vector.broadcast %cst_92 : f32 to vector<4x36xf32>
    %263 = arith.mulf %259, %262 : vector<4x36xf32>
    %264 = arith.addf %261, %263 : vector<4x36xf32>
    %265 = arith.truncf %264 : vector<4x36xf32> to vector<4x36xbf16>
    %c0_93 = arith.constant 0 : index
    %c1044 = arith.constant 1044 : index
    %266 = vector.load %arg11[%c0_93, %c1044] : memref<4x1260xbf16, #tpu.memory_space<vmem>>, vector<4x36xbf16>
    tpu.vector_store %arg11[%c0_93, %c1044], %265 {strides = array<i32>} : memref<4x1260xbf16, #tpu.memory_space<vmem>>, vector<4x36xbf16>,
    %267 = vector.extract_strided_slice %3 {offsets = [56, 0], sizes = [4, 36], strides = [1, 1]} : vector<64x36xf32> to vector<4x36xf32>
    %268 = vector.extract_strided_slice %3 {offsets = [60, 0], sizes = [4, 36], strides = [1, 1]} : vector<64x36xf32> to vector<4x36xf32>
    %cst_94 = arith.constant 0.967741906 : f32
    %269 = vector.broadcast %cst_94 : f32 to vector<4x36xf32>
    %270 = arith.mulf %267, %269 : vector<4x36xf32>
    %cst_95 = arith.constant 0.0322580636 : f32
    %271 = vector.broadcast %cst_95 : f32 to vector<4x36xf32>
    %272 = arith.mulf %268, %271 : vector<4x36xf32>
    %273 = arith.addf %270, %272 : vector<4x36xf32>
    %274 = arith.truncf %273 : vector<4x36xf32> to vector<4x36xbf16>
    %c0_96 = arith.constant 0 : index
    %c1080 = arith.constant 1080 : index
    %275 = vector.load %arg11[%c0_96, %c1080] : memref<4x1260xbf16, #tpu.memory_space<vmem>>, vector<4x36xbf16>
    tpu.vector_store %arg11[%c0_96, %c1080], %274 {strides = array<i32>} : memref<4x1260xbf16, #tpu.memory_space<vmem>>, vector<4x36xbf16>,
    %276 = vector.extract_strided_slice %3 {offsets = [56, 0], sizes = [4, 36], strides = [1, 1]} : vector<64x36xf32> to vector<4x36xf32>
    %277 = vector.extract_strided_slice %3 {offsets = [60, 0], sizes = [4, 36], strides = [1, 1]} : vector<64x36xf32> to vector<4x36xf32>
    %cst_97 = arith.constant 0.483870953 : f32
    %278 = vector.broadcast %cst_97 : f32 to vector<4x36xf32>
    %279 = arith.mulf %276, %278 : vector<4x36xf32>
    %cst_98 = arith.constant 5.161290e-01 : f32
    %280 = vector.broadcast %cst_98 : f32 to vector<4x36xf32>
    %281 = arith.mulf %277, %280 : vector<4x36xf32>
    %282 = arith.addf %279, %281 : vector<4x36xf32>
    %283 = arith.truncf %282 : vector<4x36xf32> to vector<4x36xbf16>
    %c0_99 = arith.constant 0 : index
    %c1116 = arith.constant 1116 : index
    %284 = vector.load %arg11[%c0_99, %c1116] : memref<4x1260xbf16, #tpu.memory_space<vmem>>, vector<4x36xbf16>
    tpu.vector_store %arg11[%c0_99, %c1116], %283 {strides = array<i32>} : memref<4x1260xbf16, #tpu.memory_space<vmem>>, vector<4x36xbf16>,
    %285 = vector.extract_strided_slice %3 {offsets = [56, 0], sizes = [4, 36], strides = [1, 1]} : vector<64x36xf32> to vector<4x36xf32>
    %286 = vector.extract_strided_slice %3 {offsets = [60, 0], sizes = [4, 36], strides = [1, 1]} : vector<64x36xf32> to vector<4x36xf32>
    %cst_100 = arith.constant 0.000000e+00 : f32
    %287 = vector.broadcast %cst_100 : f32 to vector<4x36xf32>
    %288 = arith.mulf %285, %287 : vector<4x36xf32>
    %cst_101 = arith.constant 1.000000e+00 : f32
    %289 = vector.broadcast %cst_101 : f32 to vector<4x36xf32>
    %290 = arith.mulf %286, %289 : vector<4x36xf32>
    %291 = arith.addf %288, %290 : vector<4x36xf32>
    %292 = arith.truncf %291 : vector<4x36xf32> to vector<4x36xbf16>
    %c0_102 = arith.constant 0 : index
    %c1152 = arith.constant 1152 : index
    %293 = vector.load %arg11[%c0_102, %c1152] : memref<4x1260xbf16, #tpu.memory_space<vmem>>, vector<4x36xbf16>
    tpu.vector_store %arg11[%c0_102, %c1152], %292 {strides = array<i32>} : memref<4x1260xbf16, #tpu.memory_space<vmem>>, vector<4x36xbf16>,
    %c0_103 = arith.constant 0 : index
    %c0_104 = arith.constant 0 : index
    %294 = vector.load %arg11[%c0_103, %c0_104] : memref<4x1260xbf16, #tpu.memory_space<vmem>>, vector<4x1152xbf16>
    %c0_105 = arith.constant 0 : index
    %c1 = arith.constant 1 : index
    %295 = vector.load %arg11[%c0_105, %c1] : memref<4x1260xbf16, #tpu.memory_space<vmem>>, vector<4x1152xbf16>
    %c0_106 = arith.constant 0 : index
    %c2 = arith.constant 2 : index
    %296 = vector.load %arg11[%c0_106, %c2] : memref<4x1260xbf16, #tpu.memory_space<vmem>>, vector<4x1152xbf16>
    %c0_107 = arith.constant 0 : index
    %c36_108 = arith.constant 36 : index
    %297 = vector.load %arg11[%c0_107, %c36_108] : memref<4x1260xbf16, #tpu.memory_space<vmem>>, vector<4x1152xbf16>
    %c0_109 = arith.constant 0 : index
    %c37 = arith.constant 37 : index
    %298 = vector.load %arg11[%c0_109, %c37] : memref<4x1260xbf16, #tpu.memory_space<vmem>>, vector<4x1152xbf16>
    %c0_110 = arith.constant 0 : index
    %c38 = arith.constant 38 : index
    %299 = vector.load %arg11[%c0_110, %c38] : memref<4x1260xbf16, #tpu.memory_space<vmem>>, vector<4x1152xbf16>
    %c0_111 = arith.constant 0 : index
    %c72_112 = arith.constant 72 : index
    %300 = vector.load %arg11[%c0_111, %c72_112] : memref<4x1260xbf16, #tpu.memory_space<vmem>>, vector<4x1152xbf16>
    %c0_113 = arith.constant 0 : index
    %c73 = arith.constant 73 : index
    %301 = vector.load %arg11[%c0_113, %c73] : memref<4x1260xbf16, #tpu.memory_space<vmem>>, vector<4x1152xbf16>
    %c0_114 = arith.constant 0 : index
    %c74 = arith.constant 74 : index
    %302 = vector.load %arg11[%c0_114, %c74] : memref<4x1260xbf16, #tpu.memory_space<vmem>>, vector<4x1152xbf16>
    %303 = tpu.concatenate %294, %295, %296, %297, %298, %299, %300, %301, %302 in 0 : vector<4x1152xbf16>, vector<4x1152xbf16>, vector<4x1152xbf16>, vector<4x1152xbf16>, vector<4x1152xbf16>, vector<4x1152xbf16>, vector<4x1152xbf16>, vector<4x1152xbf16>, vector<4x1152xbf16> -> vector<36x1152xbf16>
    %c0_115 = arith.constant 0 : index
    %c0_116 = arith.constant 0 : index
    %304 = vector.load %arg3[%c0_115, %c0_116] : memref<12x36xbf16, #tpu.memory_space<vmem>>, vector<12x36xbf16>
    %cst_117 = arith.constant dense<0.000000e+00> : vector<12x1152xf32>
    %305 = tpu.matmul %304, %303, %cst_117 {dimension_numbers = #tpu.dot_dimension_numbers<[1], [0], [0], [1], [0, 0, 1, 1], [], []>} : vector<12x36xbf16>, vector<36x1152xbf16>, vector<12x1152xf32> -> vector<12x1152xf32>
    %c0_118 = arith.constant 0 : index
    %c0_119 = arith.constant 0 : index
    %306 = vector.load %arg4[%c0_118, %c0_119] : memref<12x1xf32, #tpu.memory_space<vmem>>, vector<12x1xf32>
    %307 = vector.broadcast %306 : vector<12x1xf32> to vector<12x1152xf32>
    %308 = arith.mulf %305, %307 : vector<12x1152xf32>
    %c0_120 = arith.constant 0 : index
    %c0_121 = arith.constant 0 : index
    %309 = vector.load %arg5[%c0_120, %c0_121] : memref<12x1xf32, #tpu.memory_space<vmem>>, vector<12x1xf32>
    %310 = vector.broadcast %309 : vector<12x1xf32> to vector<12x1152xf32>
    %311 = arith.addf %308, %310 : vector<12x1152xf32>
    %312 = vector.extract_strided_slice %311 {offsets = [0, 0], sizes = [4, 1152], strides = [1, 1]} : vector<12x1152xf32> to vector<4x1152xf32>
    %cst_122 = arith.constant 0.000000e+00 : f32
    %313 = vector.broadcast %cst_122 : f32 to vector<4x1152xf32>
    %314 = arith.maximumf %312, %313 : vector<4x1152xf32>
    %315 = vector.extract_strided_slice %311 {offsets = [4, 0], sizes = [8, 1152], strides = [1, 1]} : vector<12x1152xf32> to vector<8x1152xf32>
    %cst_123 = arith.constant 0.000000e+00 : bf16
    %316 = vector.broadcast %cst_123 : bf16 to vector<4x1260xbf16>
    %c0_124 = arith.constant 0 : index
    %c0_125 = arith.constant 0 : index
    %317 = vector.load %arg12[%c0_124, %c0_125] : memref<4x1260xbf16, #tpu.memory_space<vmem>>, vector<4x1260xbf16>
    tpu.vector_store %arg12[%c0_124, %c0_125], %316 {strides = array<i32>} : memref<4x1260xbf16, #tpu.memory_space<vmem>>, vector<4x1260xbf16>,
    %318 = vector.extract_strided_slice %314 {offsets = [0, 0], sizes = [4, 32], strides = [1, 1]} : vector<4x1152xf32> to vector<4x32xf32>
    %319 = arith.truncf %318 : vector<4x32xf32> to vector<4x32xbf16>
    %c0_126 = arith.constant 0 : index
    %c37_127 = arith.constant 37 : index
    %320 = vector.load %arg12[%c0_126, %c37_127] : memref<4x1260xbf16, #tpu.memory_space<vmem>>, vector<4x32xbf16>
    tpu.vector_store %arg12[%c0_126, %c37_127], %319 {strides = array<i32>} : memref<4x1260xbf16, #tpu.memory_space<vmem>>, vector<4x32xbf16>,
    %321 = vector.extract_strided_slice %314 {offsets = [0, 36], sizes = [4, 32], strides = [1, 1]} : vector<4x1152xf32> to vector<4x32xf32>
    %322 = arith.truncf %321 : vector<4x32xf32> to vector<4x32xbf16>
    %c0_128 = arith.constant 0 : index
    %c73_129 = arith.constant 73 : index
    %323 = vector.load %arg12[%c0_128, %c73_129] : memref<4x1260xbf16, #tpu.memory_space<vmem>>, vector<4x32xbf16>
    tpu.vector_store %arg12[%c0_128, %c73_129], %322 {strides = array<i32>} : memref<4x1260xbf16, #tpu.memory_space<vmem>>, vector<4x32xbf16>,
    %324 = vector.extract_strided_slice %314 {offsets = [0, 72], sizes = [4, 32], strides = [1, 1]} : vector<4x1152xf32> to vector<4x32xf32>
    %325 = arith.truncf %324 : vector<4x32xf32> to vector<4x32xbf16>
    %c0_130 = arith.constant 0 : index
    %c109 = arith.constant 109 : index
    %326 = vector.load %arg12[%c0_130, %c109] : memref<4x1260xbf16, #tpu.memory_space<vmem>>, vector<4x32xbf16>
    tpu.vector_store %arg12[%c0_130, %c109], %325 {strides = array<i32>} : memref<4x1260xbf16, #tpu.memory_space<vmem>>, vector<4x32xbf16>,
    %327 = vector.extract_strided_slice %314 {offsets = [0, 108], sizes = [4, 32], strides = [1, 1]} : vector<4x1152xf32> to vector<4x32xf32>
    %328 = arith.truncf %327 : vector<4x32xf32> to vector<4x32xbf16>
    %c0_131 = arith.constant 0 : index
    %c145 = arith.constant 145 : index
    %329 = vector.load %arg12[%c0_131, %c145] : memref<4x1260xbf16, #tpu.memory_space<vmem>>, vector<4x32xbf16>
    tpu.vector_store %arg12[%c0_131, %c145], %328 {strides = array<i32>} : memref<4x1260xbf16, #tpu.memory_space<vmem>>, vector<4x32xbf16>,
    %330 = vector.extract_strided_slice %314 {offsets = [0, 144], sizes = [4, 32], strides = [1, 1]} : vector<4x1152xf32> to vector<4x32xf32>
    %331 = arith.truncf %330 : vector<4x32xf32> to vector<4x32xbf16>
    %c0_132 = arith.constant 0 : index
    %c181 = arith.constant 181 : index
    %332 = vector.load %arg12[%c0_132, %c181] : memref<4x1260xbf16, #tpu.memory_space<vmem>>, vector<4x32xbf16>
    tpu.vector_store %arg12[%c0_132, %c181], %331 {strides = array<i32>} : memref<4x1260xbf16, #tpu.memory_space<vmem>>, vector<4x32xbf16>,
    %333 = vector.extract_strided_slice %314 {offsets = [0, 180], sizes = [4, 32], strides = [1, 1]} : vector<4x1152xf32> to vector<4x32xf32>
    %334 = arith.truncf %333 : vector<4x32xf32> to vector<4x32xbf16>
    %c0_133 = arith.constant 0 : index
    %c217 = arith.constant 217 : index
    %335 = vector.load %arg12[%c0_133, %c217] : memref<4x1260xbf16, #tpu.memory_space<vmem>>, vector<4x32xbf16>
    tpu.vector_store %arg12[%c0_133, %c217], %334 {strides = array<i32>} : memref<4x1260xbf16, #tpu.memory_space<vmem>>, vector<4x32xbf16>,
    %336 = vector.extract_strided_slice %314 {offsets = [0, 216], sizes = [4, 32], strides = [1, 1]} : vector<4x1152xf32> to vector<4x32xf32>
    %337 = arith.truncf %336 : vector<4x32xf32> to vector<4x32xbf16>
    %c0_134 = arith.constant 0 : index
    %c253 = arith.constant 253 : index
    %338 = vector.load %arg12[%c0_134, %c253] : memref<4x1260xbf16, #tpu.memory_space<vmem>>, vector<4x32xbf16>
    tpu.vector_store %arg12[%c0_134, %c253], %337 {strides = array<i32>} : memref<4x1260xbf16, #tpu.memory_space<vmem>>, vector<4x32xbf16>,
    %339 = vector.extract_strided_slice %314 {offsets = [0, 252], sizes = [4, 32], strides = [1, 1]} : vector<4x1152xf32> to vector<4x32xf32>
    %340 = arith.truncf %339 : vector<4x32xf32> to vector<4x32xbf16>
    %c0_135 = arith.constant 0 : index
    %c289 = arith.constant 289 : index
    %341 = vector.load %arg12[%c0_135, %c289] : memref<4x1260xbf16, #tpu.memory_space<vmem>>, vector<4x32xbf16>
    tpu.vector_store %arg12[%c0_135, %c289], %340 {strides = array<i32>} : memref<4x1260xbf16, #tpu.memory_space<vmem>>, vector<4x32xbf16>,
    %342 = vector.extract_strided_slice %314 {offsets = [0, 288], sizes = [4, 32], strides = [1, 1]} : vector<4x1152xf32> to vector<4x32xf32>
    %343 = arith.truncf %342 : vector<4x32xf32> to vector<4x32xbf16>
    %c0_136 = arith.constant 0 : index
    %c325 = arith.constant 325 : index
    %344 = vector.load %arg12[%c0_136, %c325] : memref<4x1260xbf16, #tpu.memory_space<vmem>>, vector<4x32xbf16>
    tpu.vector_store %arg12[%c0_136, %c325], %343 {strides = array<i32>} : memref<4x1260xbf16, #tpu.memory_space<vmem>>, vector<4x32xbf16>,
    %345 = vector.extract_strided_slice %314 {offsets = [0, 324], sizes = [4, 32], strides = [1, 1]} : vector<4x1152xf32> to vector<4x32xf32>
    %346 = arith.truncf %345 : vector<4x32xf32> to vector<4x32xbf16>
    %c0_137 = arith.constant 0 : index
    %c361 = arith.constant 361 : index
    %347 = vector.load %arg12[%c0_137, %c361] : memref<4x1260xbf16, #tpu.memory_space<vmem>>, vector<4x32xbf16>
    tpu.vector_store %arg12[%c0_137, %c361], %346 {strides = array<i32>} : memref<4x1260xbf16, #tpu.memory_space<vmem>>, vector<4x32xbf16>,
    %348 = vector.extract_strided_slice %314 {offsets = [0, 360], sizes = [4, 32], strides = [1, 1]} : vector<4x1152xf32> to vector<4x32xf32>
    %349 = arith.truncf %348 : vector<4x32xf32> to vector<4x32xbf16>
    %c0_138 = arith.constant 0 : index
    %c397 = arith.constant 397 : index
    %350 = vector.load %arg12[%c0_138, %c397] : memref<4x1260xbf16, #tpu.memory_space<vmem>>, vector<4x32xbf16>
    tpu.vector_store %arg12[%c0_138, %c397], %349 {strides = array<i32>} : memref<4x1260xbf16, #tpu.memory_space<vmem>>, vector<4x32xbf16>,
    %351 = vector.extract_strided_slice %314 {offsets = [0, 396], sizes = [4, 32], strides = [1, 1]} : vector<4x1152xf32> to vector<4x32xf32>
    %352 = arith.truncf %351 : vector<4x32xf32> to vector<4x32xbf16>
    %c0_139 = arith.constant 0 : index
    %c433 = arith.constant 433 : index
    %353 = vector.load %arg12[%c0_139, %c433] : memref<4x1260xbf16, #tpu.memory_space<vmem>>, vector<4x32xbf16>
    tpu.vector_store %arg12[%c0_139, %c433], %352 {strides = array<i32>} : memref<4x1260xbf16, #tpu.memory_space<vmem>>, vector<4x32xbf16>,
    %354 = vector.extract_strided_slice %314 {offsets = [0, 432], sizes = [4, 32], strides = [1, 1]} : vector<4x1152xf32> to vector<4x32xf32>
    %355 = arith.truncf %354 : vector<4x32xf32> to vector<4x32xbf16>
    %c0_140 = arith.constant 0 : index
    %c469 = arith.constant 469 : index
    %356 = vector.load %arg12[%c0_140, %c469] : memref<4x1260xbf16, #tpu.memory_space<vmem>>, vector<4x32xbf16>
    tpu.vector_store %arg12[%c0_140, %c469], %355 {strides = array<i32>} : memref<4x1260xbf16, #tpu.memory_space<vmem>>, vector<4x32xbf16>,
    %357 = vector.extract_strided_slice %314 {offsets = [0, 468], sizes = [4, 32], strides = [1, 1]} : vector<4x1152xf32> to vector<4x32xf32>
    %358 = arith.truncf %357 : vector<4x32xf32> to vector<4x32xbf16>
    %c0_141 = arith.constant 0 : index
    %c505 = arith.constant 505 : index
    %359 = vector.load %arg12[%c0_141, %c505] : memref<4x1260xbf16, #tpu.memory_space<vmem>>, vector<4x32xbf16>
    tpu.vector_store %arg12[%c0_141, %c505], %358 {strides = array<i32>} : memref<4x1260xbf16, #tpu.memory_space<vmem>>, vector<4x32xbf16>,
    %360 = vector.extract_strided_slice %314 {offsets = [0, 504], sizes = [4, 32], strides = [1, 1]} : vector<4x1152xf32> to vector<4x32xf32>
    %361 = arith.truncf %360 : vector<4x32xf32> to vector<4x32xbf16>
    %c0_142 = arith.constant 0 : index
    %c541 = arith.constant 541 : index
    %362 = vector.load %arg12[%c0_142, %c541] : memref<4x1260xbf16, #tpu.memory_space<vmem>>, vector<4x32xbf16>
    tpu.vector_store %arg12[%c0_142, %c541], %361 {strides = array<i32>} : memref<4x1260xbf16, #tpu.memory_space<vmem>>, vector<4x32xbf16>,
    %363 = vector.extract_strided_slice %314 {offsets = [0, 540], sizes = [4, 32], strides = [1, 1]} : vector<4x1152xf32> to vector<4x32xf32>
    %364 = arith.truncf %363 : vector<4x32xf32> to vector<4x32xbf16>
    %c0_143 = arith.constant 0 : index
    %c577 = arith.constant 577 : index
    %365 = vector.load %arg12[%c0_143, %c577] : memref<4x1260xbf16, #tpu.memory_space<vmem>>, vector<4x32xbf16>
    tpu.vector_store %arg12[%c0_143, %c577], %364 {strides = array<i32>} : memref<4x1260xbf16, #tpu.memory_space<vmem>>, vector<4x32xbf16>,
    %366 = vector.extract_strided_slice %314 {offsets = [0, 576], sizes = [4, 32], strides = [1, 1]} : vector<4x1152xf32> to vector<4x32xf32>
    %367 = arith.truncf %366 : vector<4x32xf32> to vector<4x32xbf16>
    %c0_144 = arith.constant 0 : index
    %c613 = arith.constant 613 : index
    %368 = vector.load %arg12[%c0_144, %c613] : memref<4x1260xbf16, #tpu.memory_space<vmem>>, vector<4x32xbf16>
    tpu.vector_store %arg12[%c0_144, %c613], %367 {strides = array<i32>} : memref<4x1260xbf16, #tpu.memory_space<vmem>>, vector<4x32xbf16>,
    %369 = vector.extract_strided_slice %314 {offsets = [0, 612], sizes = [4, 32], strides = [1, 1]} : vector<4x1152xf32> to vector<4x32xf32>
    %370 = arith.truncf %369 : vector<4x32xf32> to vector<4x32xbf16>
    %c0_145 = arith.constant 0 : index
    %c649 = arith.constant 649 : index
    %371 = vector.load %arg12[%c0_145, %c649] : memref<4x1260xbf16, #tpu.memory_space<vmem>>, vector<4x32xbf16>
    tpu.vector_store %arg12[%c0_145, %c649], %370 {strides = array<i32>} : memref<4x1260xbf16, #tpu.memory_space<vmem>>, vector<4x32xbf16>,
    %372 = vector.extract_strided_slice %314 {offsets = [0, 648], sizes = [4, 32], strides = [1, 1]} : vector<4x1152xf32> to vector<4x32xf32>
    %373 = arith.truncf %372 : vector<4x32xf32> to vector<4x32xbf16>
    %c0_146 = arith.constant 0 : index
    %c685 = arith.constant 685 : index
    %374 = vector.load %arg12[%c0_146, %c685] : memref<4x1260xbf16, #tpu.memory_space<vmem>>, vector<4x32xbf16>
    tpu.vector_store %arg12[%c0_146, %c685], %373 {strides = array<i32>} : memref<4x1260xbf16, #tpu.memory_space<vmem>>, vector<4x32xbf16>,
    %375 = vector.extract_strided_slice %314 {offsets = [0, 684], sizes = [4, 32], strides = [1, 1]} : vector<4x1152xf32> to vector<4x32xf32>
    %376 = arith.truncf %375 : vector<4x32xf32> to vector<4x32xbf16>
    %c0_147 = arith.constant 0 : index
    %c721 = arith.constant 721 : index
    %377 = vector.load %arg12[%c0_147, %c721] : memref<4x1260xbf16, #tpu.memory_space<vmem>>, vector<4x32xbf16>
    tpu.vector_store %arg12[%c0_147, %c721], %376 {strides = array<i32>} : memref<4x1260xbf16, #tpu.memory_space<vmem>>, vector<4x32xbf16>,
    %378 = vector.extract_strided_slice %314 {offsets = [0, 720], sizes = [4, 32], strides = [1, 1]} : vector<4x1152xf32> to vector<4x32xf32>
    %379 = arith.truncf %378 : vector<4x32xf32> to vector<4x32xbf16>
    %c0_148 = arith.constant 0 : index
    %c757 = arith.constant 757 : index
    %380 = vector.load %arg12[%c0_148, %c757] : memref<4x1260xbf16, #tpu.memory_space<vmem>>, vector<4x32xbf16>
    tpu.vector_store %arg12[%c0_148, %c757], %379 {strides = array<i32>} : memref<4x1260xbf16, #tpu.memory_space<vmem>>, vector<4x32xbf16>,
    %381 = vector.extract_strided_slice %314 {offsets = [0, 756], sizes = [4, 32], strides = [1, 1]} : vector<4x1152xf32> to vector<4x32xf32>
    %382 = arith.truncf %381 : vector<4x32xf32> to vector<4x32xbf16>
    %c0_149 = arith.constant 0 : index
    %c793 = arith.constant 793 : index
    %383 = vector.load %arg12[%c0_149, %c793] : memref<4x1260xbf16, #tpu.memory_space<vmem>>, vector<4x32xbf16>
    tpu.vector_store %arg12[%c0_149, %c793], %382 {strides = array<i32>} : memref<4x1260xbf16, #tpu.memory_space<vmem>>, vector<4x32xbf16>,
    %384 = vector.extract_strided_slice %314 {offsets = [0, 792], sizes = [4, 32], strides = [1, 1]} : vector<4x1152xf32> to vector<4x32xf32>
    %385 = arith.truncf %384 : vector<4x32xf32> to vector<4x32xbf16>
    %c0_150 = arith.constant 0 : index
    %c829 = arith.constant 829 : index
    %386 = vector.load %arg12[%c0_150, %c829] : memref<4x1260xbf16, #tpu.memory_space<vmem>>, vector<4x32xbf16>
    tpu.vector_store %arg12[%c0_150, %c829], %385 {strides = array<i32>} : memref<4x1260xbf16, #tpu.memory_space<vmem>>, vector<4x32xbf16>,
    %387 = vector.extract_strided_slice %314 {offsets = [0, 828], sizes = [4, 32], strides = [1, 1]} : vector<4x1152xf32> to vector<4x32xf32>
    %388 = arith.truncf %387 : vector<4x32xf32> to vector<4x32xbf16>
    %c0_151 = arith.constant 0 : index
    %c865 = arith.constant 865 : index
    %389 = vector.load %arg12[%c0_151, %c865] : memref<4x1260xbf16, #tpu.memory_space<vmem>>, vector<4x32xbf16>
    tpu.vector_store %arg12[%c0_151, %c865], %388 {strides = array<i32>} : memref<4x1260xbf16, #tpu.memory_space<vmem>>, vector<4x32xbf16>,
    %390 = vector.extract_strided_slice %314 {offsets = [0, 864], sizes = [4, 32], strides = [1, 1]} : vector<4x1152xf32> to vector<4x32xf32>
    %391 = arith.truncf %390 : vector<4x32xf32> to vector<4x32xbf16>
    %c0_152 = arith.constant 0 : index
    %c901 = arith.constant 901 : index
    %392 = vector.load %arg12[%c0_152, %c901] : memref<4x1260xbf16, #tpu.memory_space<vmem>>, vector<4x32xbf16>
    tpu.vector_store %arg12[%c0_152, %c901], %391 {strides = array<i32>} : memref<4x1260xbf16, #tpu.memory_space<vmem>>, vector<4x32xbf16>,
    %393 = vector.extract_strided_slice %314 {offsets = [0, 900], sizes = [4, 32], strides = [1, 1]} : vector<4x1152xf32> to vector<4x32xf32>
    %394 = arith.truncf %393 : vector<4x32xf32> to vector<4x32xbf16>
    %c0_153 = arith.constant 0 : index
    %c937 = arith.constant 937 : index
    %395 = vector.load %arg12[%c0_153, %c937] : memref<4x1260xbf16, #tpu.memory_space<vmem>>, vector<4x32xbf16>
    tpu.vector_store %arg12[%c0_153, %c937], %394 {strides = array<i32>} : memref<4x1260xbf16, #tpu.memory_space<vmem>>, vector<4x32xbf16>,
    %396 = vector.extract_strided_slice %314 {offsets = [0, 936], sizes = [4, 32], strides = [1, 1]} : vector<4x1152xf32> to vector<4x32xf32>
    %397 = arith.truncf %396 : vector<4x32xf32> to vector<4x32xbf16>
    %c0_154 = arith.constant 0 : index
    %c973 = arith.constant 973 : index
    %398 = vector.load %arg12[%c0_154, %c973] : memref<4x1260xbf16, #tpu.memory_space<vmem>>, vector<4x32xbf16>
    tpu.vector_store %arg12[%c0_154, %c973], %397 {strides = array<i32>} : memref<4x1260xbf16, #tpu.memory_space<vmem>>, vector<4x32xbf16>,
    %399 = vector.extract_strided_slice %314 {offsets = [0, 972], sizes = [4, 32], strides = [1, 1]} : vector<4x1152xf32> to vector<4x32xf32>
    %400 = arith.truncf %399 : vector<4x32xf32> to vector<4x32xbf16>
    %c0_155 = arith.constant 0 : index
    %c1009 = arith.constant 1009 : index
    %401 = vector.load %arg12[%c0_155, %c1009] : memref<4x1260xbf16, #tpu.memory_space<vmem>>, vector<4x32xbf16>
    tpu.vector_store %arg12[%c0_155, %c1009], %400 {strides = array<i32>} : memref<4x1260xbf16, #tpu.memory_space<vmem>>, vector<4x32xbf16>,
    %402 = vector.extract_strided_slice %314 {offsets = [0, 1008], sizes = [4, 32], strides = [1, 1]} : vector<4x1152xf32> to vector<4x32xf32>
    %403 = arith.truncf %402 : vector<4x32xf32> to vector<4x32xbf16>
    %c0_156 = arith.constant 0 : index
    %c1045 = arith.constant 1045 : index
    %404 = vector.load %arg12[%c0_156, %c1045] : memref<4x1260xbf16, #tpu.memory_space<vmem>>, vector<4x32xbf16>
    tpu.vector_store %arg12[%c0_156, %c1045], %403 {strides = array<i32>} : memref<4x1260xbf16, #tpu.memory_space<vmem>>, vector<4x32xbf16>,
    %405 = vector.extract_strided_slice %314 {offsets = [0, 1044], sizes = [4, 32], strides = [1, 1]} : vector<4x1152xf32> to vector<4x32xf32>
    %406 = arith.truncf %405 : vector<4x32xf32> to vector<4x32xbf16>
    %c0_157 = arith.constant 0 : index
    %c1081 = arith.constant 1081 : index
    %407 = vector.load %arg12[%c0_157, %c1081] : memref<4x1260xbf16, #tpu.memory_space<vmem>>, vector<4x32xbf16>
    tpu.vector_store %arg12[%c0_157, %c1081], %406 {strides = array<i32>} : memref<4x1260xbf16, #tpu.memory_space<vmem>>, vector<4x32xbf16>,
    %408 = vector.extract_strided_slice %314 {offsets = [0, 1080], sizes = [4, 32], strides = [1, 1]} : vector<4x1152xf32> to vector<4x32xf32>
    %409 = arith.truncf %408 : vector<4x32xf32> to vector<4x32xbf16>
    %c0_158 = arith.constant 0 : index
    %c1117 = arith.constant 1117 : index
    %410 = vector.load %arg12[%c0_158, %c1117] : memref<4x1260xbf16, #tpu.memory_space<vmem>>, vector<4x32xbf16>
    tpu.vector_store %arg12[%c0_158, %c1117], %409 {strides = array<i32>} : memref<4x1260xbf16, #tpu.memory_space<vmem>>, vector<4x32xbf16>,
    %411 = vector.extract_strided_slice %314 {offsets = [0, 1116], sizes = [4, 32], strides = [1, 1]} : vector<4x1152xf32> to vector<4x32xf32>
    %412 = arith.truncf %411 : vector<4x32xf32> to vector<4x32xbf16>
    %c0_159 = arith.constant 0 : index
    %c1153 = arith.constant 1153 : index
    %413 = vector.load %arg12[%c0_159, %c1153] : memref<4x1260xbf16, #tpu.memory_space<vmem>>, vector<4x32xbf16>
    tpu.vector_store %arg12[%c0_159, %c1153], %412 {strides = array<i32>} : memref<4x1260xbf16, #tpu.memory_space<vmem>>, vector<4x32xbf16>,
    %c0_160 = arith.constant 0 : index
    %c0_161 = arith.constant 0 : index
    %414 = vector.load %arg12[%c0_160, %c0_161] : memref<4x1260xbf16, #tpu.memory_space<vmem>>, vector<4x1152xbf16>
    %c0_162 = arith.constant 0 : index
    %c1_163 = arith.constant 1 : index
    %415 = vector.load %arg12[%c0_162, %c1_163] : memref<4x1260xbf16, #tpu.memory_space<vmem>>, vector<4x1152xbf16>
    %c0_164 = arith.constant 0 : index
    %c2_165 = arith.constant 2 : index
    %416 = vector.load %arg12[%c0_164, %c2_165] : memref<4x1260xbf16, #tpu.memory_space<vmem>>, vector<4x1152xbf16>
    %c0_166 = arith.constant 0 : index
    %c36_167 = arith.constant 36 : index
    %417 = vector.load %arg12[%c0_166, %c36_167] : memref<4x1260xbf16, #tpu.memory_space<vmem>>, vector<4x1152xbf16>
    %c0_168 = arith.constant 0 : index
    %c37_169 = arith.constant 37 : index
    %418 = vector.load %arg12[%c0_168, %c37_169] : memref<4x1260xbf16, #tpu.memory_space<vmem>>, vector<4x1152xbf16>
    %c0_170 = arith.constant 0 : index
    %c38_171 = arith.constant 38 : index
    %419 = vector.load %arg12[%c0_170, %c38_171] : memref<4x1260xbf16, #tpu.memory_space<vmem>>, vector<4x1152xbf16>
    %c0_172 = arith.constant 0 : index
    %c72_173 = arith.constant 72 : index
    %420 = vector.load %arg12[%c0_172, %c72_173] : memref<4x1260xbf16, #tpu.memory_space<vmem>>, vector<4x1152xbf16>
    %c0_174 = arith.constant 0 : index
    %c73_175 = arith.constant 73 : index
    %421 = vector.load %arg12[%c0_174, %c73_175] : memref<4x1260xbf16, #tpu.memory_space<vmem>>, vector<4x1152xbf16>
    %c0_176 = arith.constant 0 : index
    %c74_177 = arith.constant 74 : index
    %422 = vector.load %arg12[%c0_176, %c74_177] : memref<4x1260xbf16, #tpu.memory_space<vmem>>, vector<4x1152xbf16>
    %423 = tpu.concatenate %414, %415, %416, %417, %418, %419, %420, %421, %422 in 0 : vector<4x1152xbf16>, vector<4x1152xbf16>, vector<4x1152xbf16>, vector<4x1152xbf16>, vector<4x1152xbf16>, vector<4x1152xbf16>, vector<4x1152xbf16>, vector<4x1152xbf16>, vector<4x1152xbf16> -> vector<36x1152xbf16>
    %c0_178 = arith.constant 0 : index
    %c0_179 = arith.constant 0 : index
    %424 = vector.load %arg6[%c0_178, %c0_179] : memref<8x36xbf16, #tpu.memory_space<vmem>>, vector<8x36xbf16>
    %cst_180 = arith.constant dense<0.000000e+00> : vector<8x1152xf32>
    %425 = tpu.matmul %424, %423, %cst_180 {dimension_numbers = #tpu.dot_dimension_numbers<[1], [0], [0], [1], [0, 0, 1, 1], [], []>} : vector<8x36xbf16>, vector<36x1152xbf16>, vector<8x1152xf32> -> vector<8x1152xf32>
    %c0_181 = arith.constant 0 : index
    %c0_182 = arith.constant 0 : index
    %426 = vector.load %arg7[%c0_181, %c0_182] : memref<8x1xf32, #tpu.memory_space<vmem>>, vector<8x1xf32>
    %427 = vector.broadcast %426 : vector<8x1xf32> to vector<8x1152xf32>
    %428 = arith.mulf %425, %427 : vector<8x1152xf32>
    %c0_183 = arith.constant 0 : index
    %c0_184 = arith.constant 0 : index
    %429 = vector.load %arg8[%c0_183, %c0_184] : memref<8x1xf32, #tpu.memory_space<vmem>>, vector<8x1xf32>
    %430 = vector.broadcast %429 : vector<8x1xf32> to vector<8x1152xf32>
    %431 = arith.addf %428, %430 : vector<8x1152xf32>
    %cst_185 = arith.constant 0.000000e+00 : f32
    %432 = vector.broadcast %cst_185 : f32 to vector<8x1152xf32>
    %433 = arith.maximumf %431, %432 : vector<8x1152xf32>
    %434 = arith.addf %433, %315 : vector<8x1152xf32>
    %c0_186 = arith.constant 0 : index
    %c0_187 = arith.constant 0 : index
    %c0_188 = arith.constant 0 : index
    %435 = vector.load %arg9[%c0_186, %c0_187, %c0_188] : memref<1x1x1152xf32, #tpu.memory_space<vmem>>, vector<1x1x1152xf32>
    %436 = vector.shape_cast %435 : vector<1x1x1152xf32> to vector<1x1152xf32>
    %437 = vector.broadcast %436 : vector<1x1152xf32> to vector<8x1152xf32>
    %438 = arith.addf %434, %437 : vector<8x1152xf32>
    %439 = vector.extract_strided_slice %438 {offsets = [0, 0], sizes = [8, 32], strides = [1, 1]} : vector<8x1152xf32> to vector<8x32xf32>
    %c0_189 = arith.constant 0 : index
    %c0_190 = arith.constant 0 : index
    %c0_191 = arith.constant 0 : index
    %440 = vector.load %arg10[%c0_189, %c0_190, %c0_191] : memref<1x8x1024xf32, #tpu.memory_space<vmem>>, vector<1x8x32xf32>
    %441 = vector.shape_cast %440 : vector<1x8x32xf32> to vector<8x32xf32>
    %442 = vector.shape_cast %439 : vector<8x32xf32> to vector<1x8x32xf32>
    tpu.vector_store %arg10[%c0_189, %c0_190, %c0_191], %442 {strides = array<i32>} : memref<1x8x1024xf32, #tpu.memory_space<vmem>>, vector<1x8x32xf32>,
    %443 = vector.extract_strided_slice %438 {offsets = [0, 36], sizes = [8, 32], strides = [1, 1]} : vector<8x1152xf32> to vector<8x32xf32>
    %c0_192 = arith.constant 0 : index
    %c0_193 = arith.constant 0 : index
    %c32 = arith.constant 32 : index
    %444 = vector.load %arg10[%c0_192, %c0_193, %c32] : memref<1x8x1024xf32, #tpu.memory_space<vmem>>, vector<1x8x32xf32>
    %445 = vector.shape_cast %444 : vector<1x8x32xf32> to vector<8x32xf32>
    %446 = vector.shape_cast %443 : vector<8x32xf32> to vector<1x8x32xf32>
    tpu.vector_store %arg10[%c0_192, %c0_193, %c32], %446 {strides = array<i32>} : memref<1x8x1024xf32, #tpu.memory_space<vmem>>, vector<1x8x32xf32>,
    %447 = vector.extract_strided_slice %438 {offsets = [0, 72], sizes = [8, 32], strides = [1, 1]} : vector<8x1152xf32> to vector<8x32xf32>
    %c0_194 = arith.constant 0 : index
    %c0_195 = arith.constant 0 : index
    %c64 = arith.constant 64 : index
    %448 = vector.load %arg10[%c0_194, %c0_195, %c64] : memref<1x8x1024xf32, #tpu.memory_space<vmem>>, vector<1x8x32xf32>
    %449 = vector.shape_cast %448 : vector<1x8x32xf32> to vector<8x32xf32>
    %450 = vector.shape_cast %447 : vector<8x32xf32> to vector<1x8x32xf32>
    tpu.vector_store %arg10[%c0_194, %c0_195, %c64], %450 {strides = array<i32>} : memref<1x8x1024xf32, #tpu.memory_space<vmem>>, vector<1x8x32xf32>,
    %451 = vector.extract_strided_slice %438 {offsets = [0, 108], sizes = [8, 32], strides = [1, 1]} : vector<8x1152xf32> to vector<8x32xf32>
    %c0_196 = arith.constant 0 : index
    %c0_197 = arith.constant 0 : index
    %c96 = arith.constant 96 : index
    %452 = vector.load %arg10[%c0_196, %c0_197, %c96] : memref<1x8x1024xf32, #tpu.memory_space<vmem>>, vector<1x8x32xf32>
    %453 = vector.shape_cast %452 : vector<1x8x32xf32> to vector<8x32xf32>
    %454 = vector.shape_cast %451 : vector<8x32xf32> to vector<1x8x32xf32>
    tpu.vector_store %arg10[%c0_196, %c0_197, %c96], %454 {strides = array<i32>} : memref<1x8x1024xf32, #tpu.memory_space<vmem>>, vector<1x8x32xf32>,
    %455 = vector.extract_strided_slice %438 {offsets = [0, 144], sizes = [8, 32], strides = [1, 1]} : vector<8x1152xf32> to vector<8x32xf32>
    %c0_198 = arith.constant 0 : index
    %c0_199 = arith.constant 0 : index
    %c128 = arith.constant 128 : index
    %456 = vector.load %arg10[%c0_198, %c0_199, %c128] : memref<1x8x1024xf32, #tpu.memory_space<vmem>>, vector<1x8x32xf32>
    %457 = vector.shape_cast %456 : vector<1x8x32xf32> to vector<8x32xf32>
    %458 = vector.shape_cast %455 : vector<8x32xf32> to vector<1x8x32xf32>
    tpu.vector_store %arg10[%c0_198, %c0_199, %c128], %458 {strides = array<i32>} : memref<1x8x1024xf32, #tpu.memory_space<vmem>>, vector<1x8x32xf32>,
    %459 = vector.extract_strided_slice %438 {offsets = [0, 180], sizes = [8, 32], strides = [1, 1]} : vector<8x1152xf32> to vector<8x32xf32>
    %c0_200 = arith.constant 0 : index
    %c0_201 = arith.constant 0 : index
    %c160 = arith.constant 160 : index
    %460 = vector.load %arg10[%c0_200, %c0_201, %c160] : memref<1x8x1024xf32, #tpu.memory_space<vmem>>, vector<1x8x32xf32>
    %461 = vector.shape_cast %460 : vector<1x8x32xf32> to vector<8x32xf32>
    %462 = vector.shape_cast %459 : vector<8x32xf32> to vector<1x8x32xf32>
    tpu.vector_store %arg10[%c0_200, %c0_201, %c160], %462 {strides = array<i32>} : memref<1x8x1024xf32, #tpu.memory_space<vmem>>, vector<1x8x32xf32>,
    %463 = vector.extract_strided_slice %438 {offsets = [0, 216], sizes = [8, 32], strides = [1, 1]} : vector<8x1152xf32> to vector<8x32xf32>
    %c0_202 = arith.constant 0 : index
    %c0_203 = arith.constant 0 : index
    %c192 = arith.constant 192 : index
    %464 = vector.load %arg10[%c0_202, %c0_203, %c192] : memref<1x8x1024xf32, #tpu.memory_space<vmem>>, vector<1x8x32xf32>
    %465 = vector.shape_cast %464 : vector<1x8x32xf32> to vector<8x32xf32>
    %466 = vector.shape_cast %463 : vector<8x32xf32> to vector<1x8x32xf32>
    tpu.vector_store %arg10[%c0_202, %c0_203, %c192], %466 {strides = array<i32>} : memref<1x8x1024xf32, #tpu.memory_space<vmem>>, vector<1x8x32xf32>,
    %467 = vector.extract_strided_slice %438 {offsets = [0, 252], sizes = [8, 32], strides = [1, 1]} : vector<8x1152xf32> to vector<8x32xf32>
    %c0_204 = arith.constant 0 : index
    %c0_205 = arith.constant 0 : index
    %c224 = arith.constant 224 : index
    %468 = vector.load %arg10[%c0_204, %c0_205, %c224] : memref<1x8x1024xf32, #tpu.memory_space<vmem>>, vector<1x8x32xf32>
    %469 = vector.shape_cast %468 : vector<1x8x32xf32> to vector<8x32xf32>
    %470 = vector.shape_cast %467 : vector<8x32xf32> to vector<1x8x32xf32>
    tpu.vector_store %arg10[%c0_204, %c0_205, %c224], %470 {strides = array<i32>} : memref<1x8x1024xf32, #tpu.memory_space<vmem>>, vector<1x8x32xf32>,
    %471 = vector.extract_strided_slice %438 {offsets = [0, 288], sizes = [8, 32], strides = [1, 1]} : vector<8x1152xf32> to vector<8x32xf32>
    %c0_206 = arith.constant 0 : index
    %c0_207 = arith.constant 0 : index
    %c256 = arith.constant 256 : index
    %472 = vector.load %arg10[%c0_206, %c0_207, %c256] : memref<1x8x1024xf32, #tpu.memory_space<vmem>>, vector<1x8x32xf32>
    %473 = vector.shape_cast %472 : vector<1x8x32xf32> to vector<8x32xf32>
    %474 = vector.shape_cast %471 : vector<8x32xf32> to vector<1x8x32xf32>
    tpu.vector_store %arg10[%c0_206, %c0_207, %c256], %474 {strides = array<i32>} : memref<1x8x1024xf32, #tpu.memory_space<vmem>>, vector<1x8x32xf32>,
    %475 = vector.extract_strided_slice %438 {offsets = [0, 324], sizes = [8, 32], strides = [1, 1]} : vector<8x1152xf32> to vector<8x32xf32>
    %c0_208 = arith.constant 0 : index
    %c0_209 = arith.constant 0 : index
    %c288_210 = arith.constant 288 : index
    %476 = vector.load %arg10[%c0_208, %c0_209, %c288_210] : memref<1x8x1024xf32, #tpu.memory_space<vmem>>, vector<1x8x32xf32>
    %477 = vector.shape_cast %476 : vector<1x8x32xf32> to vector<8x32xf32>
    %478 = vector.shape_cast %475 : vector<8x32xf32> to vector<1x8x32xf32>
    tpu.vector_store %arg10[%c0_208, %c0_209, %c288_210], %478 {strides = array<i32>} : memref<1x8x1024xf32, #tpu.memory_space<vmem>>, vector<1x8x32xf32>,
    %479 = vector.extract_strided_slice %438 {offsets = [0, 360], sizes = [8, 32], strides = [1, 1]} : vector<8x1152xf32> to vector<8x32xf32>
    %c0_211 = arith.constant 0 : index
    %c0_212 = arith.constant 0 : index
    %c320 = arith.constant 320 : index
    %480 = vector.load %arg10[%c0_211, %c0_212, %c320] : memref<1x8x1024xf32, #tpu.memory_space<vmem>>, vector<1x8x32xf32>
    %481 = vector.shape_cast %480 : vector<1x8x32xf32> to vector<8x32xf32>
    %482 = vector.shape_cast %479 : vector<8x32xf32> to vector<1x8x32xf32>
    tpu.vector_store %arg10[%c0_211, %c0_212, %c320], %482 {strides = array<i32>} : memref<1x8x1024xf32, #tpu.memory_space<vmem>>, vector<1x8x32xf32>,
    %483 = vector.extract_strided_slice %438 {offsets = [0, 396], sizes = [8, 32], strides = [1, 1]} : vector<8x1152xf32> to vector<8x32xf32>
    %c0_213 = arith.constant 0 : index
    %c0_214 = arith.constant 0 : index
    %c352 = arith.constant 352 : index
    %484 = vector.load %arg10[%c0_213, %c0_214, %c352] : memref<1x8x1024xf32, #tpu.memory_space<vmem>>, vector<1x8x32xf32>
    %485 = vector.shape_cast %484 : vector<1x8x32xf32> to vector<8x32xf32>
    %486 = vector.shape_cast %483 : vector<8x32xf32> to vector<1x8x32xf32>
    tpu.vector_store %arg10[%c0_213, %c0_214, %c352], %486 {strides = array<i32>} : memref<1x8x1024xf32, #tpu.memory_space<vmem>>, vector<1x8x32xf32>,
    %487 = vector.extract_strided_slice %438 {offsets = [0, 432], sizes = [8, 32], strides = [1, 1]} : vector<8x1152xf32> to vector<8x32xf32>
    %c0_215 = arith.constant 0 : index
    %c0_216 = arith.constant 0 : index
    %c384 = arith.constant 384 : index
    %488 = vector.load %arg10[%c0_215, %c0_216, %c384] : memref<1x8x1024xf32, #tpu.memory_space<vmem>>, vector<1x8x32xf32>
    %489 = vector.shape_cast %488 : vector<1x8x32xf32> to vector<8x32xf32>
    %490 = vector.shape_cast %487 : vector<8x32xf32> to vector<1x8x32xf32>
    tpu.vector_store %arg10[%c0_215, %c0_216, %c384], %490 {strides = array<i32>} : memref<1x8x1024xf32, #tpu.memory_space<vmem>>, vector<1x8x32xf32>,
    %491 = vector.extract_strided_slice %438 {offsets = [0, 468], sizes = [8, 32], strides = [1, 1]} : vector<8x1152xf32> to vector<8x32xf32>
    %c0_217 = arith.constant 0 : index
    %c0_218 = arith.constant 0 : index
    %c416 = arith.constant 416 : index
    %492 = vector.load %arg10[%c0_217, %c0_218, %c416] : memref<1x8x1024xf32, #tpu.memory_space<vmem>>, vector<1x8x32xf32>
    %493 = vector.shape_cast %492 : vector<1x8x32xf32> to vector<8x32xf32>
    %494 = vector.shape_cast %491 : vector<8x32xf32> to vector<1x8x32xf32>
    tpu.vector_store %arg10[%c0_217, %c0_218, %c416], %494 {strides = array<i32>} : memref<1x8x1024xf32, #tpu.memory_space<vmem>>, vector<1x8x32xf32>,
    %495 = vector.extract_strided_slice %438 {offsets = [0, 504], sizes = [8, 32], strides = [1, 1]} : vector<8x1152xf32> to vector<8x32xf32>
    %c0_219 = arith.constant 0 : index
    %c0_220 = arith.constant 0 : index
    %c448 = arith.constant 448 : index
    %496 = vector.load %arg10[%c0_219, %c0_220, %c448] : memref<1x8x1024xf32, #tpu.memory_space<vmem>>, vector<1x8x32xf32>
    %497 = vector.shape_cast %496 : vector<1x8x32xf32> to vector<8x32xf32>
    %498 = vector.shape_cast %495 : vector<8x32xf32> to vector<1x8x32xf32>
    tpu.vector_store %arg10[%c0_219, %c0_220, %c448], %498 {strides = array<i32>} : memref<1x8x1024xf32, #tpu.memory_space<vmem>>, vector<1x8x32xf32>,
    %499 = vector.extract_strided_slice %438 {offsets = [0, 540], sizes = [8, 32], strides = [1, 1]} : vector<8x1152xf32> to vector<8x32xf32>
    %c0_221 = arith.constant 0 : index
    %c0_222 = arith.constant 0 : index
    %c480 = arith.constant 480 : index
    %500 = vector.load %arg10[%c0_221, %c0_222, %c480] : memref<1x8x1024xf32, #tpu.memory_space<vmem>>, vector<1x8x32xf32>
    %501 = vector.shape_cast %500 : vector<1x8x32xf32> to vector<8x32xf32>
    %502 = vector.shape_cast %499 : vector<8x32xf32> to vector<1x8x32xf32>
    tpu.vector_store %arg10[%c0_221, %c0_222, %c480], %502 {strides = array<i32>} : memref<1x8x1024xf32, #tpu.memory_space<vmem>>, vector<1x8x32xf32>,
    %503 = vector.extract_strided_slice %438 {offsets = [0, 576], sizes = [8, 32], strides = [1, 1]} : vector<8x1152xf32> to vector<8x32xf32>
    %c0_223 = arith.constant 0 : index
    %c0_224 = arith.constant 0 : index
    %c512 = arith.constant 512 : index
    %504 = vector.load %arg10[%c0_223, %c0_224, %c512] : memref<1x8x1024xf32, #tpu.memory_space<vmem>>, vector<1x8x32xf32>
    %505 = vector.shape_cast %504 : vector<1x8x32xf32> to vector<8x32xf32>
    %506 = vector.shape_cast %503 : vector<8x32xf32> to vector<1x8x32xf32>
    tpu.vector_store %arg10[%c0_223, %c0_224, %c512], %506 {strides = array<i32>} : memref<1x8x1024xf32, #tpu.memory_space<vmem>>, vector<1x8x32xf32>,
    %507 = vector.extract_strided_slice %438 {offsets = [0, 612], sizes = [8, 32], strides = [1, 1]} : vector<8x1152xf32> to vector<8x32xf32>
    %c0_225 = arith.constant 0 : index
    %c0_226 = arith.constant 0 : index
    %c544 = arith.constant 544 : index
    %508 = vector.load %arg10[%c0_225, %c0_226, %c544] : memref<1x8x1024xf32, #tpu.memory_space<vmem>>, vector<1x8x32xf32>
    %509 = vector.shape_cast %508 : vector<1x8x32xf32> to vector<8x32xf32>
    %510 = vector.shape_cast %507 : vector<8x32xf32> to vector<1x8x32xf32>
    tpu.vector_store %arg10[%c0_225, %c0_226, %c544], %510 {strides = array<i32>} : memref<1x8x1024xf32, #tpu.memory_space<vmem>>, vector<1x8x32xf32>,
    %511 = vector.extract_strided_slice %438 {offsets = [0, 648], sizes = [8, 32], strides = [1, 1]} : vector<8x1152xf32> to vector<8x32xf32>
    %c0_227 = arith.constant 0 : index
    %c0_228 = arith.constant 0 : index
    %c576_229 = arith.constant 576 : index
    %512 = vector.load %arg10[%c0_227, %c0_228, %c576_229] : memref<1x8x1024xf32, #tpu.memory_space<vmem>>, vector<1x8x32xf32>
    %513 = vector.shape_cast %512 : vector<1x8x32xf32> to vector<8x32xf32>
    %514 = vector.shape_cast %511 : vector<8x32xf32> to vector<1x8x32xf32>
    tpu.vector_store %arg10[%c0_227, %c0_228, %c576_229], %514 {strides = array<i32>} : memref<1x8x1024xf32, #tpu.memory_space<vmem>>, vector<1x8x32xf32>,
    %515 = vector.extract_strided_slice %438 {offsets = [0, 684], sizes = [8, 32], strides = [1, 1]} : vector<8x1152xf32> to vector<8x32xf32>
    %c0_230 = arith.constant 0 : index
    %c0_231 = arith.constant 0 : index
    %c608 = arith.constant 608 : index
    %516 = vector.load %arg10[%c0_230, %c0_231, %c608] : memref<1x8x1024xf32, #tpu.memory_space<vmem>>, vector<1x8x32xf32>
    %517 = vector.shape_cast %516 : vector<1x8x32xf32> to vector<8x32xf32>
    %518 = vector.shape_cast %515 : vector<8x32xf32> to vector<1x8x32xf32>
    tpu.vector_store %arg10[%c0_230, %c0_231, %c608], %518 {strides = array<i32>} : memref<1x8x1024xf32, #tpu.memory_space<vmem>>, vector<1x8x32xf32>,
    %519 = vector.extract_strided_slice %438 {offsets = [0, 720], sizes = [8, 32], strides = [1, 1]} : vector<8x1152xf32> to vector<8x32xf32>
    %c0_232 = arith.constant 0 : index
    %c0_233 = arith.constant 0 : index
    %c640 = arith.constant 640 : index
    %520 = vector.load %arg10[%c0_232, %c0_233, %c640] : memref<1x8x1024xf32, #tpu.memory_space<vmem>>, vector<1x8x32xf32>
    %521 = vector.shape_cast %520 : vector<1x8x32xf32> to vector<8x32xf32>
    %522 = vector.shape_cast %519 : vector<8x32xf32> to vector<1x8x32xf32>
    tpu.vector_store %arg10[%c0_232, %c0_233, %c640], %522 {strides = array<i32>} : memref<1x8x1024xf32, #tpu.memory_space<vmem>>, vector<1x8x32xf32>,
    %523 = vector.extract_strided_slice %438 {offsets = [0, 756], sizes = [8, 32], strides = [1, 1]} : vector<8x1152xf32> to vector<8x32xf32>
    %c0_234 = arith.constant 0 : index
    %c0_235 = arith.constant 0 : index
    %c672 = arith.constant 672 : index
    %524 = vector.load %arg10[%c0_234, %c0_235, %c672] : memref<1x8x1024xf32, #tpu.memory_space<vmem>>, vector<1x8x32xf32>
    %525 = vector.shape_cast %524 : vector<1x8x32xf32> to vector<8x32xf32>
    %526 = vector.shape_cast %523 : vector<8x32xf32> to vector<1x8x32xf32>
    tpu.vector_store %arg10[%c0_234, %c0_235, %c672], %526 {strides = array<i32>} : memref<1x8x1024xf32, #tpu.memory_space<vmem>>, vector<1x8x32xf32>,
    %527 = vector.extract_strided_slice %438 {offsets = [0, 792], sizes = [8, 32], strides = [1, 1]} : vector<8x1152xf32> to vector<8x32xf32>
    %c0_236 = arith.constant 0 : index
    %c0_237 = arith.constant 0 : index
    %c704 = arith.constant 704 : index
    %528 = vector.load %arg10[%c0_236, %c0_237, %c704] : memref<1x8x1024xf32, #tpu.memory_space<vmem>>, vector<1x8x32xf32>
    %529 = vector.shape_cast %528 : vector<1x8x32xf32> to vector<8x32xf32>
    %530 = vector.shape_cast %527 : vector<8x32xf32> to vector<1x8x32xf32>
    tpu.vector_store %arg10[%c0_236, %c0_237, %c704], %530 {strides = array<i32>} : memref<1x8x1024xf32, #tpu.memory_space<vmem>>, vector<1x8x32xf32>,
    %531 = vector.extract_strided_slice %438 {offsets = [0, 828], sizes = [8, 32], strides = [1, 1]} : vector<8x1152xf32> to vector<8x32xf32>
    %c0_238 = arith.constant 0 : index
    %c0_239 = arith.constant 0 : index
    %c736 = arith.constant 736 : index
    %532 = vector.load %arg10[%c0_238, %c0_239, %c736] : memref<1x8x1024xf32, #tpu.memory_space<vmem>>, vector<1x8x32xf32>
    %533 = vector.shape_cast %532 : vector<1x8x32xf32> to vector<8x32xf32>
    %534 = vector.shape_cast %531 : vector<8x32xf32> to vector<1x8x32xf32>
    tpu.vector_store %arg10[%c0_238, %c0_239, %c736], %534 {strides = array<i32>} : memref<1x8x1024xf32, #tpu.memory_space<vmem>>, vector<1x8x32xf32>,
    %535 = vector.extract_strided_slice %438 {offsets = [0, 864], sizes = [8, 32], strides = [1, 1]} : vector<8x1152xf32> to vector<8x32xf32>
    %c0_240 = arith.constant 0 : index
    %c0_241 = arith.constant 0 : index
    %c768 = arith.constant 768 : index
    %536 = vector.load %arg10[%c0_240, %c0_241, %c768] : memref<1x8x1024xf32, #tpu.memory_space<vmem>>, vector<1x8x32xf32>
    %537 = vector.shape_cast %536 : vector<1x8x32xf32> to vector<8x32xf32>
    %538 = vector.shape_cast %535 : vector<8x32xf32> to vector<1x8x32xf32>
    tpu.vector_store %arg10[%c0_240, %c0_241, %c768], %538 {strides = array<i32>} : memref<1x8x1024xf32, #tpu.memory_space<vmem>>, vector<1x8x32xf32>,
    %539 = vector.extract_strided_slice %438 {offsets = [0, 900], sizes = [8, 32], strides = [1, 1]} : vector<8x1152xf32> to vector<8x32xf32>
    %c0_242 = arith.constant 0 : index
    %c0_243 = arith.constant 0 : index
    %c800 = arith.constant 800 : index
    %540 = vector.load %arg10[%c0_242, %c0_243, %c800] : memref<1x8x1024xf32, #tpu.memory_space<vmem>>, vector<1x8x32xf32>
    %541 = vector.shape_cast %540 : vector<1x8x32xf32> to vector<8x32xf32>
    %542 = vector.shape_cast %539 : vector<8x32xf32> to vector<1x8x32xf32>
    tpu.vector_store %arg10[%c0_242, %c0_243, %c800], %542 {strides = array<i32>} : memref<1x8x1024xf32, #tpu.memory_space<vmem>>, vector<1x8x32xf32>,
    %543 = vector.extract_strided_slice %438 {offsets = [0, 936], sizes = [8, 32], strides = [1, 1]} : vector<8x1152xf32> to vector<8x32xf32>
    %c0_244 = arith.constant 0 : index
    %c0_245 = arith.constant 0 : index
    %c832 = arith.constant 832 : index
    %544 = vector.load %arg10[%c0_244, %c0_245, %c832] : memref<1x8x1024xf32, #tpu.memory_space<vmem>>, vector<1x8x32xf32>
    %545 = vector.shape_cast %544 : vector<1x8x32xf32> to vector<8x32xf32>
    %546 = vector.shape_cast %543 : vector<8x32xf32> to vector<1x8x32xf32>
    tpu.vector_store %arg10[%c0_244, %c0_245, %c832], %546 {strides = array<i32>} : memref<1x8x1024xf32, #tpu.memory_space<vmem>>, vector<1x8x32xf32>,
    %547 = vector.extract_strided_slice %438 {offsets = [0, 972], sizes = [8, 32], strides = [1, 1]} : vector<8x1152xf32> to vector<8x32xf32>
    %c0_246 = arith.constant 0 : index
    %c0_247 = arith.constant 0 : index
    %c864_248 = arith.constant 864 : index
    %548 = vector.load %arg10[%c0_246, %c0_247, %c864_248] : memref<1x8x1024xf32, #tpu.memory_space<vmem>>, vector<1x8x32xf32>
    %549 = vector.shape_cast %548 : vector<1x8x32xf32> to vector<8x32xf32>
    %550 = vector.shape_cast %547 : vector<8x32xf32> to vector<1x8x32xf32>
    tpu.vector_store %arg10[%c0_246, %c0_247, %c864_248], %550 {strides = array<i32>} : memref<1x8x1024xf32, #tpu.memory_space<vmem>>, vector<1x8x32xf32>,
    %551 = vector.extract_strided_slice %438 {offsets = [0, 1008], sizes = [8, 32], strides = [1, 1]} : vector<8x1152xf32> to vector<8x32xf32>
    %c0_249 = arith.constant 0 : index
    %c0_250 = arith.constant 0 : index
    %c896 = arith.constant 896 : index
    %552 = vector.load %arg10[%c0_249, %c0_250, %c896] : memref<1x8x1024xf32, #tpu.memory_space<vmem>>, vector<1x8x32xf32>
    %553 = vector.shape_cast %552 : vector<1x8x32xf32> to vector<8x32xf32>
    %554 = vector.shape_cast %551 : vector<8x32xf32> to vector<1x8x32xf32>
    tpu.vector_store %arg10[%c0_249, %c0_250, %c896], %554 {strides = array<i32>} : memref<1x8x1024xf32, #tpu.memory_space<vmem>>, vector<1x8x32xf32>,
    %555 = vector.extract_strided_slice %438 {offsets = [0, 1044], sizes = [8, 32], strides = [1, 1]} : vector<8x1152xf32> to vector<8x32xf32>
    %c0_251 = arith.constant 0 : index
    %c0_252 = arith.constant 0 : index
    %c928 = arith.constant 928 : index
    %556 = vector.load %arg10[%c0_251, %c0_252, %c928] : memref<1x8x1024xf32, #tpu.memory_space<vmem>>, vector<1x8x32xf32>
    %557 = vector.shape_cast %556 : vector<1x8x32xf32> to vector<8x32xf32>
    %558 = vector.shape_cast %555 : vector<8x32xf32> to vector<1x8x32xf32>
    tpu.vector_store %arg10[%c0_251, %c0_252, %c928], %558 {strides = array<i32>} : memref<1x8x1024xf32, #tpu.memory_space<vmem>>, vector<1x8x32xf32>,
    %559 = vector.extract_strided_slice %438 {offsets = [0, 1080], sizes = [8, 32], strides = [1, 1]} : vector<8x1152xf32> to vector<8x32xf32>
    %c0_253 = arith.constant 0 : index
    %c0_254 = arith.constant 0 : index
    %c960 = arith.constant 960 : index
    %560 = vector.load %arg10[%c0_253, %c0_254, %c960] : memref<1x8x1024xf32, #tpu.memory_space<vmem>>, vector<1x8x32xf32>
    %561 = vector.shape_cast %560 : vector<1x8x32xf32> to vector<8x32xf32>
    %562 = vector.shape_cast %559 : vector<8x32xf32> to vector<1x8x32xf32>
    tpu.vector_store %arg10[%c0_253, %c0_254, %c960], %562 {strides = array<i32>} : memref<1x8x1024xf32, #tpu.memory_space<vmem>>, vector<1x8x32xf32>,
    %563 = vector.extract_strided_slice %438 {offsets = [0, 1116], sizes = [8, 32], strides = [1, 1]} : vector<8x1152xf32> to vector<8x32xf32>
    %c0_255 = arith.constant 0 : index
    %c0_256 = arith.constant 0 : index
    %c992 = arith.constant 992 : index
    %564 = vector.load %arg10[%c0_255, %c0_256, %c992] : memref<1x8x1024xf32, #tpu.memory_space<vmem>>, vector<1x8x32xf32>
    %565 = vector.shape_cast %564 : vector<1x8x32xf32> to vector<8x32xf32>
    %566 = vector.shape_cast %563 : vector<8x32xf32> to vector<1x8x32xf32>
    tpu.vector_store %arg10[%c0_255, %c0_256, %c992], %566 {strides = array<i32>} : memref<1x8x1024xf32, #tpu.memory_space<vmem>>, vector<1x8x32xf32>,
    return
  }
  func.func @transform_0(%arg0: i32) -> (i32, i32, i32) {
    %c0_i32 = arith.constant 0 : i32
    %c0_i32_0 = arith.constant 0 : i32
    %c0_i32_1 = arith.constant 0 : i32
    return %arg0, %c0_i32, %c0_i32_0 : i32, i32, i32
  }
  func.func @transform_1(%arg0: i32) -> (i32, i32) {
    %c0_i32 = arith.constant 0 : i32
    %c0_i32_0 = arith.constant 0 : i32
    %c0_i32_1 = arith.constant 0 : i32
    return %c0_i32, %c0_i32_0 : i32, i32
  }
  func.func @transform_2(%arg0: i32) -> (i32, i32) {
    %c0_i32 = arith.constant 0 : i32
    %c0_i32_0 = arith.constant 0 : i32
    %c0_i32_1 = arith.constant 0 : i32
    return %c0_i32, %c0_i32_0 : i32, i32
  }
  func.func @transform_3(%arg0: i32) -> (i32, i32) {
    %c0_i32 = arith.constant 0 : i32
    %c0_i32_0 = arith.constant 0 : i32
    %c0_i32_1 = arith.constant 0 : i32
    return %c0_i32, %c0_i32_0 : i32, i32
  }
  func.func @transform_4(%arg0: i32) -> (i32, i32) {
    %c0_i32 = arith.constant 0 : i32
    %c0_i32_0 = arith.constant 0 : i32
    %c0_i32_1 = arith.constant 0 : i32
    return %c0_i32, %c0_i32_0 : i32, i32
  }
  func.func @transform_5(%arg0: i32) -> (i32, i32) {
    %c0_i32 = arith.constant 0 : i32
    %c0_i32_0 = arith.constant 0 : i32
    %c0_i32_1 = arith.constant 0 : i32
    return %c0_i32, %c0_i32_0 : i32, i32
  }
  func.func @transform_6(%arg0: i32) -> (i32, i32) {
    %c0_i32 = arith.constant 0 : i32
    %c0_i32_0 = arith.constant 0 : i32
    %c0_i32_1 = arith.constant 0 : i32
    return %c0_i32, %c0_i32_0 : i32, i32
  }
  func.func @transform_7(%arg0: i32) -> (i32, i32) {
    %c0_i32 = arith.constant 0 : i32
    %c0_i32_0 = arith.constant 0 : i32
    %c0_i32_1 = arith.constant 0 : i32
    return %c0_i32, %c0_i32_0 : i32, i32
  }
  func.func @transform_8(%arg0: i32) -> (i32, i32, i32) {
    %c0_i32 = arith.constant 0 : i32
    %c0_i32_0 = arith.constant 0 : i32
    %c0_i32_1 = arith.constant 0 : i32
    return %arg0, %c0_i32, %c0_i32_0 : i32, i32, i32
  }
  func.func @transform_9(%arg0: i32) -> (i32, i32, i32) {
    %c0_i32 = arith.constant 0 : i32
    %c0_i32_0 = arith.constant 0 : i32
    %c0_i32_1 = arith.constant 0 : i32
    return %arg0, %c0_i32, %c0_i32_0 : i32, i32, i32
  }
}

</mosaic_0001>

<llo_original>
// kernel: simple_noise_res_up_conv_block.1
$region0: #{simple_noise_res_up_conv_block.1}
  #allocation0 [shape = 'u32[]', space=smem, size = 0x4, offset = 0x4, fixed_abs, tag = 'smem constant byte address 0x4 - core index']
  #allocation1 [shape = 'u32[144,128]{1,0:T(1,128)}', space=vmem, size = 0x12000, scoped, tag = 'internal scratch']
  #allocation2 [shape = 'bf16[4,1260]{1,0:T(4,128)(2,1)}', space=vmem, size = 0x2800, scoped, tag = 'scratch operand']
  #allocation3 [shape = 'bf16[4,1260]{1,0:T(4,128)(2,1)}', space=vmem, size = 0x2800, scoped, tag = 'scratch operand']
  %s0 = inlined_call_operand.vmem [shape: bf16[2,64,16], index: 0, kind: input, shape index: {}]
  %s1 = inlined_call_operand.vmem [shape: bf16[16,36], index: 1, kind: input, shape index: {}]
  %s2 = inlined_call_operand.vmem [shape: bf16[12,36], index: 2, kind: input, shape index: {}]
  %s3 = inlined_call_operand.vmem [shape: f32[12,1], index: 3, kind: input, shape index: {}]
  %s4 = inlined_call_operand.vmem [shape: f32[12,1], index: 4, kind: input, shape index: {}]
  %s5 = inlined_call_operand.vmem [shape: bf16[8,36], index: 5, kind: input, shape index: {}]
  %s6 = inlined_call_operand.vmem [shape: f32[8,1], index: 6, kind: input, shape index: {}]
  %s7 = inlined_call_operand.vmem [shape: f32[8,1], index: 7, kind: input, shape index: {}]
  %s8 = inlined_call_operand.vmem [shape: f32[2,1,1152], index: 8, kind: input, shape index: {}]
  %s9 = inlined_call_operand.vmem [shape: f32[2,8,1024], index: 9, kind: output, shape index: {}]
  %s10 = sld [smem:[#allocation0]]
  $region69: #{simple_noise_res_up_conv_block.1} parent=0
    _
  %s12 = ssub.s32 1, %s10
  %s13 = scalar_select 0, %s12, %s10
  loop: start=0, step=1, limit=4
  $region2: #{simple_noise_res_up_conv_block.1} parent=0 // loop_pre_header
    _
  $region3: #{simple_noise_res_up_conv_block.1} parent=0 // loop_header
    %s15 = sphi 0, %s19
    %p16 = scmp.ge.s32.totalorder %s15, 4
    %s25 = sphi 0, %s27
    %s28 = sphi 0, %s25
    %s29 = sphi 0, %s28
    %s45 = sphi 0, %s29
    %s49 = sphi 0, %s49
    %s51 = sphi 0, %s49
    %s52 = sphi 0, %s51
    %s66 = sphi 0, %s52
    %s70 = sphi 0, %s70
    %s72 = sphi 0, %s70
    %s73 = sphi 0, %s72
    %s87 = sphi 0, %s73
    %s91 = sphi 0, %s91
    %s93 = sphi 0, %s91
    %s94 = sphi 0, %s93
    %s108 = sphi 0, %s94
    %s112 = sphi 0, %s112
    %s114 = sphi 0, %s112
    %s115 = sphi 0, %s114
    %s129 = sphi 0, %s115
    %s133 = sphi 0, %s133
    %s135 = sphi 0, %s133
    %s136 = sphi 0, %s135
    %s150 = sphi 0, %s136
    %s154 = sphi 0, %s154
    %s156 = sphi 0, %s154
    %s157 = sphi 0, %s156
    %s171 = sphi 0, %s157
    %s175 = sphi 0, %s175
    %s177 = sphi 0, %s175
    %s178 = sphi 0, %s177
    %s192 = sphi 0, %s178
    %s198 = sphi 0, %s200
    %s201 = sphi 0, %s198
    %s202 = sphi 0, %s201
    %s218 = sphi 0, %s202
    %s224 = sphi 0, %s226
    %s227 = sphi 0, %s224
    %s228 = sphi 0, %s227
    %s244 = sphi 0, %s228
  $region4: #{simple_noise_res_up_conv_block.1} parent=0 // loop_header_branch
    %18 = sbr.rel (%p16) target = $region8
  $region5: #{simple_noise_res_up_conv_block.1} parent=0 // loop_body
    %s20 = ssub.s32 %s15, 1
    %s21 = ssub.s32 %s15, 2
    %s22 = sadd.s32 %s15, 1
    %s23 = ssub.s32 %s15, %s22
    %p24 = scmp.eq.s32.totalorder %s23, 0
    %s26 = sadd.s32 %s25, 1
    %s27 = scalar_select %p24, %s25, %s26
    %p30 = pneg %p24
    %p31 = scmp.eq.s32.totalorder %s15, 1
    %p32 = por %p30, %p31
    %p33 = scmp.ne.s32.totalorder %s25, %s28
    %p34 = scmp.eq.s32.totalorder %s15, 0
    %p35 = por %p33, %p34
    %p36 = scmp.ne.s32.totalorder %s25, %s28
    %p37 = scmp.eq.s32.totalorder %s20, 1
    %p38 = por %p36, %p37
    %p39 = scmp.ne.s32.totalorder %s28, %s29
    %p40 = scmp.eq.s32.totalorder %s20, 0
    %p41 = por %p39, %p40
    %p42 = scmp.ne.s32.totalorder %s28, %s29
    %p43 = scmp.eq.s32.totalorder %s21, 1
    %p44 = por %p42, %p43
    %p46 = scmp.ne.s32.totalorder %s29, %s45
    %p47 = scmp.eq.s32.totalorder %s21, 0
    %p48 = por %p46, %p47
    %s50 = sadd.s32 %s49, 1
    %p53 = scmp.eq.s32.totalorder %s15, 1
    %p54 = scmp.ne.s32.totalorder %s49, %s51
    %p55 = scmp.eq.s32.totalorder %s15, 0
    %p56 = por %p54, %p55
    %p57 = scmp.ne.s32.totalorder %s49, %s51
    %p58 = scmp.eq.s32.totalorder %s20, 1
    %p59 = por %p57, %p58
    %p60 = scmp.ne.s32.totalorder %s51, %s52
    %p61 = scmp.eq.s32.totalorder %s20, 0
    %p62 = por %p60, %p61
    %p63 = scmp.ne.s32.totalorder %s51, %s52
    %p64 = scmp.eq.s32.totalorder %s21, 1
    %p65 = por %p63, %p64
    %p67 = scmp.ne.s32.totalorder %s52, %s66
    %p68 = scmp.eq.s32.totalorder %s21, 0
    %p69 = por %p67, %p68
    %s71 = sadd.s32 %s70, 1
    %p74 = scmp.eq.s32.totalorder %s15, 1
    %p75 = scmp.ne.s32.totalorder %s70, %s72
    %p76 = scmp.eq.s32.totalorder %s15, 0
    %p77 = por %p75, %p76
    %p78 = scmp.ne.s32.totalorder %s70, %s72
    %p79 = scmp.eq.s32.totalorder %s20, 1
    %p80 = por %p78, %p79
    %p81 = scmp.ne.s32.totalorder %s72, %s73
    %p82 = scmp.eq.s32.totalorder %s20, 0
    %p83 = por %p81, %p82
    %p84 = scmp.ne.s32.totalorder %s72, %s73
    %p85 = scmp.eq.s32.totalorder %s21, 1
    %p86 = por %p84, %p85
    %p88 = scmp.ne.s32.totalorder %s73, %s87
    %p89 = scmp.eq.s32.totalorder %s21, 0
    %p90 = por %p88, %p89
    %s92 = sadd.s32 %s91, 1
    %p95 = scmp.eq.s32.totalorder %s15, 1
    %p96 = scmp.ne.s32.totalorder %s91, %s93
    %p97 = scmp.eq.s32.totalorder %s15, 0
    %p98 = por %p96, %p97
    %p99 = scmp.ne.s32.totalorder %s91, %s93
    %p100 = scmp.eq.s32.totalorder %s20, 1
    %p101 = por %p99, %p100
    %p102 = scmp.ne.s32.totalorder %s93, %s94
    %p103 = scmp.eq.s32.totalorder %s20, 0
    %p104 = por %p102, %p103
    %p105 = scmp.ne.s32.totalorder %s93, %s94
    %p106 = scmp.eq.s32.totalorder %s21, 1
    %p107 = por %p105, %p106
    %p109 = scmp.ne.s32.totalorder %s94, %s108
    %p110 = scmp.eq.s32.totalorder %s21, 0
    %p111 = por %p109, %p110
    %s113 = sadd.s32 %s112, 1
    %p116 = scmp.eq.s32.totalorder %s15, 1
    %p117 = scmp.ne.s32.totalorder %s112, %s114
    %p118 = scmp.eq.s32.totalorder %s15, 0
    %p119 = por %p117, %p118
    %p120 = scmp.ne.s32.totalorder %s112, %s114
    %p121 = scmp.eq.s32.totalorder %s20, 1
    %p122 = por %p120, %p121
    %p123 = scmp.ne.s32.totalorder %s114, %s115
    %p124 = scmp.eq.s32.totalorder %s20, 0
    %p125 = por %p123, %p124
    %p126 = scmp.ne.s32.totalorder %s114, %s115
    %p127 = scmp.eq.s32.totalorder %s21, 1
    %p128 = por %p126, %p127
    %p130 = scmp.ne.s32.totalorder %s115, %s129
    %p131 = scmp.eq.s32.totalorder %s21, 0
    %p132 = por %p130, %p131
    %s134 = sadd.s32 %s133, 1
    %p137 = scmp.eq.s32.totalorder %s15, 1
    %p138 = scmp.ne.s32.totalorder %s133, %s135
    %p139 = scmp.eq.s32.totalorder %s15, 0
    %p140 = por %p138, %p139
    %p141 = scmp.ne.s32.totalorder %s133, %s135
    %p142 = scmp.eq.s32.totalorder %s20, 1
    %p143 = por %p141, %p142
    %p144 = scmp.ne.s32.totalorder %s135, %s136
    %p145 = scmp.eq.s32.totalorder %s20, 0
    %p146 = por %p144, %p145
    %p147 = scmp.ne.s32.totalorder %s135, %s136
    %p148 = scmp.eq.s32.totalorder %s21, 1
    %p149 = por %p147, %p148
    %p151 = scmp.ne.s32.totalorder %s136, %s150
    %p152 = scmp.eq.s32.totalorder %s21, 0
    %p153 = por %p151, %p152
    %s155 = sadd.s32 %s154, 1
    %p158 = scmp.eq.s32.totalorder %s15, 1
    %p159 = scmp.ne.s32.totalorder %s154, %s156
    %p160 = scmp.eq.s32.totalorder %s15, 0
    %p161 = por %p159, %p160
    %p162 = scmp.ne.s32.totalorder %s154, %s156
    %p163 = scmp.eq.s32.totalorder %s20, 1
    %p164 = por %p162, %p163
    %p165 = scmp.ne.s32.totalorder %s156, %s157
    %p166 = scmp.eq.s32.totalorder %s20, 0
    %p167 = por %p165, %p166
    %p168 = scmp.ne.s32.totalorder %s156, %s157
    %p169 = scmp.eq.s32.totalorder %s21, 1
    %p170 = por %p168, %p169
    %p172 = scmp.ne.s32.totalorder %s157, %s171
    %p173 = scmp.eq.s32.totalorder %s21, 0
    %p174 = por %p172, %p173
    %s176 = sadd.s32 %s175, 1
    %p179 = scmp.eq.s32.totalorder %s15, 1
    %p180 = scmp.ne.s32.totalorder %s175, %s177
    %p181 = scmp.eq.s32.totalorder %s15, 0
    %p182 = por %p180, %p181
    %p183 = scmp.ne.s32.totalorder %s175, %s177
    %p184 = scmp.eq.s32.totalorder %s20, 1
    %p185 = por %p183, %p184
    %p186 = scmp.ne.s32.totalorder %s177, %s178
    %p187 = scmp.eq.s32.totalorder %s20, 0
    %p188 = por %p186, %p187
    %p189 = scmp.ne.s32.totalorder %s177, %s178
    %p190 = scmp.eq.s32.totalorder %s21, 1
    %p191 = por %p189, %p190
    %p193 = scmp.ne.s32.totalorder %s178, %s192
    %p194 = scmp.eq.s32.totalorder %s21, 0
    %p195 = por %p193, %p194
    %s196 = ssub.s32 %s15, %s22
    %p197 = scmp.eq.s32.totalorder %s196, 0
    %s199 = sadd.s32 %s198, 1
    %s200 = scalar_select %p197, %s198, %s199
    %p203 = pneg %p197
    %p204 = scmp.eq.s32.totalorder %s15, 1
    %p205 = por %p203, %p204
    %p206 = scmp.ne.s32.totalorder %s198, %s201
    %p207 = scmp.eq.s32.totalorder %s15, 0
    %p208 = por %p206, %p207
    %p209 = scmp.ne.s32.totalorder %s198, %s201
    %p210 = scmp.eq.s32.totalorder %s20, 1
    %p211 = por %p209, %p210
    %p212 = scmp.ne.s32.totalorder %s201, %s202
    %p213 = scmp.eq.s32.totalorder %s20, 0
    %p214 = por %p212, %p213
    %p215 = scmp.ne.s32.totalorder %s201, %s202
    %p216 = scmp.eq.s32.totalorder %s21, 1
    %p217 = por %p215, %p216
    %p219 = scmp.ne.s32.totalorder %s202, %s218
    %p220 = scmp.eq.s32.totalorder %s21, 0
    %p221 = por %p219, %p220
    %s222 = ssub.s32 %s15, %s22
    %p223 = scmp.eq.s32.totalorder %s222, 0
    %s225 = sadd.s32 %s224, 1
    %s226 = scalar_select %p223, %s224, %s225
    %p229 = pneg %p223
    %p230 = scmp.eq.s32.totalorder %s15, 1
    %p231 = por %p229, %p230
    %p232 = scmp.ne.s32.totalorder %s224, %s227
    %p233 = scmp.eq.s32.totalorder %s15, 0
    %p234 = por %p232, %p233
    %p235 = scmp.ne.s32.totalorder %s224, %s227
    %p236 = scmp.eq.s32.totalorder %s20, 1
    %p237 = por %p235, %p236
    %p238 = scmp.ne.s32.totalorder %s227, %s228
    %p239 = scmp.eq.s32.totalorder %s20, 0
    %p240 = por %p238, %p239
    %p241 = scmp.ne.s32.totalorder %s227, %s228
    %p242 = scmp.eq.s32.totalorder %s21, 1
    %p243 = por %p241, %p242
    %p245 = scmp.ne.s32.totalorder %s228, %s244
    %p246 = scmp.eq.s32.totalorder %s21, 0
    %p247 = por %p245, %p246
    %p248 = scmp.le.s32.totalorder 1, %s15
    %p249 = scmp.lt.s32.totalorder %s15, 3
    %p250 = pnand %p248, %p249
    %p251 = pneg %p250
    // Predicated region
    $region9: #{simple_noise_res_up_conv_block.1} parent=5 // pred_check
      _
    $region10: #{simple_noise_res_up_conv_block.1} parent=5 // pred_check_branch
      %253 = sbr.rel (%p250) target = $region12
    $region11: #{simple_noise_res_up_conv_block.1} parent=5 // pred_region
      %s254 = ssub.s32 %s15, 1
      // Predicated region
      $region13: #{simple_noise_res_up_conv_block.1} parent=11 // pred_check
        %p255 = pneg %p62
      $region14: #{simple_noise_res_up_conv_block.1} parent=11 // pred_check_branch
        %257 = sbr.rel (%p255) target = $region16
      $region15: #{simple_noise_res_up_conv_block.1} parent=11 // pred_region
        _
      $region16: #{simple_noise_res_up_conv_block.1} parent=11 // pred_fallthru
        _
      // Predicated region
      $region17: #{simple_noise_res_up_conv_block.1} parent=11 // pred_check
        %p258 = pneg %p83
      $region18: #{simple_noise_res_up_conv_block.1} parent=11 // pred_check_branch
        %260 = sbr.rel (%p258) target = $region20
      $region19: #{simple_noise_res_up_conv_block.1} parent=11 // pred_region
        _
      $region20: #{simple_noise_res_up_conv_block.1} parent=11 // pred_fallthru
        _
      // Predicated region
      $region21: #{simple_noise_res_up_conv_block.1} parent=11 // pred_check
        %p261 = pneg %p104
      $region22: #{simple_noise_res_up_conv_block.1} parent=11 // pred_check_branch
        %263 = sbr.rel (%p261) target = $region24
      $region23: #{simple_noise_res_up_conv_block.1} parent=11 // pred_region
        _
      $region24: #{simple_noise_res_up_conv_block.1} parent=11 // pred_fallthru
        _
      // Predicated region
      $region25: #{simple_noise_res_up_conv_block.1} parent=11 // pred_check
        %p264 = pneg %p125
      $region26: #{simple_noise_res_up_conv_block.1} parent=11 // pred_check_branch
        %266 = sbr.rel (%p264) target = $region28
      $region27: #{simple_noise_res_up_conv_block.1} parent=11 // pred_region
        _
      $region28: #{simple_noise_res_up_conv_block.1} parent=11 // pred_fallthru
        _
      // Predicated region
      $region29: #{simple_noise_res_up_conv_block.1} parent=11 // pred_check
        %p267 = pneg %p146
      $region30: #{simple_noise_res_up_conv_block.1} parent=11 // pred_check_branch
        %269 = sbr.rel (%p267) target = $region32
      $region31: #{simple_noise_res_up_conv_block.1} parent=11 // pred_region
        _
      $region32: #{simple_noise_res_up_conv_block.1} parent=11 // pred_fallthru
        _
      // Predicated region
      $region33: #{simple_noise_res_up_conv_block.1} parent=11 // pred_check
        %p270 = pneg %p167
      $region34: #{simple_noise_res_up_conv_block.1} parent=11 // pred_check_branch
        %272 = sbr.rel (%p270) target = $region36
      $region35: #{simple_noise_res_up_conv_block.1} parent=11 // pred_region
        _
      $region36: #{simple_noise_res_up_conv_block.1} parent=11 // pred_fallthru
        _
      // Predicated region
      $region37: #{simple_noise_res_up_conv_block.1} parent=11 // pred_check
        %p273 = pneg %p188
      $region38: #{simple_noise_res_up_conv_block.1} parent=11 // pred_check_branch
        %275 = sbr.rel (%p273) target = $region40
      $region39: #{simple_noise_res_up_conv_block.1} parent=11 // pred_region
        _
      $region40: #{simple_noise_res_up_conv_block.1} parent=11 // pred_fallthru
        _
    $region12: #{simple_noise_res_up_conv_block.1} parent=5 // pred_fallthru
      _
    %p276 = scmp.lt.s32.totalorder %s15, 2
    // Predicated region
    $region41: #{simple_noise_res_up_conv_block.1} parent=5 // pred_check
      %p277 = pneg %p276
    $region42: #{simple_noise_res_up_conv_block.1} parent=5 // pred_check_branch
      %279 = sbr.rel (%p277) target = $region44
    $region43: #{simple_noise_res_up_conv_block.1} parent=5 // pred_region
      // Predicated region
      $region45: #{simple_noise_res_up_conv_block.1} parent=43 // pred_check
        %p280 = pneg %p35
      $region46: #{simple_noise_res_up_conv_block.1} parent=43 // pred_check_branch
        %282 = sbr.rel (%p280) target = $region48
      $region47: #{simple_noise_res_up_conv_block.1} parent=43 // pred_region
        %p283 = scmp.lt.s32.totalorder %s15, 1
        %s284 = scalar_select %p283, %s15, 1
        %s285 = smul.addr %s284, 8
        %s286 = smul.addr %s285, 4
        %s287 = scalar_lea.vmem %s0, %s286
      $region48: #{simple_noise_res_up_conv_block.1} parent=43 // pred_fallthru
        _
      // Predicated region
      $region49: #{simple_noise_res_up_conv_block.1} parent=43 // pred_check
        %p288 = pneg %p208
      $region50: #{simple_noise_res_up_conv_block.1} parent=43 // pred_check_branch
        %290 = sbr.rel (%p288) target = $region52
      $region51: #{simple_noise_res_up_conv_block.1} parent=43 // pred_region
        %p291 = scmp.lt.s32.totalorder %s15, 1
        %s292 = scalar_select %p291, %s15, 1
        %s293 = smul.addr %s292, 9
        %s294 = scalar_lea.vmem %s8, %s293
      $region52: #{simple_noise_res_up_conv_block.1} parent=43 // pred_fallthru
        _
    $region44: #{simple_noise_res_up_conv_block.1} parent=5 // pred_fallthru
      _
    %p295 = scmp.le.s32.totalorder 1, %s15
    %p296 = scmp.lt.s32.totalorder %s15, 3
    %p297 = pnand %p295, %p296
    %p298 = pneg %p297
    // Predicated region
    $region53: #{simple_noise_res_up_conv_block.1} parent=5 // pred_check
      _
    $region54: #{simple_noise_res_up_conv_block.1} parent=5 // pred_check_branch
      %300 = sbr.rel (%p297) target = $region56
    $region55: #{simple_noise_res_up_conv_block.1} parent=5 // pred_region
      %s301 = ssub.s32 %s15, 1
      %p302 = scmp.lt.s32.totalorder %s20, 1
      %s303 = scalar_select %p302, %s20, 1
      %s304 = smul.addr %s303, 8
      %s305 = smul.addr %s304, 4
      %s306 = scalar_lea.vmem %s0, %s305
      %p307 = pneg %p41
      %p308 = pneg %p38
      %p309 = pneg %p62
      %p310 = pneg %p59
      %p311 = pneg %p83
      %p312 = pneg %p80
      %p313 = pneg %p104
      %p314 = pneg %p101
      %p315 = pneg %p125
      %p316 = pneg %p122
      %p317 = pneg %p146
      %p318 = pneg %p143
      %p319 = pneg %p167
      %p320 = pneg %p164
      %p321 = pneg %p188
      %p322 = pneg %p185
      %p323 = scmp.lt.s32.totalorder %s20, 1
      %s324 = scalar_select %p323, %s20, 1
      %s325 = smul.addr %s324, 9
      %s326 = scalar_lea.vmem %s8, %s325
      %p327 = pneg %p214
      %p328 = pneg %p211
      %p329 = pneg %p240
      %p330 = pneg %p237
      %p331 = scmp.lt.s32.totalorder %s20, 1
      %s332 = scalar_select %p331, %s20, 1
      %s333 = smul.addr %s332, 8
      %s334 = smul.addr %s333, 8
      %s335 = scalar_lea.vmem %s9, %s334
      %p336 = scmp.lt.s32.totalorder %s20, 1
      %s337 = scalar_select %p336, %s20, 1
      %s338 = smul.addr %s337, 8
      %s339 = smul.addr %s338, 4
      %s340 = scalar_lea.vmem %s0, %s339
      %p341 = scmp.lt.s32.totalorder %s20, 1
      %s342 = scalar_select %p341, %s20, 1
      %s343 = smul.addr %s342, 9
      %s344 = scalar_lea.vmem %s8, %s343
      %p345 = scmp.lt.s32.totalorder %s20, 1
      %s346 = scalar_select %p345, %s20, 1
      %s347 = smul.addr %s346, 8
      %s348 = smul.addr %s347, 8
      %s349 = scalar_lea.vmem %s9, %s348
      %v351 = vld [vmem:[%s340] sm:$0xf]
      %v352 = vld [vmem:[%s340 + $0x4] sm:$0xf]
      %v353 = vld [vmem:[%s340 + $0x8] sm:$0xf]
      %v354 = vld [vmem:[%s340 + $0xc] sm:$0xf]
      %v355 = vld [vmem:[%s340 + $0x10] sm:$0xf]
      %v356 = vld [vmem:[%s340 + $0x14] sm:$0xf]
      %v357 = vld [vmem:[%s340 + $0x18] sm:$0xf]
      %v358 = vld [vmem:[%s340 + $0x1c] sm:$0xf]
      %v359 = vld [vmem:[%s1] sm:$0xf]
      %v360 = vld [vmem:[%s1 + $0x4] sm:$0xf]
      %v369 = vunpack.c.l.b16 %v351
      %v370 = vunpack.c.l.b16 %v352
      %v371 = vunpack.c.l.b16 %v353
      %v372 = vunpack.c.l.b16 %v354
      %v373 = vunpack.c.l.b16 %v355
      %v374 = vunpack.c.l.b16 %v356
      %v375 = vunpack.c.l.b16 %v357
      %v376 = vunpack.c.l.b16 %v358
      %v377 = vpack.c.b16 %v370, %v369
      %v378 = vpack.c.b16 %v372, %v371
      %v379 = vpack.c.b16 %v374, %v373
      %v380 = vpack.c.b16 %v376, %v375
      %v383 = vunpack.c.l.b16 %v359
      %v384 = vunpack.c.l.b16 %v360
      %v385 = vpack.c.b16 %v384, %v383
      %vm387 = vcmask 130048
      %v389 = vsel %vm387, %v377, 0
      %v392 = vsel %vm387, %v378, 0
      %v395 = vsel %vm387, %v379, 0
      %v398 = vsel %vm387, %v380, 0
      %400 = vmatprep.subr.bf16.mxu0 0
      %401 = vmatpush1.bf16.msra.mxu0 0
      %402 = vmatprep.subr.bf16.mxu0 0
      %403 = vmatpush1.bf16.msra.mxu0 0
      %404 = vmatprep.subr.bf16.mxu0 0
      %405 = vmatpush1.bf16.msra.mxu0 0
      %406 = vmatprep.subr.bf16.mxu0 0
      %407 = vmatpush1.bf16.msra.mxu0 0
      %408 = vmatprep.subr.bf16.mxu0 0
      %409 = vmatpush1.bf16.msra.mxu0 0
      %410 = vmatprep.subr.bf16.mxu0 0
      %411 = vmatpush1.bf16.msra.mxu0 0
      %412 = vmatprep.subr.bf16.mxu0 0
      %413 = vmatpush1.bf16.msra.mxu0 0
      %414 = vmatprep.subr.bf16.mxu0 0
      %415 = vmatpush1.bf16.msra.mxu0 %v385
      %416 = vmatprep.subr.bf16.mxu0 0
      %417 = vmatpush2.bf16.msra.mxu0 0
      %418 = vmatprep.subr.bf16.mxu0 0
      %419 = vmatpush2.bf16.msra.mxu0 0
      %420 = vmatprep.subr.bf16.mxu0 0
      %421 = vmatpush2.bf16.msra.mxu0 0
      %422 = vmatprep.subr.bf16.mxu0 0
      %423 = vmatpush2.bf16.msra.mxu0 0
      %424 = vmatprep.subr.bf16.mxu0 0
      %425 = vmatpush2.bf16.msra.mxu0 0
      %426 = vmatprep.subr.bf16.mxu0 0
      %427 = vmatpush2.bf16.msra.mxu0 0
      %428 = vmatprep.subr.bf16.mxu0 0
      %429 = vmatpush2.bf16.msra.mxu0 0
      %430 = vmatprep.subr.bf16.mxu0 0
      %431 = vmatpush2.bf16.msra.mxu0 0
      %432 = vmatprep.mubr.bf16.mxu0 0
      %433 = vmatmul.mubr.bf16.gmra.mxu0 %v389
      %v434 = vpop.f32.mrf.mxu0
      %v435 = vadd.f32 0.0, %v434
      %v436 = vpop.f32.mrf.mxu0
      %v437 = vpop.f32.mrf.mxu0
      %v438 = vadd.f32 0.0, %v437
      %v439 = vpop.f32.mrf.mxu0
      %440 = vmatprep.mubr.bf16.mxu0 0
      %441 = vmatmul.mubr.bf16.gmra.mxu0 %v392
      %v442 = vpop.f32.mrf.mxu0
      %v443 = vadd.f32 0.0, %v442
      %v444 = vpop.f32.mrf.mxu0
      %v445 = vpop.f32.mrf.mxu0
      %v446 = vadd.f32 0.0, %v445
      %v447 = vpop.f32.mrf.mxu0
      %448 = vmatprep.mubr.bf16.mxu0 0
      %449 = vmatmul.mubr.bf16.gmra.mxu0 %v395
      %v450 = vpop.f32.mrf.mxu0
      %v451 = vadd.f32 0.0, %v450
      %v452 = vpop.f32.mrf.mxu0
      %v453 = vpop.f32.mrf.mxu0
      %v454 = vadd.f32 0.0, %v453
      %v455 = vpop.f32.mrf.mxu0
      %456 = vmatprep.mubr.bf16.mxu0 0
      %457 = vmatmul.mubr.bf16.gmra.mxu0 %v398
      %v458 = vpop.f32.mrf.mxu0
      %v459 = vadd.f32 0.0, %v458
      %v460 = vpop.f32.mrf.mxu0
      %v461 = vpop.f32.mrf.mxu0
      %v462 = vadd.f32 0.0, %v461
      %v463 = vpop.f32.mrf.mxu0
      %464 = vdwg.mxu0
      %465 = vst [vmem:[#allocation2] sm:$0xff] 0
      %466 = vst [vmem:[#allocation2 + $0x8] sm:$0xff] 0
      %vm467 = vcmask 1041408
      %vm468 = vcmask 879618
      %vm469 = vmor %vm468, %vm467
      %470 = vst.msk [vmem:[#allocation2 + $0x10] sm:$0xf] %vm469, 0
      %v471 = vmul.f32 %v435, 0.0
      %v473 = vrot.slane %v471, 4
      %v475 = vadd.f32 %v435, %v473
      %v476 = vpack.c.bf16 %v475, %v475
      %v479 = vunpack.c.l.s4 1983009808
      %v480 = vunpack.c.0.s8 %v479
      %v481 = vlaneseq
      %v482 = vshrl.u32 %v481, 7
      %v483 = vsub.s32 %v480, %v482
      %v484 = vrot.slane %v476, %v483
      %485 = vrot.lane.b32.xlu0 %v484, 36
      %v486 = vpop.permute.xlu0 %485
      %vm488 = vcmask 582944
      %489 = vst.msk [vmem:[#allocation2] sm:$0x3] %vm488, %v486
      %v490 = vmul.f32 %v435, 0.516129
      %v491 = vmul.f32 %v435, 0.48387095
      %v493 = vrot.slane %v491, 4
      %v495 = vadd.f32 %v490, %v493
      %v496 = vpack.c.bf16 %v495, %v495
      %v499 = vunpack.c.l.s4 1983009808
      %v500 = vunpack.c.0.s8 %v499
      %v501 = vlaneseq
      %v502 = vshrl.u32 %v501, 7
      %v503 = vsub.s32 %v500, %v502
      %v504 = vrot.slane %v496, %v503
      %505 = vrot.lane.b32.xlu0 %v504, 72
      %v506 = vpop.permute.xlu0 %505
      %vm508 = vcmask 878144
      %509 = vst.msk [vmem:[#allocation2] sm:$0x3] %vm508, %v506
      %v510 = vmul.f32 %v435, 0.032258064
      %v511 = vmul.f32 %v435, 0.9677419
      %v513 = vrot.slane %v511, 4
      %v515 = vadd.f32 %v510, %v513
      %v516 = vpack.c.bf16 %v515, %v515
      %v519 = vunpack.c.l.s4 1983009808
      %v520 = vunpack.c.0.s8 %v519
      %v521 = vlaneseq
      %v522 = vshrl.u32 %v521, 7
      %v523 = vsub.s32 %v520, %v522
      %v524 = vrot.slane %v516, %v523
      %525 = vrot.lane.b32.xlu0 %v524, 108
      %v526 = vpop.permute.xlu0 %525
      %v527 = vrot.slane %v526, 6
      %vm528 = vcmask 883712
      %v529 = vsel %vm528, %v527, %v526
      %vm531 = vcmask 1042272
      %vm532 = vcmask 125954
      %vm533 = vmor %vm532, %vm531
      %534 = vst.msk [vmem:[#allocation2] sm:$0xf] %vm533, %v529
      %v535 = vmul.f32 %v435, 0.5483871
      %v536 = vmul.f32 %v438, 0.4516129
      %v538 = vrot.slane %v536, 4
      %v540 = vadd.f32 %v535, %v538
      %v541 = vpack.c.bf16 %v540, %v540
      %v544 = vunpack.c.l.s4 1983009808
      %v545 = vunpack.c.0.s8 %v544
      %v546 = vlaneseq
      %v547 = vshrl.u32 %v546, 7
      %v548 = vsub.s32 %v545, %v547
      %v549 = vrot.slane %v541, %v548
      %v550 = vcombine.high %v549, %v549
      %551 = vrot.lane.b32.xlu0 %v550, 16
      %v552 = vpop.permute.xlu0 %551
      %vm554 = vcmask 418944
      %555 = vst.msk [vmem:[#allocation2 + $0x2] sm:$0x3] %vm554, %v552
      %v556 = vmul.f32 %v435, 0.06451613
      %v557 = vmul.f32 %v438, 0.9354839
      %v559 = vrot.slane %v557, 4
      %v561 = vadd.f32 %v556, %v559
      %v562 = vpack.c.bf16 %v561, %v561
      %v565 = vunpack.c.l.s4 1983009808
      %v566 = vunpack.c.0.s8 %v565
      %v567 = vlaneseq
      %v568 = vshrl.u32 %v567, 7
      %v569 = vsub.s32 %v566, %v568
      %v570 = vrot.slane %v562, %v569
      %v571 = vcombine.high %v570, %v570
      %572 = vrot.lane.b32.xlu0 %v571, 52
      %v573 = vpop.permute.xlu0 %572
      %vm575 = vcmask 714144
      %576 = vst.msk [vmem:[#allocation2 + $0x2] sm:$0x3] %vm575, %v573
      %v577 = vmul.f32 %v438, 0.58064514
      %v578 = vmul.f32 %v438, 0.41935483
      %v580 = vrot.slane %v578, 4
      %v582 = vadd.f32 %v577, %v580
      %v583 = vpack.c.bf16 %v582, %v582
      %v586 = vunpack.c.l.s4 1983009808
      %v587 = vunpack.c.0.s8 %v586
      %v588 = vlaneseq
      %v589 = vshrl.u32 %v588, 7
      %v590 = vsub.s32 %v587, %v589
      %v591 = vrot.slane %v583, %v590
      %592 = vrot.lane.b32.xlu0 %v591, 88
      %v593 = vpop.permute.xlu0 %592
      %vm595 = vcmask 1009344
      %596 = vst.msk [vmem:[#allocation2 + $0x2] sm:$0x3] %vm595, %v593
      %v597 = vmul.f32 %v438, 0.09677419
      %v598 = vmul.f32 %v438, 0.9032258
      %v600 = vrot.slane %v598, 4
      %v602 = vadd.f32 %v597, %v600
      %v603 = vpack.c.bf16 %v602, %v602
      %v606 = vunpack.c.l.s4 1983009808
      %v607 = vunpack.c.0.s8 %v606
      %v608 = vlaneseq
      %v609 = vshrl.u32 %v608, 7
      %v610 = vsub.s32 %v607, %v609
      %v611 = vrot.slane %v603, %v610
      %612 = vrot.lane.b32.xlu0 %v611, 124
      %v613 = vpop.permute.xlu0 %612
      %v614 = vrot.slane %v613, 6
      %vm615 = vcmask 1014784
      %v616 = vsel %vm615, %v614, %v613
      %vm618 = vcmask 1042400
      %vm619 = vcmask 257026
      %vm620 = vmor %vm619, %vm618
      %621 = vst.msk [vmem:[#allocation2 + $0x2] sm:$0xf] %vm620, %v616
      %v622 = vmul.f32 %v438, 0.61290324
      %v623 = vmul.f32 %v443, 0.38709676
      %v625 = vrot.slane %v623, 4
      %v627 = vadd.f32 %v622, %v625
      %v628 = vpack.c.bf16 %v627, %v627
      %v631 = vunpack.c.l.s4 1983009808
      %v632 = vunpack.c.0.s8 %v631
      %v633 = vlaneseq
      %v634 = vshrl.u32 %v633, 7
      %v635 = vsub.s32 %v632, %v634
      %v636 = vrot.slane %v628, %v635
      %v637 = vcombine.high %v636, %v636
      %638 = vrot.lane.b32.xlu0 %v637, 32
      %v639 = vpop.permute.xlu0 %638
      %vm641 = vcmask 550144
      %642 = vst.msk [vmem:[#allocation2 + $0x4] sm:$0x3] %vm641, %v639
      %v643 = vmul.f32 %v438, 0.12903225
      %v644 = vmul.f32 %v443, 0.87096775
      %v646 = vrot.slane %v644, 4
      %v648 = vadd.f32 %v643, %v646
      %v649 = vpack.c.bf16 %v648, %v648
      %v652 = vunpack.c.l.s4 1983009808
      %v653 = vunpack.c.0.s8 %v652
      %v654 = vlaneseq
      %v655 = vshrl.u32 %v654, 7
      %v656 = vsub.s32 %v653, %v655
      %v657 = vrot.slane %v649, %v656
      %v658 = vcombine.high %v657, %v657
      %659 = vrot.lane.b32.xlu0 %v658, 68
      %v660 = vpop.permute.xlu0 %659
      %vm662 = vcmask 845344
      %663 = vst.msk [vmem:[#allocation2 + $0x4] sm:$0x3] %vm662, %v660
      %v664 = vmul.f32 %v443, 0.6451613
      %v665 = vmul.f32 %v443, 0.3548387
      %v667 = vrot.slane %v665, 4
      %v669 = vadd.f32 %v664, %v667
      %v670 = vpack.c.bf16 %v669, %v669
      %v673 = vunpack.c.l.s4 1983009808
      %v674 = vunpack.c.0.s8 %v673
      %v675 = vlaneseq
      %v676 = vshrl.u32 %v675, 7
      %v677 = vsub.s32 %v674, %v676
      %v678 = vrot.slane %v670, %v677
      %679 = vrot.lane.b32.xlu0 %v678, 104
      %v680 = vpop.permute.xlu0 %679
      %v681 = vrot.slane %v680, 6
      %vm682 = vcmask 850944
      %v683 = vsel %vm682, %v681, %v680
      %vm685 = vcmask 1042240
      %vm686 = vcmask 93186
      %vm687 = vmor %vm686, %vm685
      %688 = vst.msk [vmem:[#allocation2 + $0x4] sm:$0xf] %vm687, %v683
      %v689 = vmul.f32 %v443, 0.16129032
      %v690 = vmul.f32 %v443, 0.83870965
      %v692 = vrot.slane %v690, 4
      %v694 = vadd.f32 %v689, %v692
      %v695 = vpack.c.bf16 %v694, %v694
      %v698 = vunpack.c.l.s4 1983009808
      %v699 = vunpack.c.0.s8 %v698
      %v700 = vlaneseq
      %v701 = vshrl.u32 %v700, 7
      %v702 = vsub.s32 %v699, %v701
      %v703 = vrot.slane %v695, %v702
      %704 = vrot.lane.b32.xlu0 %v703, 12
      %v705 = vpop.permute.xlu0 %704
      %vm707 = vcmask 386144
      %708 = vst.msk [vmem:[#allocation2 + $0x6] sm:$0x3] %vm707, %v705
      %v709 = vmul.f32 %v443, 0.67741936
      %v710 = vmul.f32 %v446, 0.32258064
      %v712 = vrot.slane %v710, 4
      %v714 = vadd.f32 %v709, %v712
      %v715 = vpack.c.bf16 %v714, %v714
      %v718 = vunpack.c.l.s4 1983009808
      %v719 = vunpack.c.0.s8 %v718
      %v720 = vlaneseq
      %v721 = vshrl.u32 %v720, 7
      %v722 = vsub.s32 %v719, %v721
      %v723 = vrot.slane %v715, %v722
      %v724 = vcombine.high %v723, %v723
      %725 = vrot.lane.b32.xlu0 %v724, 48
      %v726 = vpop.permute.xlu0 %725
      %vm728 = vcmask 681344
      %729 = vst.msk [vmem:[#allocation2 + $0x6] sm:$0x3] %vm728, %v726
      %v730 = vmul.f32 %v443, 0.19354838
      %v731 = vmul.f32 %v446, 0.8064516
      %v733 = vrot.slane %v731, 4
      %v735 = vadd.f32 %v730, %v733
      %v736 = vpack.c.bf16 %v735, %v735
      %v739 = vunpack.c.l.s4 1983009808
      %v740 = vunpack.c.0.s8 %v739
      %v741 = vlaneseq
      %v742 = vshrl.u32 %v741, 7
      %v743 = vsub.s32 %v740, %v742
      %v744 = vrot.slane %v736, %v743
      %v745 = vcombine.high %v744, %v744
      %746 = vrot.lane.b32.xlu0 %v745, 84
      %v747 = vpop.permute.xlu0 %746
      %vm749 = vcmask 976544
      %750 = vst.msk [vmem:[#allocation2 + $0x6] sm:$0x3] %vm749, %v747
      %v751 = vmul.f32 %v446, 0.7096774
      %v752 = vmul.f32 %v446, 0.29032257
      %v754 = vrot.slane %v752, 4
      %v756 = vadd.f32 %v751, %v754
      %v757 = vpack.c.bf16 %v756, %v756
      %v760 = vunpack.c.l.s4 1983009808
      %v761 = vunpack.c.0.s8 %v760
      %v762 = vlaneseq
      %v763 = vshrl.u32 %v762, 7
      %v764 = vsub.s32 %v761, %v763
      %v765 = vrot.slane %v757, %v764
      %766 = vrot.lane.b32.xlu0 %v765, 120
      %v767 = vpop.permute.xlu0 %766
      %v768 = vrot.slane %v767, 6
      %vm769 = vcmask 982016
      %v770 = vsel %vm769, %v768, %v767
      %vm772 = vcmask 1042368
      %vm773 = vcmask 224258
      %vm774 = vmor %vm773, %vm772
      %775 = vst.msk [vmem:[#allocation2 + $0x6] sm:$0xf] %vm774, %v770
      %v776 = vmul.f32 %v446, 0.22580644
      %v777 = vmul.f32 %v446, 0.7741935
      %v779 = vrot.slane %v777, 4
      %v781 = vadd.f32 %v776, %v779
      %v782 = vpack.c.bf16 %v781, %v781
      %v785 = vunpack.c.l.s4 1983009808
      %v786 = vunpack.c.0.s8 %v785
      %v787 = vlaneseq
      %v788 = vshrl.u32 %v787, 7
      %v789 = vsub.s32 %v786, %v788
      %v790 = vrot.slane %v782, %v789
      %791 = vrot.lane.b32.xlu0 %v790, 28
      %v792 = vpop.permute.xlu0 %791
      %vm794 = vcmask 517344
      %795 = vst.msk [vmem:[#allocation2 + $0x8] sm:$0x3] %vm794, %v792
      %v796 = vmul.f32 %v446, 0.7419355
      %v797 = vmul.f32 %v451, 0.2580645
      %v799 = vrot.slane %v797, 4
      %v801 = vadd.f32 %v796, %v799
      %v802 = vpack.c.bf16 %v801, %v801
      %v805 = vunpack.c.l.s4 1983009808
      %v806 = vunpack.c.0.s8 %v805
      %v807 = vlaneseq
      %v808 = vshrl.u32 %v807, 7
      %v809 = vsub.s32 %v806, %v808
      %v810 = vrot.slane %v802, %v809
      %v811 = vcombine.high %v810, %v810
      %812 = vrot.lane.b32.xlu0 %v811, 64
      %v813 = vpop.permute.xlu0 %812
      %vm815 = vcmask 812544
      %816 = vst.msk [vmem:[#allocation2 + $0x8] sm:$0x3] %vm815, %v813
      %v817 = vmul.f32 %v446, 0.2580645
      %v818 = vmul.f32 %v451, 0.7419355
      %v820 = vrot.slane %v818, 4
      %v822 = vadd.f32 %v817, %v820
      %v823 = vpack.c.bf16 %v822, %v822
      %v826 = vunpack.c.l.s4 1983009808
      %v827 = vunpack.c.0.s8 %v826
      %v828 = vlaneseq
      %v829 = vshrl.u32 %v828, 7
      %v830 = vsub.s32 %v827, %v829
      %v831 = vrot.slane %v823, %v830
      %v832 = vcombine.high %v831, %v831
      %833 = vrot.lane.b32.xlu0 %v832, 100
      %v834 = vpop.permute.xlu0 %833
      %v835 = vrot.slane %v834, 6
      %vm836 = vcmask 818176
      %v837 = vsel %vm836, %v835, %v834
      %vm839 = vcmask 1042208
      %vm840 = vcmask 60418
      %vm841 = vmor %vm840, %vm839
      %842 = vst.msk [vmem:[#allocation2 + $0x8] sm:$0xf] %vm841, %v837
      %v843 = vmul.f32 %v451, 0.7741935
      %v844 = vmul.f32 %v451, 0.22580644
      %v846 = vrot.slane %v844, 4
      %v848 = vadd.f32 %v843, %v846
      %v849 = vpack.c.bf16 %v848, %v848
      %v852 = vunpack.c.l.s4 1983009808
      %v853 = vunpack.c.0.s8 %v852
      %v854 = vlaneseq
      %v855 = vshrl.u32 %v854, 7
      %v856 = vsub.s32 %v853, %v855
      %v857 = vrot.slane %v849, %v856
      %858 = vrot.lane.b32.xlu0 %v857, 8
      %v859 = vpop.permute.xlu0 %858
      %vm861 = vcmask 353344
      %862 = vst.msk [vmem:[#allocation2 + $0xa] sm:$0x3] %vm861, %v859
      %v863 = vmul.f32 %v451, 0.29032257
      %v864 = vmul.f32 %v451, 0.7096774
      %v866 = vrot.slane %v864, 4
      %v868 = vadd.f32 %v863, %v866
      %v869 = vpack.c.bf16 %v868, %v868
      %v872 = vunpack.c.l.s4 1983009808
      %v873 = vunpack.c.0.s8 %v872
      %v874 = vlaneseq
      %v875 = vshrl.u32 %v874, 7
      %v876 = vsub.s32 %v873, %v875
      %v877 = vrot.slane %v869, %v876
      %878 = vrot.lane.b32.xlu0 %v877, 44
      %v879 = vpop.permute.xlu0 %878
      %vm881 = vcmask 648544
      %882 = vst.msk [vmem:[#allocation2 + $0xa] sm:$0x3] %vm881, %v879
      %v883 = vmul.f32 %v451, 0.8064516
      %v884 = vmul.f32 %v454, 0.19354838
      %v886 = vrot.slane %v884, 4
      %v888 = vadd.f32 %v883, %v886
      %v889 = vpack.c.bf16 %v888, %v888
      %v892 = vunpack.c.l.s4 1983009808
      %v893 = vunpack.c.0.s8 %v892
      %v894 = vlaneseq
      %v895 = vshrl.u32 %v894, 7
      %v896 = vsub.s32 %v893, %v895
      %v897 = vrot.slane %v889, %v896
      %v898 = vcombine.high %v897, %v897
      %899 = vrot.lane.b32.xlu0 %v898, 80
      %v900 = vpop.permute.xlu0 %899
      %vm902 = vcmask 943744
      %903 = vst.msk [vmem:[#allocation2 + $0xa] sm:$0x3] %vm902, %v900
      %v904 = vmul.f32 %v451, 0.32258064
      %v905 = vmul.f32 %v454, 0.67741936
      %v907 = vrot.slane %v905, 4
      %v909 = vadd.f32 %v904, %v907
      %v910 = vpack.c.bf16 %v909, %v909
      %v913 = vunpack.c.l.s4 1983009808
      %v914 = vunpack.c.0.s8 %v913
      %v915 = vlaneseq
      %v916 = vshrl.u32 %v915, 7
      %v917 = vsub.s32 %v914, %v916
      %v918 = vrot.slane %v910, %v917
      %v919 = vcombine.high %v918, %v918
      %920 = vrot.lane.b32.xlu0 %v919, 116
      %v921 = vpop.permute.xlu0 %920
      %v922 = vrot.slane %v921, 6
      %vm923 = vcmask 949248
      %v924 = vsel %vm923, %v922, %v921
      %vm926 = vcmask 1042336
      %vm927 = vcmask 191490
      %vm928 = vmor %vm927, %vm926
      %929 = vst.msk [vmem:[#allocation2 + $0xa] sm:$0xf] %vm928, %v924
      %v930 = vmul.f32 %v454, 0.83870965
      %v931 = vmul.f32 %v454, 0.16129032
      %v933 = vrot.slane %v931, 4
      %v935 = vadd.f32 %v930, %v933
      %v936 = vpack.c.bf16 %v935, %v935
      %v939 = vunpack.c.l.s4 1983009808
      %v940 = vunpack.c.0.s8 %v939
      %v941 = vlaneseq
      %v942 = vshrl.u32 %v941, 7
      %v943 = vsub.s32 %v940, %v942
      %v944 = vrot.slane %v936, %v943
      %945 = vrot.lane.b32.xlu0 %v944, 24
      %v946 = vpop.permute.xlu0 %945
      %vm948 = vcmask 484544
      %949 = vst.msk [vmem:[#allocation2 + $0xc] sm:$0x3] %vm948, %v946
      %v950 = vmul.f32 %v454, 0.3548387
      %v951 = vmul.f32 %v454, 0.6451613
      %v953 = vrot.slane %v951, 4
      %v955 = vadd.f32 %v950, %v953
      %v956 = vpack.c.bf16 %v955, %v955
      %v959 = vunpack.c.l.s4 1983009808
      %v960 = vunpack.c.0.s8 %v959
      %v961 = vlaneseq
      %v962 = vshrl.u32 %v961, 7
      %v963 = vsub.s32 %v960, %v962
      %v964 = vrot.slane %v956, %v963
      %965 = vrot.lane.b32.xlu0 %v964, 60
      %v966 = vpop.permute.xlu0 %965
      %vm968 = vcmask 779744
      %969 = vst.msk [vmem:[#allocation2 + $0xc] sm:$0x3] %vm968, %v966
      %v970 = vmul.f32 %v454, 0.87096775
      %v971 = vmul.f32 %v459, 0.12903225
      %v973 = vrot.slane %v971, 4
      %v975 = vadd.f32 %v970, %v973
      %v976 = vpack.c.bf16 %v975, %v975
      %v979 = vunpack.c.l.s4 1983009808
      %v980 = vunpack.c.0.s8 %v979
      %v981 = vlaneseq
      %v982 = vshrl.u32 %v981, 7
      %v983 = vsub.s32 %v980, %v982
      %v984 = vrot.slane %v976, %v983
      %v985 = vcombine.high %v984, %v984
      %986 = vrot.lane.b32.xlu0 %v985, 96
      %v987 = vpop.permute.xlu0 %986
      %v988 = vrot.slane %v987, 6
      %vm989 = vcmask 785408
      %v990 = vsel %vm989, %v988, %v987
      %vm992 = vcmask 1042176
      %vm993 = vcmask 27650
      %vm994 = vmor %vm993, %vm992
      %995 = vst.msk [vmem:[#allocation2 + $0xc] sm:$0xf] %vm994, %v990
      %v996 = vmul.f32 %v454, 0.38709676
      %v997 = vmul.f32 %v459, 0.61290324
      %v999 = vrot.slane %v997, 4
      %v1001 = vadd.f32 %v996, %v999
      %v1002 = vpack.c.bf16 %v1001, %v1001
      %v1005 = vunpack.c.l.s4 1983009808
      %v1006 = vunpack.c.0.s8 %v1005
      %v1007 = vlaneseq
      %v1008 = vshrl.u32 %v1007, 7
      %v1009 = vsub.s32 %v1006, %v1008
      %v1010 = vrot.slane %v1002, %v1009
      %v1011 = vcombine.high %v1010, %v1010
      %1012 = vrot.lane.b32.xlu0 %v1011, 4
      %v1013 = vpop.permute.xlu0 %1012
      %vm1015 = vcmask 320544
      %1016 = vst.msk [vmem:[#allocation2 + $0xe] sm:$0x3] %vm1015, %v1013
      %v1017 = vmul.f32 %v459, 0.9032258
      %v1018 = vmul.f32 %v459, 0.09677419
      %v1020 = vrot.slane %v1018, 4
      %v1022 = vadd.f32 %v1017, %v1020
      %v1023 = vpack.c.bf16 %v1022, %v1022
      %v1026 = vunpack.c.l.s4 1983009808
      %v1027 = vunpack.c.0.s8 %v1026
      %v1028 = vlaneseq
      %v1029 = vshrl.u32 %v1028, 7
      %v1030 = vsub.s32 %v1027, %v1029
      %v1031 = vrot.slane %v1023, %v1030
      %1032 = vrot.lane.b32.xlu0 %v1031, 40
      %v1033 = vpop.permute.xlu0 %1032
      %vm1035 = vcmask 615744
      %1036 = vst.msk [vmem:[#allocation2 + $0xe] sm:$0x3] %vm1035, %v1033
      %v1037 = vmul.f32 %v459, 0.41935483
      %v1038 = vmul.f32 %v459, 0.58064514
      %v1040 = vrot.slane %v1038, 4
      %v1042 = vadd.f32 %v1037, %v1040
      %v1043 = vpack.c.bf16 %v1042, %v1042
      %v1046 = vunpack.c.l.s4 1983009808
      %v1047 = vunpack.c.0.s8 %v1046
      %v1048 = vlaneseq
      %v1049 = vshrl.u32 %v1048, 7
      %v1050 = vsub.s32 %v1047, %v1049
      %v1051 = vrot.slane %v1043, %v1050
      %1052 = vrot.lane.b32.xlu0 %v1051, 76
      %v1053 = vpop.permute.xlu0 %1052
      %vm1055 = vcmask 910944
      %1056 = vst.msk [vmem:[#allocation2 + $0xe] sm:$0x3] %vm1055, %v1053
      %v1057 = vmul.f32 %v459, 0.9354839
      %v1058 = vmul.f32 %v462, 0.06451613
      %v1060 = vrot.slane %v1058, 4
      %v1062 = vadd.f32 %v1057, %v1060
      %v1063 = vpack.c.bf16 %v1062, %v1062
      %v1066 = vunpack.c.l.s4 1983009808
      %v1067 = vunpack.c.0.s8 %v1066
      %v1068 = vlaneseq
      %v1069 = vshrl.u32 %v1068, 7
      %v1070 = vsub.s32 %v1067, %v1069
      %v1071 = vrot.slane %v1063, %v1070
      %v1072 = vcombine.high %v1071, %v1071
      %1073 = vrot.lane.b32.xlu0 %v1072, 112
      %v1074 = vpop.permute.xlu0 %1073
      %v1075 = vrot.slane %v1074, 6
      %vm1076 = vcmask 916480
      %v1077 = vsel %vm1076, %v1075, %v1074
      %vm1079 = vcmask 1042304
      %vm1080 = vcmask 158722
      %vm1081 = vmor %vm1080, %vm1079
      %1082 = vst.msk [vmem:[#allocation2 + $0xe] sm:$0xf] %vm1081, %v1077
      %v1083 = vmul.f32 %v459, 0.4516129
      %v1084 = vmul.f32 %v462, 0.5483871
      %v1086 = vrot.slane %v1084, 4
      %v1088 = vadd.f32 %v1083, %v1086
      %v1089 = vpack.c.bf16 %v1088, %v1088
      %v1092 = vunpack.c.l.s4 1983009808
      %v1093 = vunpack.c.0.s8 %v1092
      %v1094 = vlaneseq
      %v1095 = vshrl.u32 %v1094, 7
      %v1096 = vsub.s32 %v1093, %v1095
      %v1097 = vrot.slane %v1089, %v1096
      %v1098 = vcombine.high %v1097, %v1097
      %1099 = vrot.lane.b32.xlu0 %v1098, 20
      %v1100 = vpop.permute.xlu0 %1099
      %vm1102 = vcmask 451744
      %1103 = vst.msk [vmem:[#allocation2 + $0x10] sm:$0x3] %vm1102, %v1100
      %v1104 = vmul.f32 %v462, 0.9677419
      %v1105 = vmul.f32 %v462, 0.032258064
      %v1107 = vrot.slane %v1105, 4
      %v1109 = vadd.f32 %v1104, %v1107
      %v1110 = vpack.c.bf16 %v1109, %v1109
      %v1113 = vunpack.c.l.s4 1983009808
      %v1114 = vunpack.c.0.s8 %v1113
      %v1115 = vlaneseq
      %v1116 = vshrl.u32 %v1115, 7
      %v1117 = vsub.s32 %v1114, %v1116
      %v1118 = vrot.slane %v1110, %v1117
      %1119 = vrot.lane.b32.xlu0 %v1118, 56
      %v1120 = vpop.permute.xlu0 %1119
      %vm1122 = vcmask 746944
      %1123 = vst.msk [vmem:[#allocation2 + $0x10] sm:$0x3] %vm1122, %v1120
      %v1124 = vmul.f32 %v462, 0.48387095
      %v1125 = vmul.f32 %v462, 0.516129
      %v1127 = vrot.slane %v1125, 4
      %v1129 = vadd.f32 %v1124, %v1127
      %v1130 = vpack.c.bf16 %v1129, %v1129
      %v1133 = vunpack.c.l.s4 1983009808
      %v1134 = vunpack.c.0.s8 %v1133
      %v1135 = vlaneseq
      %v1136 = vshrl.u32 %v1135, 7
      %v1137 = vsub.s32 %v1134, %v1136
      %v1138 = vrot.slane %v1130, %v1137
      %1139 = vrot.lane.b32.xlu0 %v1138, 92
      %v1140 = vpop.permute.xlu0 %1139
      %vm1142 = vcmask 1042144
      %1143 = vst.msk [vmem:[#allocation2 + $0x10] sm:$0x3] %vm1142, %v1140
      %v1144 = vmul.f32 %v462, 0.0
      %v1146 = vrot.slane %v462, 4
      %v1148 = vadd.f32 %v1144, %v1146
      %v1149 = vpack.c.bf16 %v1148, %v1148
      %vm1150 = vcmask 287744
      %1151 = vst.msk [vmem:[#allocation2 + $0x12] sm:$0x3] %vm1150, %v1149
      %v1152 = vld [vmem:[#allocation2] sm:$0xff]
      %v1153 = vld [vmem:[#allocation2 + $0x8] sm:$0xff]
      %v1154 = vld [vmem:[#allocation2 + $0x10] sm:$0x3]
      %v1155 = vld [vmem:[#allocation2 + $0x10] sm:$0xf]
      %v1159 = vcombine.high %v1152, %v1152
      %v1161 = vunpack.c.l.s4 1983009808
      %v1162 = vunpack.c.0.s8 %v1161
      %v1163 = vlaneseq
      %v1164 = vshrl.u32 %v1163, 7
      %v1165 = vsub.s32 %v1162, %v1164
      %v1166 = vrot.slane %v1152, %v1165
      %v1168 = vunpack.c.l.s4 1983009808
      %v1169 = vunpack.c.0.s8 %v1168
      %v1170 = vlaneseq
      %v1171 = vshrl.u32 %v1170, 7
      %v1172 = vsub.s32 %v1169, %v1171
      %v1173 = vrot.slane %v1159, %v1172
      %v1174 = vcombine.high %v1166, %v1166
      %v1175 = vcombine.high %v1173, %v1173
      %v1176 = vcombine.high %v1153, %v1153
      %v1178 = vunpack.c.l.s4 1983009808
      %v1179 = vunpack.c.0.s8 %v1178
      %v1180 = vlaneseq
      %v1181 = vshrl.u32 %v1180, 7
      %v1182 = vsub.s32 %v1179, %v1181
      %v1183 = vrot.slane %v1153, %v1182
      %v1185 = vunpack.c.l.s4 1983009808
      %v1186 = vunpack.c.0.s8 %v1185
      %v1187 = vlaneseq
      %v1188 = vshrl.u32 %v1187, 7
      %v1189 = vsub.s32 %v1186, %v1188
      %v1190 = vrot.slane %v1176, %v1189
      %v1191 = vcombine.high %v1183, %v1183
      %v1192 = vcombine.high %v1190, %v1190
      %v1194 = vunpack.c.l.s4 1983009808
      %v1195 = vunpack.c.0.s8 %v1194
      %v1196 = vlaneseq
      %v1197 = vshrl.u32 %v1196, 7
      %v1198 = vsub.s32 %v1195, %v1197
      %v1199 = vrot.slane %v1154, %v1198
      %v1201 = vcombine.low %v1152, %v1152
      %v1203 = vunpack.c.l.s4 1983009808
      %v1204 = vunpack.c.0.s8 %v1203
      %v1205 = vlaneseq
      %v1206 = vshrl.u32 %v1205, 7
      %v1207 = vsub.s32 %v1204, %v1206
      %v1208 = vrot.slane %v1201, %v1207
      %v1209 = vcombine.high %v1208, %v1208
      %v1210 = vcombine.low %v1153, %v1153
      %v1212 = vunpack.c.l.s4 1983009808
      %v1213 = vunpack.c.0.s8 %v1212
      %v1214 = vlaneseq
      %v1215 = vshrl.u32 %v1214, 7
      %v1216 = vsub.s32 %v1213, %v1215
      %v1217 = vrot.slane %v1210, %v1216
      %v1218 = vcombine.high %v1217, %v1217
      %v1219 = vcombine.low %v1155, %v1155
      %v1221 = vunpack.c.l.s4 1983009808
      %v1222 = vunpack.c.0.s8 %v1221
      %v1223 = vlaneseq
      %v1224 = vshrl.u32 %v1223, 7
      %v1225 = vsub.s32 %v1222, %v1224
      %v1226 = vrot.slane %v1219, %v1225
      %v1228 = vunpack.c.l.s4 1983009808
      %v1229 = vunpack.c.0.s8 %v1228
      %v1230 = vlaneseq
      %v1231 = vshrl.u32 %v1230, 7
      %v1232 = vsub.s32 %v1229, %v1231
      %v1233 = vrot.slane %v1155, %v1232
      %v1234 = vcombine.high %v1226, %v1226
      %1235 = vrot.lane.b32.xlu0 %v1208, 127
      %v1236 = vpop.permute.xlu0 %1235
      %1237 = vrot.lane.b32.xlu0 %v1209, 127
      %v1238 = vpop.permute.xlu0 %1237
      %1239 = vrot.lane.b32.xlu0 %v1166, 127
      %v1240 = vpop.permute.xlu0 %1239
      %1241 = vrot.lane.b32.xlu0 %v1174, 127
      %v1242 = vpop.permute.xlu0 %1241
      %1243 = vrot.lane.b32.xlu0 %v1217, 127
      %v1244 = vpop.permute.xlu0 %1243
      %1245 = vrot.lane.b32.xlu0 %v1218, 127
      %v1246 = vpop.permute.xlu0 %1245
      %1247 = vrot.lane.b32.xlu0 %v1183, 127
      %v1248 = vpop.permute.xlu0 %1247
      %1249 = vrot.lane.b32.xlu0 %v1191, 127
      %v1250 = vpop.permute.xlu0 %1249
      %1251 = vrot.lane.b32.xlu0 %v1226, 127
      %v1252 = vpop.permute.xlu0 %1251
      %1253 = vrot.lane.b32.xlu0 %v1234, 127
      %v1254 = vpop.permute.xlu0 %1253
      %vm1255 = vcmask 1039360
      %v1256 = vsel %vm1255, %v1236, %v1238
      %v1257 = vsel %vm1255, %v1238, %v1240
      %v1258 = vsel %vm1255, %v1240, %v1242
      %v1259 = vsel %vm1255, %v1242, %v1244
      %v1260 = vsel %vm1255, %v1244, %v1246
      %v1261 = vsel %vm1255, %v1246, %v1248
      %v1262 = vsel %vm1255, %v1248, %v1250
      %v1263 = vsel %vm1255, %v1250, %v1252
      %v1264 = vsel %vm1255, %v1252, %v1254
      %v1265 = vcombine.low %v1166, %v1166
      %v1266 = vcombine.low %v1173, %v1173
      %v1267 = vcombine.low %v1183, %v1183
      %v1268 = vcombine.low %v1190, %v1190
      %v1269 = vcombine.low %v1233, %v1233
      %1270 = vrot.lane.b32.xlu0 %v1265, 126
      %v1271 = vpop.permute.xlu0 %1270
      %1272 = vrot.lane.b32.xlu0 %v1166, 126
      %v1273 = vpop.permute.xlu0 %1272
      %1274 = vrot.lane.b32.xlu0 %v1266, 126
      %v1275 = vpop.permute.xlu0 %1274
      %1276 = vrot.lane.b32.xlu0 %v1173, 126
      %v1277 = vpop.permute.xlu0 %1276
      %1278 = vrot.lane.b32.xlu0 %v1267, 126
      %v1279 = vpop.permute.xlu0 %1278
      %1280 = vrot.lane.b32.xlu0 %v1183, 126
      %v1281 = vpop.permute.xlu0 %1280
      %1282 = vrot.lane.b32.xlu0 %v1268, 126
      %v1283 = vpop.permute.xlu0 %1282
      %1284 = vrot.lane.b32.xlu0 %v1190, 126
      %v1285 = vpop.permute.xlu0 %1284
      %1286 = vrot.lane.b32.xlu0 %v1269, 126
      %v1287 = vpop.permute.xlu0 %1286
      %1288 = vrot.lane.b32.xlu0 %v1233, 126
      %v1289 = vpop.permute.xlu0 %1288
      %vm1290 = vcmask 1031168
      %v1291 = vsel %vm1290, %v1271, %v1273
      %v1292 = vsel %vm1290, %v1273, %v1275
      %v1293 = vsel %vm1290, %v1275, %v1277
      %v1294 = vsel %vm1290, %v1277, %v1279
      %v1295 = vsel %vm1290, %v1279, %v1281
      %v1296 = vsel %vm1290, %v1281, %v1283
      %v1297 = vsel %vm1290, %v1283, %v1285
      %v1298 = vsel %vm1290, %v1285, %v1287
      %v1299 = vsel %vm1290, %v1287, %v1289
      %v1300 = vcombine.low %v1208, %v1208
      %v1301 = vcombine.low %v1217, %v1217
      %v1302 = vcombine.low %v1226, %v1226
      %1303 = vrot.lane.b32.xlu0 %v1300, 92
      %v1304 = vpop.permute.xlu0 %1303
      %1305 = vrot.lane.b32.xlu0 %v1208, 92
      %v1306 = vpop.permute.xlu0 %1305
      %1307 = vrot.lane.b32.xlu0 %v1265, 92
      %v1308 = vpop.permute.xlu0 %1307
      %1309 = vrot.lane.b32.xlu0 %v1166, 92
      %v1310 = vpop.permute.xlu0 %1309
      %1311 = vrot.lane.b32.xlu0 %v1301, 92
      %v1312 = vpop.permute.xlu0 %1311
      %1313 = vrot.lane.b32.xlu0 %v1217, 92
      %v1314 = vpop.permute.xlu0 %1313
      %1315 = vrot.lane.b32.xlu0 %v1267, 92
      %v1316 = vpop.permute.xlu0 %1315
      %1317 = vrot.lane.b32.xlu0 %v1183, 92
      %v1318 = vpop.permute.xlu0 %1317
      %1319 = vrot.lane.b32.xlu0 %v1302, 92
      %v1320 = vpop.permute.xlu0 %1319
      %1321 = vrot.lane.b32.xlu0 %v1226, 92
      %v1322 = vpop.permute.xlu0 %1321
      %vm1323 = vcmask 752640
      %v1324 = vsel %vm1323, %v1304, %v1306
      %v1325 = vsel %vm1323, %v1306, %v1308
      %v1326 = vsel %vm1323, %v1308, %v1310
      %v1327 = vsel %vm1323, %v1310, %v1312
      %v1328 = vsel %vm1323, %v1312, %v1314
      %v1329 = vsel %vm1323, %v1314, %v1316
      %v1330 = vsel %vm1323, %v1316, %v1318
      %v1331 = vsel %vm1323, %v1318, %v1320
      %v1332 = vsel %vm1323, %v1320, %v1322
      %v1333 = vcombine.high %v1233, %v1233
      %1334 = vrot.lane.b32.xlu0 %v1166, 91
      %v1335 = vpop.permute.xlu0 %1334
      %1336 = vrot.lane.b32.xlu0 %v1174, 91
      %v1337 = vpop.permute.xlu0 %1336
      %1338 = vrot.lane.b32.xlu0 %v1173, 91
      %v1339 = vpop.permute.xlu0 %1338
      %1340 = vrot.lane.b32.xlu0 %v1175, 91
      %v1341 = vpop.permute.xlu0 %1340
      %1342 = vrot.lane.b32.xlu0 %v1183, 91
      %v1343 = vpop.permute.xlu0 %1342
      %1344 = vrot.lane.b32.xlu0 %v1191, 91
      %v1345 = vpop.permute.xlu0 %1344
      %1346 = vrot.lane.b32.xlu0 %v1190, 91
      %v1347 = vpop.permute.xlu0 %1346
      %1348 = vrot.lane.b32.xlu0 %v1192, 91
      %v1349 = vpop.permute.xlu0 %1348
      %1350 = vrot.lane.b32.xlu0 %v1233, 91
      %v1351 = vpop.permute.xlu0 %1350
      %1352 = vrot.lane.b32.xlu0 %v1333, 91
      %v1353 = vpop.permute.xlu0 %1352
      %vm1354 = vcmask 744448
      %v1355 = vsel %vm1354, %v1335, %v1337
      %v1356 = vsel %vm1354, %v1337, %v1339
      %v1357 = vsel %vm1354, %v1339, %v1341
      %v1358 = vsel %vm1354, %v1341, %v1343
      %v1359 = vsel %vm1354, %v1343, %v1345
      %v1360 = vsel %vm1354, %v1345, %v1347
      %v1361 = vsel %vm1354, %v1347, %v1349
      %v1362 = vsel %vm1354, %v1349, %v1351
      %v1363 = vsel %vm1354, %v1351, %v1353
      %1364 = vrot.lane.b32.xlu0 %v1208, 90
      %v1365 = vpop.permute.xlu0 %1364
      %1366 = vrot.lane.b32.xlu0 %v1209, 90
      %v1367 = vpop.permute.xlu0 %1366
      %1368 = vrot.lane.b32.xlu0 %v1166, 90
      %v1369 = vpop.permute.xlu0 %1368
      %1370 = vrot.lane.b32.xlu0 %v1174, 90
      %v1371 = vpop.permute.xlu0 %1370
      %1372 = vrot.lane.b32.xlu0 %v1217, 90
      %v1373 = vpop.permute.xlu0 %1372
      %1374 = vrot.lane.b32.xlu0 %v1218, 90
      %v1375 = vpop.permute.xlu0 %1374
      %1376 = vrot.lane.b32.xlu0 %v1183, 90
      %v1377 = vpop.permute.xlu0 %1376
      %1378 = vrot.lane.b32.xlu0 %v1191, 90
      %v1379 = vpop.permute.xlu0 %1378
      %1380 = vrot.lane.b32.xlu0 %v1226, 90
      %v1381 = vpop.permute.xlu0 %1380
      %1382 = vrot.lane.b32.xlu0 %v1234, 90
      %v1383 = vpop.permute.xlu0 %1382
      %vm1384 = vcmask 736256
      %v1385 = vsel %vm1384, %v1365, %v1367
      %v1386 = vsel %vm1384, %v1367, %v1369
      %v1387 = vsel %vm1384, %v1369, %v1371
      %v1388 = vsel %vm1384, %v1371, %v1373
      %v1389 = vsel %vm1384, %v1373, %v1375
      %v1390 = vsel %vm1384, %v1375, %v1377
      %v1391 = vsel %vm1384, %v1377, %v1379
      %v1392 = vsel %vm1384, %v1379, %v1381
      %v1393 = vsel %vm1384, %v1381, %v1383
      %1394 = vrot.lane.b32.xlu0 %v1265, 56
      %v1395 = vpop.permute.xlu0 %1394
      %1396 = vrot.lane.b32.xlu0 %v1166, 56
      %v1397 = vpop.permute.xlu0 %1396
      %1398 = vrot.lane.b32.xlu0 %v1266, 56
      %v1399 = vpop.permute.xlu0 %1398
      %1400 = vrot.lane.b32.xlu0 %v1173, 56
      %v1401 = vpop.permute.xlu0 %1400
      %1402 = vrot.lane.b32.xlu0 %v1267, 56
      %v1403 = vpop.permute.xlu0 %1402
      %1404 = vrot.lane.b32.xlu0 %v1183, 56
      %v1405 = vpop.permute.xlu0 %1404
      %1406 = vrot.lane.b32.xlu0 %v1268, 56
      %v1407 = vpop.permute.xlu0 %1406
      %1408 = vrot.lane.b32.xlu0 %v1190, 56
      %v1409 = vpop.permute.xlu0 %1408
      %1410 = vrot.lane.b32.xlu0 %v1269, 56
      %v1411 = vpop.permute.xlu0 %1410
      %1412 = vrot.lane.b32.xlu0 %v1233, 56
      %v1413 = vpop.permute.xlu0 %1412
      %vm1414 = vcmask 457728
      %v1415 = vsel %vm1414, %v1395, %v1397
      %v1416 = vsel %vm1414, %v1397, %v1399
      %v1417 = vsel %vm1414, %v1399, %v1401
      %v1418 = vsel %vm1414, %v1401, %v1403
      %v1419 = vsel %vm1414, %v1403, %v1405
      %v1420 = vsel %vm1414, %v1405, %v1407
      %v1421 = vsel %vm1414, %v1407, %v1409
      %v1422 = vsel %vm1414, %v1409, %v1411
      %v1423 = vsel %vm1414, %v1411, %v1413
      %1424 = vrot.lane.b32.xlu0 %v1300, 55
      %v1425 = vpop.permute.xlu0 %1424
      %1426 = vrot.lane.b32.xlu0 %v1208, 55
      %v1427 = vpop.permute.xlu0 %1426
      %1428 = vrot.lane.b32.xlu0 %v1265, 55
      %v1429 = vpop.permute.xlu0 %1428
      %1430 = vrot.lane.b32.xlu0 %v1166, 55
      %v1431 = vpop.permute.xlu0 %1430
      %1432 = vrot.lane.b32.xlu0 %v1301, 55
      %v1433 = vpop.permute.xlu0 %1432
      %1434 = vrot.lane.b32.xlu0 %v1217, 55
      %v1435 = vpop.permute.xlu0 %1434
      %1436 = vrot.lane.b32.xlu0 %v1267, 55
      %v1437 = vpop.permute.xlu0 %1436
      %1438 = vrot.lane.b32.xlu0 %v1183, 55
      %v1439 = vpop.permute.xlu0 %1438
      %1440 = vrot.lane.b32.xlu0 %v1302, 55
      %v1441 = vpop.permute.xlu0 %1440
      %1442 = vrot.lane.b32.xlu0 %v1226, 55
      %v1443 = vpop.permute.xlu0 %1442
      %vm1444 = vcmask 449536
      %v1445 = vsel %vm1444, %v1425, %v1427
      %v1446 = vsel %vm1444, %v1427, %v1429
      %v1447 = vsel %vm1444, %v1429, %v1431
      %v1448 = vsel %vm1444, %v1431, %v1433
      %v1449 = vsel %vm1444, %v1433, %v1435
      %v1450 = vsel %vm1444, %v1435, %v1437
      %v1451 = vsel %vm1444, %v1437, %v1439
      %v1452 = vsel %vm1444, %v1439, %v1441
      %v1453 = vsel %vm1444, %v1441, %v1443
      %1454 = vrot.lane.b32.xlu0 %v1166, 54
      %v1455 = vpop.permute.xlu0 %1454
      %1456 = vrot.lane.b32.xlu0 %v1174, 54
      %v1457 = vpop.permute.xlu0 %1456
      %1458 = vrot.lane.b32.xlu0 %v1173, 54
      %v1459 = vpop.permute.xlu0 %1458
      %1460 = vrot.lane.b32.xlu0 %v1175, 54
      %v1461 = vpop.permute.xlu0 %1460
      %1462 = vrot.lane.b32.xlu0 %v1183, 54
      %v1463 = vpop.permute.xlu0 %1462
      %1464 = vrot.lane.b32.xlu0 %v1191, 54
      %v1465 = vpop.permute.xlu0 %1464
      %1466 = vrot.lane.b32.xlu0 %v1190, 54
      %v1467 = vpop.permute.xlu0 %1466
      %1468 = vrot.lane.b32.xlu0 %v1192, 54
      %v1469 = vpop.permute.xlu0 %1468
      %1470 = vrot.lane.b32.xlu0 %v1233, 54
      %v1471 = vpop.permute.xlu0 %1470
      %1472 = vrot.lane.b32.xlu0 %v1333, 54
      %v1473 = vpop.permute.xlu0 %1472
      %vm1474 = vcmask 441344
      %v1475 = vsel %vm1474, %v1455, %v1457
      %v1476 = vsel %vm1474, %v1457, %v1459
      %v1477 = vsel %vm1474, %v1459, %v1461
      %v1478 = vsel %vm1474, %v1461, %v1463
      %v1479 = vsel %vm1474, %v1463, %v1465
      %v1480 = vsel %vm1474, %v1465, %v1467
      %v1481 = vsel %vm1474, %v1467, %v1469
      %v1482 = vsel %vm1474, %v1469, %v1471
      %v1483 = vsel %vm1474, %v1471, %v1473
      %v1486 = vsel %vm467, %v1166, %v1256
      %v1489 = vsel %vm467, %v1174, %v1257
      %v1492 = vsel %vm467, %v1173, %v1258
      %v1495 = vsel %vm467, %v1175, %v1259
      %v1498 = vsel %vm467, %v1183, %v1260
      %v1501 = vsel %vm467, %v1191, %v1261
      %v1504 = vsel %vm467, %v1190, %v1262
      %v1507 = vsel %vm467, %v1192, %v1263
      %v1510 = vsel %vm467, %v1199, %v1264
      %vm1511 = vcmask 1043456
      %v1513 = vsel %vm1511, %v1486, %v1291
      %v1515 = vsel %vm1511, %v1489, %v1292
      %v1517 = vsel %vm1511, %v1492, %v1293
      %v1519 = vsel %vm1511, %v1495, %v1294
      %v1521 = vsel %vm1511, %v1498, %v1295
      %v1523 = vsel %vm1511, %v1501, %v1296
      %v1525 = vsel %vm1511, %v1504, %v1297
      %v1527 = vsel %vm1511, %v1507, %v1298
      %v1529 = vsel %vm1511, %v1510, %v1299
      %vm1530 = vcmask 1045504
      %v1532 = vsel %vm1530, %v1513, %v1324
      %v1535 = vsel %vm1530, %v1515, %v1325
      %v1538 = vsel %vm1530, %v1517, %v1326
      %v1541 = vsel %vm1530, %v1519, %v1327
      %v1544 = vsel %vm1530, %v1521, %v1328
      %v1547 = vsel %vm1530, %v1523, %v1329
      %v1550 = vsel %vm1530, %v1525, %v1330
      %v1553 = vsel %vm1530, %v1527, %v1331
      %v1556 = vsel %vm1530, %v1529, %v1332
      %v1560 = vsel %vm467, %v1355, %v1385
      %v1563 = vsel %vm467, %v1356, %v1386
      %v1566 = vsel %vm467, %v1357, %v1387
      %v1569 = vsel %vm467, %v1358, %v1388
      %v1572 = vsel %vm467, %v1359, %v1389
      %v1575 = vsel %vm467, %v1360, %v1390
      %v1578 = vsel %vm467, %v1361, %v1391
      %v1581 = vsel %vm467, %v1362, %v1392
      %v1584 = vsel %vm467, %v1363, %v1393
      %v1586 = vsel %vm1511, %v1560, %v1415
      %v1588 = vsel %vm1511, %v1563, %v1416
      %v1590 = vsel %vm1511, %v1566, %v1417
      %v1592 = vsel %vm1511, %v1569, %v1418
      %v1594 = vsel %vm1511, %v1572, %v1419
      %v1596 = vsel %vm1511, %v1575, %v1420
      %v1598 = vsel %vm1511, %v1578, %v1421
      %v1600 = vsel %vm1511, %v1581, %v1422
      %v1602 = vsel %vm1511, %v1584, %v1423
      %v1604 = vsel %vm1530, %v1586, %v1445
      %v1607 = vsel %vm1530, %v1588, %v1446
      %v1610 = vsel %vm1530, %v1590, %v1447
      %v1613 = vsel %vm1530, %v1592, %v1448
      %v1616 = vsel %vm1530, %v1594, %v1449
      %v1619 = vsel %vm1530, %v1596, %v1450
      %v1622 = vsel %vm1530, %v1598, %v1451
      %v1625 = vsel %vm1530, %v1600, %v1452
      %v1628 = vsel %vm1530, %v1602, %v1453
      %v1630 = vld [vmem:[%s2] sm:$0xf]
      %v1631 = vld [vmem:[%s2 + $0x4] sm:$0x3]
      %v1634 = vunpack.c.l.b16 %v1630
      %v1635 = vunpack.c.l.b16 %v1631
      %v1636 = vpack.c.b16 %v1635, %v1634
      %vm1637 = vcmask 293888
      %v1639 = vsel %vm1637, %v1636, 0
      %v1642 = vsel %vm467, %v1475, 0
      %v1645 = vsel %vm467, %v1476, 0
      %v1648 = vsel %vm467, %v1477, 0
      %v1651 = vsel %vm467, %v1478, 0
      %v1654 = vsel %vm467, %v1479, 0
      %v1657 = vsel %vm467, %v1480, 0
      %v1660 = vsel %vm467, %v1481, 0
      %v1663 = vsel %vm467, %v1482, 0
      %v1666 = vsel %vm467, %v1483, 0
      %1668 = vmatprep.subr.bf16.mxu0 0
      %1669 = vmatpush1.bf16.msra.mxu0 0
      %1670 = vmatprep.subr.bf16.mxu0 0
      %1671 = vmatpush1.bf16.msra.mxu0 0
      %1672 = vmatprep.subr.bf16.mxu0 0
      %1673 = vmatpush1.bf16.msra.mxu0 0
      %1674 = vmatprep.subr.bf16.mxu0 0
      %1675 = vmatpush1.bf16.msra.mxu0 0
      %1676 = vmatprep.subr.bf16.mxu0 0
      %1677 = vmatpush1.bf16.msra.mxu0 0
      %1678 = vmatprep.subr.bf16.mxu0 %v1645
      %1679 = vmatpush1.bf16.msra.mxu0 %v1642
      %1680 = vmatprep.subr.bf16.mxu0 %v1607
      %1681 = vmatpush1.bf16.msra.mxu0 %v1604
      %1682 = vmatprep.subr.bf16.mxu0 %v1535
      %1683 = vmatpush1.bf16.msra.mxu0 %v1532
      %1684 = vmatprep.subr.bf16.mxu0 0
      %1685 = vmatpush2.bf16.msra.mxu0 0
      %1686 = vmatprep.subr.bf16.mxu0 0
      %1687 = vmatpush2.bf16.msra.mxu0 0
      %1688 = vmatprep.subr.bf16.mxu0 0
      %1689 = vmatpush2.bf16.msra.mxu0 0
      %1690 = vmatprep.subr.bf16.mxu0 0
      %1691 = vmatpush2.bf16.msra.mxu0 0
      %1692 = vmatprep.subr.bf16.mxu0 0
      %1693 = vmatpush2.bf16.msra.mxu0 0
      %1694 = vmatprep.subr.bf16.mxu0 0
      %1695 = vmatpush2.bf16.msra.mxu0 0
      %1696 = vmatprep.subr.bf16.mxu0 0
      %1697 = vmatpush2.bf16.msra.mxu0 0
      %1698 = vmatprep.subr.bf16.mxu0 0
      %1699 = vmatpush2.bf16.msra.mxu0 0
      %1700 = vmatprep.mubr.bf16.mxu0 0
      %1701 = vmatmul.mubr.bf16.gmra.mxu0 %v1639
      %v1702 = vpop.f32.mrf.mxu0
      %v1703 = vadd.f32 0.0, %v1702
      %v1704 = vpop.f32.mrf.mxu0
      %v1705 = vadd.f32 0.0, %v1704
      %v1706 = vpop.f32.mrf.mxu0
      %v1707 = vadd.f32 0.0, %v1706
      %v1708 = vpop.f32.mrf.mxu0
      %v1709 = vadd.f32 0.0, %v1708
      %1710 = vdwg.mxu0
      %1711 = vmatprep.subr.bf16.mxu0 0
      %1712 = vmatpush1.bf16.msra.mxu0 0
      %1713 = vmatprep.subr.bf16.mxu0 0
      %1714 = vmatpush1.bf16.msra.mxu0 0
      %1715 = vmatprep.subr.bf16.mxu0 0
      %1716 = vmatpush1.bf16.msra.mxu0 0
      %1717 = vmatprep.subr.bf16.mxu0 0
      %1718 = vmatpush1.bf16.msra.mxu0 0
      %1719 = vmatprep.subr.bf16.mxu0 0
      %1720 = vmatpush1.bf16.msra.mxu0 0
      %1721 = vmatprep.subr.bf16.mxu0 %v1651
      %1722 = vmatpush1.bf16.msra.mxu0 %v1648
      %1723 = vmatprep.subr.bf16.mxu0 %v1613
      %1724 = vmatpush1.bf16.msra.mxu0 %v1610
      %1725 = vmatprep.subr.bf16.mxu0 %v1541
      %1726 = vmatpush1.bf16.msra.mxu0 %v1538
      %1727 = vmatprep.subr.bf16.mxu0 0
      %1728 = vmatpush2.bf16.msra.mxu0 0
      %1729 = vmatprep.subr.bf16.mxu0 0
      %1730 = vmatpush2.bf16.msra.mxu0 0
      %1731 = vmatprep.subr.bf16.mxu0 0
      %1732 = vmatpush2.bf16.msra.mxu0 0
      %1733 = vmatprep.subr.bf16.mxu0 0
      %1734 = vmatpush2.bf16.msra.mxu0 0
      %1735 = vmatprep.subr.bf16.mxu0 0
      %1736 = vmatpush2.bf16.msra.mxu0 0
      %1737 = vmatprep.subr.bf16.mxu0 0
      %1738 = vmatpush2.bf16.msra.mxu0 0
      %1739 = vmatprep.subr.bf16.mxu0 0
      %1740 = vmatpush2.bf16.msra.mxu0 0
      %1741 = vmatprep.subr.bf16.mxu0 0
      %1742 = vmatpush2.bf16.msra.mxu0 0
      %1743 = vmatprep.mubr.bf16.mxu0 0
      %1744 = vmatmul.mubr.bf16.gmra.mxu0 %v1639
      %v1745 = vpop.f32.mrf.mxu0
      %v1746 = vadd.f32 0.0, %v1745
      %v1747 = vpop.f32.mrf.mxu0
      %v1748 = vadd.f32 0.0, %v1747
      %v1749 = vpop.f32.mrf.mxu0
      %v1750 = vadd.f32 0.0, %v1749
      %v1751 = vpop.f32.mrf.mxu0
      %v1752 = vadd.f32 0.0, %v1751
      %1753 = vdwg.mxu0
      %1754 = vmatprep.subr.bf16.mxu0 0
      %1755 = vmatpush1.bf16.msra.mxu0 0
      %1756 = vmatprep.subr.bf16.mxu0 0
      %1757 = vmatpush1.bf16.msra.mxu0 0
      %1758 = vmatprep.subr.bf16.mxu0 0
      %1759 = vmatpush1.bf16.msra.mxu0 0
      %1760 = vmatprep.subr.bf16.mxu0 0
      %1761 = vmatpush1.bf16.msra.mxu0 0
      %1762 = vmatprep.subr.bf16.mxu0 0
      %1763 = vmatpush1.bf16.msra.mxu0 0
      %1764 = vmatprep.subr.bf16.mxu0 %v1657
      %1765 = vmatpush1.bf16.msra.mxu0 %v1654
      %1766 = vmatprep.subr.bf16.mxu0 %v1619
      %1767 = vmatpush1.bf16.msra.mxu0 %v1616
      %1768 = vmatprep.subr.bf16.mxu0 %v1547
      %1769 = vmatpush1.bf16.msra.mxu0 %v1544
      %1770 = vmatprep.subr.bf16.mxu0 0
      %1771 = vmatpush2.bf16.msra.mxu0 0
      %1772 = vmatprep.subr.bf16.mxu0 0
      %1773 = vmatpush2.bf16.msra.mxu0 0
      %1774 = vmatprep.subr.bf16.mxu0 0
      %1775 = vmatpush2.bf16.msra.mxu0 0
      %1776 = vmatprep.subr.bf16.mxu0 0
      %1777 = vmatpush2.bf16.msra.mxu0 0
      %1778 = vmatprep.subr.bf16.mxu0 0
      %1779 = vmatpush2.bf16.msra.mxu0 0
      %1780 = vmatprep.subr.bf16.mxu0 0
      %1781 = vmatpush2.bf16.msra.mxu0 0
      %1782 = vmatprep.subr.bf16.mxu0 0
      %1783 = vmatpush2.bf16.msra.mxu0 0
      %1784 = vmatprep.subr.bf16.mxu0 0
      %1785 = vmatpush2.bf16.msra.mxu0 0
      %1786 = vmatprep.mubr.bf16.mxu0 0
      %1787 = vmatmul.mubr.bf16.gmra.mxu0 %v1639
      %v1788 = vpop.f32.mrf.mxu0
      %v1789 = vadd.f32 0.0, %v1788
      %v1790 = vpop.f32.mrf.mxu0
      %v1791 = vadd.f32 0.0, %v1790
      %v1792 = vpop.f32.mrf.mxu0
      %v1793 = vadd.f32 0.0, %v1792
      %v1794 = vpop.f32.mrf.mxu0
      %v1795 = vadd.f32 0.0, %v1794
      %1796 = vdwg.mxu0
      %1797 = vmatprep.subr.bf16.mxu0 0
      %1798 = vmatpush1.bf16.msra.mxu0 0
      %1799 = vmatprep.subr.bf16.mxu0 0
      %1800 = vmatpush1.bf16.msra.mxu0 0
      %1801 = vmatprep.subr.bf16.mxu0 0
      %1802 = vmatpush1.bf16.msra.mxu0 0
      %1803 = vmatprep.subr.bf16.mxu0 0
      %1804 = vmatpush1.bf16.msra.mxu0 0
      %1805 = vmatprep.subr.bf16.mxu0 0
      %1806 = vmatpush1.bf16.msra.mxu0 0
      %1807 = vmatprep.subr.bf16.mxu0 %v1663
      %1808 = vmatpush1.bf16.msra.mxu0 %v1660
      %1809 = vmatprep.subr.bf16.mxu0 %v1625
      %1810 = vmatpush1.bf16.msra.mxu0 %v1622
      %1811 = vmatprep.subr.bf16.mxu0 %v1553
      %1812 = vmatpush1.bf16.msra.mxu0 %v1550
      %1813 = vmatprep.subr.bf16.mxu0 0
      %1814 = vmatpush2.bf16.msra.mxu0 0
      %1815 = vmatprep.subr.bf16.mxu0 0
      %1816 = vmatpush2.bf16.msra.mxu0 0
      %1817 = vmatprep.subr.bf16.mxu0 0
      %1818 = vmatpush2.bf16.msra.mxu0 0
      %1819 = vmatprep.subr.bf16.mxu0 0
      %1820 = vmatpush2.bf16.msra.mxu0 0
      %1821 = vmatprep.subr.bf16.mxu0 0
      %1822 = vmatpush2.bf16.msra.mxu0 0
      %1823 = vmatprep.subr.bf16.mxu0 0
      %1824 = vmatpush2.bf16.msra.mxu0 0
      %1825 = vmatprep.subr.bf16.mxu0 0
      %1826 = vmatpush2.bf16.msra.mxu0 0
      %1827 = vmatprep.subr.bf16.mxu0 0
      %1828 = vmatpush2.bf16.msra.mxu0 0
      %1829 = vmatprep.mubr.bf16.mxu0 0
      %1830 = vmatmul.mubr.bf16.gmra.mxu0 %v1639
      %v1831 = vpop.f32.mrf.mxu0
      %v1832 = vadd.f32 0.0, %v1831
      %v1833 = vpop.f32.mrf.mxu0
      %v1834 = vadd.f32 0.0, %v1833
      %v1835 = vpop.f32.mrf.mxu0
      %v1836 = vadd.f32 0.0, %v1835
      %v1837 = vpop.f32.mrf.mxu0
      %v1838 = vadd.f32 0.0, %v1837
      %1839 = vdwg.mxu0
      %1840 = vmatprep.subr.bf16.mxu0 0
      %1841 = vmatpush1.bf16.msra.mxu0 0
      %1842 = vmatprep.subr.bf16.mxu0 0
      %1843 = vmatpush1.bf16.msra.mxu0 0
      %1844 = vmatprep.subr.bf16.mxu0 0
      %1845 = vmatpush1.bf16.msra.mxu0 0
      %1846 = vmatprep.subr.bf16.mxu0 0
      %1847 = vmatpush1.bf16.msra.mxu0 0
      %1848 = vmatprep.subr.bf16.mxu0 0
      %1849 = vmatpush1.bf16.msra.mxu0 0
      %1850 = vmatprep.subr.bf16.mxu0 0
      %1851 = vmatpush1.bf16.msra.mxu0 %v1666
      %1852 = vmatprep.subr.bf16.mxu0 0
      %1853 = vmatpush1.bf16.msra.mxu0 %v1628
      %1854 = vmatprep.subr.bf16.mxu0 0
      %1855 = vmatpush1.bf16.msra.mxu0 %v1556
      %1856 = vmatprep.subr.bf16.mxu0 0
      %1857 = vmatpush2.bf16.msra.mxu0 0
      %1858 = vmatprep.subr.bf16.mxu0 0
      %1859 = vmatpush2.bf16.msra.mxu0 0
      %1860 = vmatprep.subr.bf16.mxu0 0
      %1861 = vmatpush2.bf16.msra.mxu0 0
      %1862 = vmatprep.subr.bf16.mxu0 0
      %1863 = vmatpush2.bf16.msra.mxu0 0
      %1864 = vmatprep.subr.bf16.mxu0 0
      %1865 = vmatpush2.bf16.msra.mxu0 0
      %1866 = vmatprep.subr.bf16.mxu0 0
      %1867 = vmatpush2.bf16.msra.mxu0 0
      %1868 = vmatprep.subr.bf16.mxu0 0
      %1869 = vmatpush2.bf16.msra.mxu0 0
      %1870 = vmatprep.subr.bf16.mxu0 0
      %1871 = vmatpush2.bf16.msra.mxu0 0
      %1872 = vmatprep.mubr.bf16.mxu0 0
      %1873 = vmatmul.mubr.bf16.gmra.mxu0 %v1639
      %v1874 = vpop.f32.mrf.mxu0
      %v1875 = vadd.f32 0.0, %v1874
      %v1876 = vpop.f32.mrf.mxu0
      %v1877 = vpop.f32.mrf.mxu0
      %v1878 = vadd.f32 0.0, %v1877
      %v1879 = vpop.f32.mrf.mxu0
      %1880 = vdwg.mxu0
      %v1881 = vld [vmem:[%s3] sm:$0xff]
      %v1882 = vld [vmem:[%s3 + $0x8] sm:$0xf]
      %1884 = vset.pattern.permute.xlu0 0
      %1885 = vperm.xlu0 %1884, %v1881
      %v1886 = vpop.permute.xlu0 %1885
      %1889 = vset.pattern.permute.xlu0 0
      %1890 = vperm.xlu0 %1889, %v1882
      %v1891 = vpop.permute.xlu0 %1890
      %v1893 = vmul.f32 %v1703, %v1886
      %v1894 = vmul.f32 %v1705, %v1886
      %v1895 = vmul.f32 %v1746, %v1886
      %v1896 = vmul.f32 %v1748, %v1886
      %v1897 = vmul.f32 %v1789, %v1886
      %v1898 = vmul.f32 %v1791, %v1886
      %v1899 = vmul.f32 %v1832, %v1886
      %v1900 = vmul.f32 %v1834, %v1886
      %v1901 = vmul.f32 %v1875, %v1886
      %v1902 = vmul.f32 %v1707, %v1891
      %v1903 = vmul.f32 %v1709, %v1891
      %v1904 = vmul.f32 %v1750, %v1891
      %v1905 = vmul.f32 %v1752, %v1891
      %v1906 = vmul.f32 %v1793, %v1891
      %v1907 = vmul.f32 %v1795, %v1891
      %v1908 = vmul.f32 %v1836, %v1891
      %v1909 = vmul.f32 %v1838, %v1891
      %v1910 = vmul.f32 %v1878, %v1891
      %v1911 = vld [vmem:[%s4] sm:$0xff]
      %v1912 = vld [vmem:[%s4 + $0x8] sm:$0xf]
      %1914 = vset.pattern.permute.xlu0 0
      %1915 = vperm.xlu0 %1914, %v1911
      %v1916 = vpop.permute.xlu0 %1915
      %1919 = vset.pattern.permute.xlu0 0
      %1920 = vperm.xlu0 %1919, %v1912
      %v1921 = vpop.permute.xlu0 %1920
      %v1923 = vadd.f32 %v1893, %v1916
      %v1924 = vadd.f32 %v1894, %v1916
      %v1925 = vadd.f32 %v1895, %v1916
      %v1926 = vadd.f32 %v1896, %v1916
      %v1927 = vadd.f32 %v1897, %v1916
      %v1928 = vadd.f32 %v1898, %v1916
      %v1929 = vadd.f32 %v1899, %v1916
      %v1930 = vadd.f32 %v1900, %v1916
      %v1931 = vadd.f32 %v1901, %v1916
      %v1932 = vadd.f32 %v1902, %v1921
      %v1933 = vadd.f32 %v1903, %v1921
      %v1934 = vadd.f32 %v1904, %v1921
      %v1935 = vadd.f32 %v1905, %v1921
      %v1936 = vadd.f32 %v1906, %v1921
      %v1937 = vadd.f32 %v1907, %v1921
      %v1938 = vadd.f32 %v1908, %v1921
      %v1939 = vadd.f32 %v1909, %v1921
      %v1940 = vadd.f32 %v1910, %v1921
      %v1941 = vmax.f32 %v1923, 0.0
      %v1942 = vmax.f32 %v1924, 0.0
      %v1943 = vmax.f32 %v1925, 0.0
      %v1944 = vmax.f32 %v1926, 0.0
      %v1945 = vmax.f32 %v1927, 0.0
      %v1946 = vmax.f32 %v1928, 0.0
      %v1947 = vmax.f32 %v1929, 0.0
      %v1948 = vmax.f32 %v1930, 0.0
      %v1949 = vmax.f32 %v1931, 0.0
      %1950 = vst [vmem:[#allocation3] sm:$0xff] 0
      %1951 = vst [vmem:[#allocation3 + $0x8] sm:$0xff] 0
      %1952 = vst.msk [vmem:[#allocation3 + $0x10] sm:$0xf] %vm469, 0
      %v1953 = vpack.c.bf16 %v1941, %v1941
      %v1956 = vunpack.c.l.s4 1983009808
      %v1957 = vunpack.c.0.s8 %v1956
      %v1958 = vlaneseq
      %v1959 = vshrl.u32 %v1958, 7
      %v1960 = vsub.s32 %v1957, %v1959
      %v1961 = vrot.slane %v1953, %v1960
      %1962 = vrot.lane.b32.xlu0 %v1961, 37
      %v1963 = vpop.permute.xlu0 %1962
      %vm1965 = vcmask 558376
      %1966 = vst.msk [vmem:[#allocation3] sm:$0x3] %vm1965, %v1963
      %vm1967 = vcmask 853576
      %1968 = vst.msk [vmem:[#allocation3] sm:$0x3] %vm1967, %v1963
      %v1969 = vrot.slane %v1963, 6
      %vm1970 = vcmask 302080
      %v1971 = vsel %vm1970, %v1969, %v1963
      %vm1973 = vcmask 1042280
      %vm1974 = vcmask 101378
      %vm1975 = vmor %vm1974, %vm1973
      %1976 = vst.msk [vmem:[#allocation3] sm:$0xf] %vm1975, %v1971
      %v1977 = vpack.c.bf16 %v1942, %v1942
      %v1979 = vcombine.low %v1953, %v1977
      %v1981 = vunpack.c.l.s4 1983009808
      %v1982 = vunpack.c.0.s8 %v1981
      %v1983 = vlaneseq
      %v1984 = vshrl.u32 %v1983, 7
      %v1985 = vsub.s32 %v1982, %v1984
      %v1986 = vrot.slane %v1979, %v1985
      %1987 = vrot.lane.b32.xlu0 %v1986, 37
      %v1988 = vpop.permute.xlu0 %1987
      %v1989 = vrot.slane %v1988, 2
      %v1990 = vsel %vm1970, %v1988, %v1989
      %vm1992 = vcmask 394376
      %1993 = vst.msk [vmem:[#allocation3 + $0x2] sm:$0x3] %vm1992, %v1990
      %v1995 = vunpack.c.l.s4 1983009808
      %v1996 = vunpack.c.0.s8 %v1995
      %v1997 = vlaneseq
      %v1998 = vshrl.u32 %v1997, 7
      %v1999 = vsub.s32 %v1996, %v1998
      %v2000 = vrot.slane %v1977, %v1999
      %2001 = vrot.lane.b32.xlu0 %v2000, 37
      %v2002 = vpop.permute.xlu0 %2001
      %vm2004 = vcmask 689576
      %2005 = vst.msk [vmem:[#allocation3 + $0x2] sm:$0x3] %vm2004, %v2002
      %vm2006 = vcmask 984776
      %2007 = vst.msk [vmem:[#allocation3 + $0x2] sm:$0x3] %vm2006, %v2002
      %v2008 = vrot.slane %v2002, 6
      %v2009 = vsel %vm1970, %v2008, %v2002
      %vm2011 = vcmask 1042408
      %vm2012 = vcmask 232450
      %vm2013 = vmor %vm2012, %vm2011
      %2014 = vst.msk [vmem:[#allocation3 + $0x2] sm:$0xf] %vm2013, %v2009
      %v2015 = vpack.c.bf16 %v1943, %v1943
      %v2017 = vcombine.low %v1977, %v2015
      %v2019 = vunpack.c.l.s4 1983009808
      %v2020 = vunpack.c.0.s8 %v2019
      %v2021 = vlaneseq
      %v2022 = vshrl.u32 %v2021, 7
      %v2023 = vsub.s32 %v2020, %v2022
      %v2024 = vrot.slane %v2017, %v2023
      %2025 = vrot.lane.b32.xlu0 %v2024, 37
      %v2026 = vpop.permute.xlu0 %2025
      %v2027 = vrot.slane %v2026, 2
      %v2028 = vsel %vm1970, %v2026, %v2027
      %vm2030 = vcmask 525576
      %2031 = vst.msk [vmem:[#allocation3 + $0x4] sm:$0x3] %vm2030, %v2028
      %v2033 = vunpack.c.l.s4 1983009808
      %v2034 = vunpack.c.0.s8 %v2033
      %v2035 = vlaneseq
      %v2036 = vshrl.u32 %v2035, 7
      %v2037 = vsub.s32 %v2034, %v2036
      %v2038 = vrot.slane %v2015, %v2037
      %2039 = vrot.lane.b32.xlu0 %v2038, 37
      %v2040 = vpop.permute.xlu0 %2039
      %vm2042 = vcmask 820776
      %2043 = vst.msk [vmem:[#allocation3 + $0x4] sm:$0x3] %vm2042, %v2040
      %v2044 = vrot.slane %v2040, 6
      %v2045 = vsel %vm1970, %v2044, %v2040
      %vm2047 = vcmask 1042248
      %vm2048 = vcmask 68610
      %vm2049 = vmor %vm2048, %vm2047
      %2050 = vst.msk [vmem:[#allocation3 + $0x4] sm:$0xf] %vm2049, %v2045
      %v2051 = vpack.c.bf16 %v1944, %v1944
      %v2053 = vcombine.low %v2015, %v2051
      %v2055 = vunpack.c.l.s4 1983009808
      %v2056 = vunpack.c.0.s8 %v2055
      %v2057 = vlaneseq
      %v2058 = vshrl.u32 %v2057, 7
      %v2059 = vsub.s32 %v2056, %v2058
      %v2060 = vrot.slane %v2053, %v2059
      %2061 = vrot.lane.b32.xlu0 %v2060, 37
      %v2062 = vpop.permute.xlu0 %2061
      %v2063 = vrot.slane %v2062, 2
      %v2064 = vsel %vm1970, %v2062, %v2063
      %vm2066 = vcmask 361576
      %2067 = vst.msk [vmem:[#allocation3 + $0x6] sm:$0x3] %vm2066, %v2064
      %v2069 = vunpack.c.l.s4 1983009808
      %v2070 = vunpack.c.0.s8 %v2069
      %v2071 = vlaneseq
      %v2072 = vshrl.u32 %v2071, 7
      %v2073 = vsub.s32 %v2070, %v2072
      %v2074 = vrot.slane %v2051, %v2073
      %2075 = vrot.lane.b32.xlu0 %v2074, 37
      %v2076 = vpop.permute.xlu0 %2075
      %vm2078 = vcmask 656776
      %2079 = vst.msk [vmem:[#allocation3 + $0x6] sm:$0x3] %vm2078, %v2076
      %vm2080 = vcmask 951976
      %2081 = vst.msk [vmem:[#allocation3 + $0x6] sm:$0x3] %vm2080, %v2076
      %v2082 = vrot.slane %v2076, 6
      %v2083 = vsel %vm1970, %v2082, %v2076
      %vm2085 = vcmask 1042376
      %vm2086 = vcmask 199682
      %vm2087 = vmor %vm2086, %vm2085
      %2088 = vst.msk [vmem:[#allocation3 + $0x6] sm:$0xf] %vm2087, %v2083
      %v2089 = vpack.c.bf16 %v1945, %v1945
      %v2091 = vcombine.low %v2051, %v2089
      %v2093 = vunpack.c.l.s4 1983009808
      %v2094 = vunpack.c.0.s8 %v2093
      %v2095 = vlaneseq
      %v2096 = vshrl.u32 %v2095, 7
      %v2097 = vsub.s32 %v2094, %v2096
      %v2098 = vrot.slane %v2091, %v2097
      %2099 = vrot.lane.b32.xlu0 %v2098, 37
      %v2100 = vpop.permute.xlu0 %2099
      %v2101 = vrot.slane %v2100, 2
      %v2102 = vsel %vm1970, %v2100, %v2101
      %vm2104 = vcmask 492776
      %2105 = vst.msk [vmem:[#allocation3 + $0x8] sm:$0x3] %vm2104, %v2102
      %v2107 = vunpack.c.l.s4 1983009808
      %v2108 = vunpack.c.0.s8 %v2107
      %v2109 = vlaneseq
      %v2110 = vshrl.u32 %v2109, 7
      %v2111 = vsub.s32 %v2108, %v2110
      %v2112 = vrot.slane %v2089, %v2111
      %2113 = vrot.lane.b32.xlu0 %v2112, 37
      %v2114 = vpop.permute.xlu0 %2113
      %vm2116 = vcmask 787976
      %2117 = vst.msk [vmem:[#allocation3 + $0x8] sm:$0x3] %vm2116, %v2114
      %v2118 = vrot.slane %v2114, 6
      %v2119 = vsel %vm1970, %v2118, %v2114
      %vm2121 = vcmask 1042216
      %vm2122 = vcmask 35842
      %vm2123 = vmor %vm2122, %vm2121
      %2124 = vst.msk [vmem:[#allocation3 + $0x8] sm:$0xf] %vm2123, %v2119
      %v2125 = vpack.c.bf16 %v1946, %v1946
      %v2127 = vcombine.low %v2089, %v2125
      %v2129 = vunpack.c.l.s4 1983009808
      %v2130 = vunpack.c.0.s8 %v2129
      %v2131 = vlaneseq
      %v2132 = vshrl.u32 %v2131, 7
      %v2133 = vsub.s32 %v2130, %v2132
      %v2134 = vrot.slane %v2127, %v2133
      %2135 = vrot.lane.b32.xlu0 %v2134, 37
      %v2136 = vpop.permute.xlu0 %2135
      %v2137 = vrot.slane %v2136, 2
      %v2138 = vsel %vm1970, %v2136, %v2137
      %vm2140 = vcmask 328776
      %2141 = vst.msk [vmem:[#allocation3 + $0xa] sm:$0x3] %vm2140, %v2138
      %v2143 = vunpack.c.l.s4 1983009808
      %v2144 = vunpack.c.0.s8 %v2143
      %v2145 = vlaneseq
      %v2146 = vshrl.u32 %v2145, 7
      %v2147 = vsub.s32 %v2144, %v2146
      %v2148 = vrot.slane %v2125, %v2147
      %2149 = vrot.lane.b32.xlu0 %v2148, 37
      %v2150 = vpop.permute.xlu0 %2149
      %vm2152 = vcmask 623976
      %2153 = vst.msk [vmem:[#allocation3 + $0xa] sm:$0x3] %vm2152, %v2150
      %vm2154 = vcmask 919176
      %2155 = vst.msk [vmem:[#allocation3 + $0xa] sm:$0x3] %vm2154, %v2150
      %v2156 = vrot.slane %v2150, 6
      %v2157 = vsel %vm1970, %v2156, %v2150
      %vm2159 = vcmask 1042344
      %vm2160 = vcmask 166914
      %vm2161 = vmor %vm2160, %vm2159
      %2162 = vst.msk [vmem:[#allocation3 + $0xa] sm:$0xf] %vm2161, %v2157
      %v2163 = vpack.c.bf16 %v1947, %v1947
      %v2165 = vcombine.low %v2125, %v2163
      %v2167 = vunpack.c.l.s4 1983009808
      %v2168 = vunpack.c.0.s8 %v2167
      %v2169 = vlaneseq
      %v2170 = vshrl.u32 %v2169, 7
      %v2171 = vsub.s32 %v2168, %v2170
      %v2172 = vrot.slane %v2165, %v2171
      %2173 = vrot.lane.b32.xlu0 %v2172, 37
      %v2174 = vpop.permute.xlu0 %2173
      %v2175 = vrot.slane %v2174, 2
      %v2176 = vsel %vm1970, %v2174, %v2175
      %vm2178 = vcmask 459976
      %2179 = vst.msk [vmem:[#allocation3 + $0xc] sm:$0x3] %vm2178, %v2176
      %v2181 = vunpack.c.l.s4 1983009808
      %v2182 = vunpack.c.0.s8 %v2181
      %v2183 = vlaneseq
      %v2184 = vshrl.u32 %v2183, 7
      %v2185 = vsub.s32 %v2182, %v2184
      %v2186 = vrot.slane %v2163, %v2185
      %2187 = vrot.lane.b32.xlu0 %v2186, 37
      %v2188 = vpop.permute.xlu0 %2187
      %vm2190 = vcmask 755176
      %2191 = vst.msk [vmem:[#allocation3 + $0xc] sm:$0x3] %vm2190, %v2188
      %v2192 = vrot.slane %v2188, 6
      %v2193 = vsel %vm1970, %v2192, %v2188
      %vm2195 = vcmask 1042184
      %vm2196 = vcmask 3074
      %vm2197 = vmor %vm2196, %vm2195
      %2198 = vst.msk [vmem:[#allocation3 + $0xc] sm:$0xf] %vm2197, %v2193
      %vm2199 = vcmask 295976
      %2200 = vst.msk [vmem:[#allocation3 + $0xe] sm:$0x3] %vm2199, %v2188
      %v2201 = vpack.c.bf16 %v1948, %v1948
      %v2204 = vunpack.c.l.s4 1983009808
      %v2205 = vunpack.c.0.s8 %v2204
      %v2206 = vlaneseq
      %v2207 = vshrl.u32 %v2206, 7
      %v2208 = vsub.s32 %v2205, %v2207
      %v2209 = vrot.slane %v2201, %v2208
      %2210 = vrot.lane.b32.xlu0 %v2209, 37
      %v2211 = vpop.permute.xlu0 %2210
      %vm2213 = vcmask 591176
      %2214 = vst.msk [vmem:[#allocation3 + $0xe] sm:$0x3] %vm2213, %v2211
      %vm2215 = vcmask 886376
      %2216 = vst.msk [vmem:[#allocation3 + $0xe] sm:$0x3] %vm2215, %v2211
      %v2217 = vrot.slane %v2211, 6
      %v2218 = vsel %vm1970, %v2217, %v2211
      %vm2220 = vcmask 1042312
      %vm2221 = vcmask 134146
      %vm2222 = vmor %vm2221, %vm2220
      %2223 = vst.msk [vmem:[#allocation3 + $0xe] sm:$0xf] %vm2222, %v2218
      %v2224 = vpack.c.bf16 %v1949, %v1949
      %v2226 = vcombine.low %v2201, %v2224
      %v2228 = vunpack.c.l.s4 1983009808
      %v2229 = vunpack.c.0.s8 %v2228
      %v2230 = vlaneseq
      %v2231 = vshrl.u32 %v2230, 7
      %v2232 = vsub.s32 %v2229, %v2231
      %v2233 = vrot.slane %v2226, %v2232
      %2234 = vrot.lane.b32.xlu0 %v2233, 37
      %v2235 = vpop.permute.xlu0 %2234
      %v2236 = vrot.slane %v2235, 2
      %v2237 = vsel %vm1970, %v2235, %v2236
      %vm2239 = vcmask 427176
      %2240 = vst.msk [vmem:[#allocation3 + $0x10] sm:$0x3] %vm2239, %v2237
      %v2242 = vunpack.c.l.s4 1983009808
      %v2243 = vunpack.c.0.s8 %v2242
      %v2244 = vlaneseq
      %v2245 = vshrl.u32 %v2244, 7
      %v2246 = vsub.s32 %v2243, %v2245
      %v2247 = vrot.slane %v2224, %v2246
      %2248 = vrot.lane.b32.xlu0 %v2247, 37
      %v2249 = vpop.permute.xlu0 %2248
      %vm2251 = vcmask 722376
      %2252 = vst.msk [vmem:[#allocation3 + $0x10] sm:$0x3] %vm2251, %v2249
      %vm2253 = vcmask 1017576
      %2254 = vst.msk [vmem:[#allocation3 + $0x10] sm:$0x3] %vm2253, %v2249
      %vm2255 = vcmask 263176
      %2256 = vst.msk [vmem:[#allocation3 + $0x12] sm:$0x3] %vm2255, %v2249
      %v2257 = vld [vmem:[#allocation3] sm:$0xff]
      %v2258 = vld [vmem:[#allocation3 + $0x8] sm:$0xff]
      %v2259 = vld [vmem:[#allocation3 + $0x10] sm:$0x3]
      %v2260 = vld [vmem:[#allocation3 + $0x10] sm:$0xf]
      %v2264 = vcombine.high %v2257, %v2257
      %v2266 = vunpack.c.l.s4 1983009808
      %v2267 = vunpack.c.0.s8 %v2266
      %v2268 = vlaneseq
      %v2269 = vshrl.u32 %v2268, 7
      %v2270 = vsub.s32 %v2267, %v2269
      %v2271 = vrot.slane %v2257, %v2270
      %v2273 = vunpack.c.l.s4 1983009808
      %v2274 = vunpack.c.0.s8 %v2273
      %v2275 = vlaneseq
      %v2276 = vshrl.u32 %v2275, 7
      %v2277 = vsub.s32 %v2274, %v2276
      %v2278 = vrot.slane %v2264, %v2277
      %v2279 = vcombine.high %v2271, %v2271
      %v2280 = vcombine.high %v2278, %v2278
      %v2281 = vcombine.high %v2258, %v2258
      %v2283 = vunpack.c.l.s4 1983009808
      %v2284 = vunpack.c.0.s8 %v2283
      %v2285 = vlaneseq
      %v2286 = vshrl.u32 %v2285, 7
      %v2287 = vsub.s32 %v2284, %v2286
      %v2288 = vrot.slane %v2258, %v2287
      %v2290 = vunpack.c.l.s4 1983009808
      %v2291 = vunpack.c.0.s8 %v2290
      %v2292 = vlaneseq
      %v2293 = vshrl.u32 %v2292, 7
      %v2294 = vsub.s32 %v2291, %v2293
      %v2295 = vrot.slane %v2281, %v2294
      %v2296 = vcombine.high %v2288, %v2288
      %v2297 = vcombine.high %v2295, %v2295
      %v2299 = vunpack.c.l.s4 1983009808
      %v2300 = vunpack.c.0.s8 %v2299
      %v2301 = vlaneseq
      %v2302 = vshrl.u32 %v2301, 7
      %v2303 = vsub.s32 %v2300, %v2302
      %v2304 = vrot.slane %v2259, %v2303
      %v2306 = vcombine.low %v2257, %v2257
      %v2308 = vunpack.c.l.s4 1983009808
      %v2309 = vunpack.c.0.s8 %v2308
      %v2310 = vlaneseq
      %v2311 = vshrl.u32 %v2310, 7
      %v2312 = vsub.s32 %v2309, %v2311
      %v2313 = vrot.slane %v2306, %v2312
      %v2314 = vcombine.high %v2313, %v2313
      %v2315 = vcombine.low %v2258, %v2258
      %v2317 = vunpack.c.l.s4 1983009808
      %v2318 = vunpack.c.0.s8 %v2317
      %v2319 = vlaneseq
      %v2320 = vshrl.u32 %v2319, 7
      %v2321 = vsub.s32 %v2318, %v2320
      %v2322 = vrot.slane %v2315, %v2321
      %v2323 = vcombine.high %v2322, %v2322
      %v2324 = vcombine.low %v2260, %v2260
      %v2326 = vunpack.c.l.s4 1983009808
      %v2327 = vunpack.c.0.s8 %v2326
      %v2328 = vlaneseq
      %v2329 = vshrl.u32 %v2328, 7
      %v2330 = vsub.s32 %v2327, %v2329
      %v2331 = vrot.slane %v2324, %v2330
      %v2333 = vunpack.c.l.s4 1983009808
      %v2334 = vunpack.c.0.s8 %v2333
      %v2335 = vlaneseq
      %v2336 = vshrl.u32 %v2335, 7
      %v2337 = vsub.s32 %v2334, %v2336
      %v2338 = vrot.slane %v2260, %v2337
      %v2339 = vcombine.high %v2331, %v2331
      %2340 = vrot.lane.b32.xlu0 %v2313, 127
      %v2341 = vpop.permute.xlu0 %2340
      %2342 = vrot.lane.b32.xlu0 %v2314, 127
      %v2343 = vpop.permute.xlu0 %2342
      %2344 = vrot.lane.b32.xlu0 %v2271, 127
      %v2345 = vpop.permute.xlu0 %2344
      %2346 = vrot.lane.b32.xlu0 %v2279, 127
      %v2347 = vpop.permute.xlu0 %2346
      %2348 = vrot.lane.b32.xlu0 %v2322, 127
      %v2349 = vpop.permute.xlu0 %2348
      %2350 = vrot.lane.b32.xlu0 %v2323, 127
      %v2351 = vpop.permute.xlu0 %2350
      %2352 = vrot.lane.b32.xlu0 %v2288, 127
      %v2353 = vpop.permute.xlu0 %2352
      %2354 = vrot.lane.b32.xlu0 %v2296, 127
      %v2355 = vpop.permute.xlu0 %2354
      %2356 = vrot.lane.b32.xlu0 %v2331, 127
      %v2357 = vpop.permute.xlu0 %2356
      %2358 = vrot.lane.b32.xlu0 %v2339, 127
      %v2359 = vpop.permute.xlu0 %2358
      %v2360 = vsel %vm1255, %v2341, %v2343
      %v2361 = vsel %vm1255, %v2343, %v2345
      %v2362 = vsel %vm1255, %v2345, %v2347
      %v2363 = vsel %vm1255, %v2347, %v2349
      %v2364 = vsel %vm1255, %v2349, %v2351
      %v2365 = vsel %vm1255, %v2351, %v2353
      %v2366 = vsel %vm1255, %v2353, %v2355
      %v2367 = vsel %vm1255, %v2355, %v2357
      %v2368 = vsel %vm1255, %v2357, %v2359
      %v2369 = vcombine.low %v2271, %v2271
      %v2370 = vcombine.low %v2278, %v2278
      %v2371 = vcombine.low %v2288, %v2288
      %v2372 = vcombine.low %v2295, %v2295
      %v2373 = vcombine.low %v2338, %v2338
      %2374 = vrot.lane.b32.xlu0 %v2369, 126
      %v2375 = vpop.permute.xlu0 %2374
      %2376 = vrot.lane.b32.xlu0 %v2271, 126
      %v2377 = vpop.permute.xlu0 %2376
      %2378 = vrot.lane.b32.xlu0 %v2370, 126
      %v2379 = vpop.permute.xlu0 %2378
      %2380 = vrot.lane.b32.xlu0 %v2278, 126
      %v2381 = vpop.permute.xlu0 %2380
      %2382 = vrot.lane.b32.xlu0 %v2371, 126
      %v2383 = vpop.permute.xlu0 %2382
      %2384 = vrot.lane.b32.xlu0 %v2288, 126
      %v2385 = vpop.permute.xlu0 %2384
      %2386 = vrot.lane.b32.xlu0 %v2372, 126
      %v2387 = vpop.permute.xlu0 %2386
      %2388 = vrot.lane.b32.xlu0 %v2295, 126
      %v2389 = vpop.permute.xlu0 %2388
      %2390 = vrot.lane.b32.xlu0 %v2373, 126
      %v2391 = vpop.permute.xlu0 %2390
      %2392 = vrot.lane.b32.xlu0 %v2338, 126
      %v2393 = vpop.permute.xlu0 %2392
      %v2394 = vsel %vm1290, %v2375, %v2377
      %v2395 = vsel %vm1290, %v2377, %v2379
      %v2396 = vsel %vm1290, %v2379, %v2381
      %v2397 = vsel %vm1290, %v2381, %v2383
      %v2398 = vsel %vm1290, %v2383, %v2385
      %v2399 = vsel %vm1290, %v2385, %v2387
      %v2400 = vsel %vm1290, %v2387, %v2389
      %v2401 = vsel %vm1290, %v2389, %v2391
      %v2402 = vsel %vm1290, %v2391, %v2393
      %v2403 = vcombine.low %v2313, %v2313
      %v2404 = vcombine.low %v2322, %v2322
      %v2405 = vcombine.low %v2331, %v2331
      %2406 = vrot.lane.b32.xlu0 %v2403, 92
      %v2407 = vpop.permute.xlu0 %2406
      %2408 = vrot.lane.b32.xlu0 %v2313, 92
      %v2409 = vpop.permute.xlu0 %2408
      %2410 = vrot.lane.b32.xlu0 %v2369, 92
      %v2411 = vpop.permute.xlu0 %2410
      %2412 = vrot.lane.b32.xlu0 %v2271, 92
      %v2413 = vpop.permute.xlu0 %2412
      %2414 = vrot.lane.b32.xlu0 %v2404, 92
      %v2415 = vpop.permute.xlu0 %2414
      %2416 = vrot.lane.b32.xlu0 %v2322, 92
      %v2417 = vpop.permute.xlu0 %2416
      %2418 = vrot.lane.b32.xlu0 %v2371, 92
      %v2419 = vpop.permute.xlu0 %2418
      %2420 = vrot.lane.b32.xlu0 %v2288, 92
      %v2421 = vpop.permute.xlu0 %2420
      %2422 = vrot.lane.b32.xlu0 %v2405, 92
      %v2423 = vpop.permute.xlu0 %2422
      %2424 = vrot.lane.b32.xlu0 %v2331, 92
      %v2425 = vpop.permute.xlu0 %2424
      %v2426 = vsel %vm1323, %v2407, %v2409
      %v2427 = vsel %vm1323, %v2409, %v2411
      %v2428 = vsel %vm1323, %v2411, %v2413
      %v2429 = vsel %vm1323, %v2413, %v2415
      %v2430 = vsel %vm1323, %v2415, %v2417
      %v2431 = vsel %vm1323, %v2417, %v2419
      %v2432 = vsel %vm1323, %v2419, %v2421
      %v2433 = vsel %vm1323, %v2421, %v2423
      %v2434 = vsel %vm1323, %v2423, %v2425
      %v2435 = vcombine.high %v2338, %v2338
      %2436 = vrot.lane.b32.xlu0 %v2271, 91
      %v2437 = vpop.permute.xlu0 %2436
      %2438 = vrot.lane.b32.xlu0 %v2279, 91
      %v2439 = vpop.permute.xlu0 %2438
      %2440 = vrot.lane.b32.xlu0 %v2278, 91
      %v2441 = vpop.permute.xlu0 %2440
      %2442 = vrot.lane.b32.xlu0 %v2280, 91
      %v2443 = vpop.permute.xlu0 %2442
      %2444 = vrot.lane.b32.xlu0 %v2288, 91
      %v2445 = vpop.permute.xlu0 %2444
      %2446 = vrot.lane.b32.xlu0 %v2296, 91
      %v2447 = vpop.permute.xlu0 %2446
      %2448 = vrot.lane.b32.xlu0 %v2295, 91
      %v2449 = vpop.permute.xlu0 %2448
      %2450 = vrot.lane.b32.xlu0 %v2297, 91
      %v2451 = vpop.permute.xlu0 %2450
      %2452 = vrot.lane.b32.xlu0 %v2338, 91
      %v2453 = vpop.permute.xlu0 %2452
      %2454 = vrot.lane.b32.xlu0 %v2435, 91
      %v2455 = vpop.permute.xlu0 %2454
      %v2456 = vsel %vm1354, %v2437, %v2439
      %v2457 = vsel %vm1354, %v2439, %v2441
      %v2458 = vsel %vm1354, %v2441, %v2443
      %v2459 = vsel %vm1354, %v2443, %v2445
      %v2460 = vsel %vm1354, %v2445, %v2447
      %v2461 = vsel %vm1354, %v2447, %v2449
      %v2462 = vsel %vm1354, %v2449, %v2451
      %v2463 = vsel %vm1354, %v2451, %v2453
      %v2464 = vsel %vm1354, %v2453, %v2455
      %2465 = vrot.lane.b32.xlu0 %v2313, 90
      %v2466 = vpop.permute.xlu0 %2465
      %2467 = vrot.lane.b32.xlu0 %v2314, 90
      %v2468 = vpop.permute.xlu0 %2467
      %2469 = vrot.lane.b32.xlu0 %v2271, 90
      %v2470 = vpop.permute.xlu0 %2469
      %2471 = vrot.lane.b32.xlu0 %v2279, 90
      %v2472 = vpop.permute.xlu0 %2471
      %2473 = vrot.lane.b32.xlu0 %v2322, 90
      %v2474 = vpop.permute.xlu0 %2473
      %2475 = vrot.lane.b32.xlu0 %v2323, 90
      %v2476 = vpop.permute.xlu0 %2475
      %2477 = vrot.lane.b32.xlu0 %v2288, 90
      %v2478 = vpop.permute.xlu0 %2477
      %2479 = vrot.lane.b32.xlu0 %v2296, 90
      %v2480 = vpop.permute.xlu0 %2479
      %2481 = vrot.lane.b32.xlu0 %v2331, 90
      %v2482 = vpop.permute.xlu0 %2481
      %2483 = vrot.lane.b32.xlu0 %v2339, 90
      %v2484 = vpop.permute.xlu0 %2483
      %v2485 = vsel %vm1384, %v2466, %v2468
      %v2486 = vsel %vm1384, %v2468, %v2470
      %v2487 = vsel %vm1384, %v2470, %v2472
      %v2488 = vsel %vm1384, %v2472, %v2474
      %v2489 = vsel %vm1384, %v2474, %v2476
      %v2490 = vsel %vm1384, %v2476, %v2478
      %v2491 = vsel %vm1384, %v2478, %v2480
      %v2492 = vsel %vm1384, %v2480, %v2482
      %v2493 = vsel %vm1384, %v2482, %v2484
      %2494 = vrot.lane.b32.xlu0 %v2369, 56
      %v2495 = vpop.permute.xlu0 %2494
      %2496 = vrot.lane.b32.xlu0 %v2271, 56
      %v2497 = vpop.permute.xlu0 %2496
      %2498 = vrot.lane.b32.xlu0 %v2370, 56
      %v2499 = vpop.permute.xlu0 %2498
      %2500 = vrot.lane.b32.xlu0 %v2278, 56
      %v2501 = vpop.permute.xlu0 %2500
      %2502 = vrot.lane.b32.xlu0 %v2371, 56
      %v2503 = vpop.permute.xlu0 %2502
      %2504 = vrot.lane.b32.xlu0 %v2288, 56
      %v2505 = vpop.permute.xlu0 %2504
      %2506 = vrot.lane.b32.xlu0 %v2372, 56
      %v2507 = vpop.permute.xlu0 %2506
      %2508 = vrot.lane.b32.xlu0 %v2295, 56
      %v2509 = vpop.permute.xlu0 %2508
      %2510 = vrot.lane.b32.xlu0 %v2373, 56
      %v2511 = vpop.permute.xlu0 %2510
      %2512 = vrot.lane.b32.xlu0 %v2338, 56
      %v2513 = vpop.permute.xlu0 %2512
      %v2514 = vsel %vm1414, %v2495, %v2497
      %v2515 = vsel %vm1414, %v2497, %v2499
      %v2516 = vsel %vm1414, %v2499, %v2501
      %v2517 = vsel %vm1414, %v2501, %v2503
      %v2518 = vsel %vm1414, %v2503, %v2505
      %v2519 = vsel %vm1414, %v2505, %v2507
      %v2520 = vsel %vm1414, %v2507, %v2509
      %v2521 = vsel %vm1414, %v2509, %v2511
      %v2522 = vsel %vm1414, %v2511, %v2513
      %2523 = vrot.lane.b32.xlu0 %v2403, 55
      %v2524 = vpop.permute.xlu0 %2523
      %2525 = vrot.lane.b32.xlu0 %v2313, 55
      %v2526 = vpop.permute.xlu0 %2525
      %2527 = vrot.lane.b32.xlu0 %v2369, 55
      %v2528 = vpop.permute.xlu0 %2527
      %2529 = vrot.lane.b32.xlu0 %v2271, 55
      %v2530 = vpop.permute.xlu0 %2529
      %2531 = vrot.lane.b32.xlu0 %v2404, 55
      %v2532 = vpop.permute.xlu0 %2531
      %2533 = vrot.lane.b32.xlu0 %v2322, 55
      %v2534 = vpop.permute.xlu0 %2533
      %2535 = vrot.lane.b32.xlu0 %v2371, 55
      %v2536 = vpop.permute.xlu0 %2535
      %2537 = vrot.lane.b32.xlu0 %v2288, 55
      %v2538 = vpop.permute.xlu0 %2537
      %2539 = vrot.lane.b32.xlu0 %v2405, 55
      %v2540 = vpop.permute.xlu0 %2539
      %2541 = vrot.lane.b32.xlu0 %v2331, 55
      %v2542 = vpop.permute.xlu0 %2541
      %v2543 = vsel %vm1444, %v2524, %v2526
      %v2544 = vsel %vm1444, %v2526, %v2528
      %v2545 = vsel %vm1444, %v2528, %v2530
      %v2546 = vsel %vm1444, %v2530, %v2532
      %v2547 = vsel %vm1444, %v2532, %v2534
      %v2548 = vsel %vm1444, %v2534, %v2536
      %v2549 = vsel %vm1444, %v2536, %v2538
      %v2550 = vsel %vm1444, %v2538, %v2540
      %v2551 = vsel %vm1444, %v2540, %v2542
      %2552 = vrot.lane.b32.xlu0 %v2271, 54
      %v2553 = vpop.permute.xlu0 %2552
      %2554 = vrot.lane.b32.xlu0 %v2279, 54
      %v2555 = vpop.permute.xlu0 %2554
      %2556 = vrot.lane.b32.xlu0 %v2278, 54
      %v2557 = vpop.permute.xlu0 %2556
      %2558 = vrot.lane.b32.xlu0 %v2280, 54
      %v2559 = vpop.permute.xlu0 %2558
      %2560 = vrot.lane.b32.xlu0 %v2288, 54
      %v2561 = vpop.permute.xlu0 %2560
      %2562 = vrot.lane.b32.xlu0 %v2296, 54
      %v2563 = vpop.permute.xlu0 %2562
      %2564 = vrot.lane.b32.xlu0 %v2295, 54
      %v2565 = vpop.permute.xlu0 %2564
      %2566 = vrot.lane.b32.xlu0 %v2297, 54
      %v2567 = vpop.permute.xlu0 %2566
      %2568 = vrot.lane.b32.xlu0 %v2338, 54
      %v2569 = vpop.permute.xlu0 %2568
      %2570 = vrot.lane.b32.xlu0 %v2435, 54
      %v2571 = vpop.permute.xlu0 %2570
      %v2572 = vsel %vm1474, %v2553, %v2555
      %v2573 = vsel %vm1474, %v2555, %v2557
      %v2574 = vsel %vm1474, %v2557, %v2559
      %v2575 = vsel %vm1474, %v2559, %v2561
      %v2576 = vsel %vm1474, %v2561, %v2563
      %v2577 = vsel %vm1474, %v2563, %v2565
      %v2578 = vsel %vm1474, %v2565, %v2567
      %v2579 = vsel %vm1474, %v2567, %v2569
      %v2580 = vsel %vm1474, %v2569, %v2571
      %v2583 = vsel %vm467, %v2271, %v2360
      %v2586 = vsel %vm467, %v2279, %v2361
      %v2589 = vsel %vm467, %v2278, %v2362
      %v2592 = vsel %vm467, %v2280, %v2363
      %v2595 = vsel %vm467, %v2288, %v2364
      %v2598 = vsel %vm467, %v2296, %v2365
      %v2601 = vsel %vm467, %v2295, %v2366
      %v2604 = vsel %vm467, %v2297, %v2367
      %v2607 = vsel %vm467, %v2304, %v2368
      %v2609 = vsel %vm1511, %v2583, %v2394
      %v2611 = vsel %vm1511, %v2586, %v2395
      %v2613 = vsel %vm1511, %v2589, %v2396
      %v2615 = vsel %vm1511, %v2592, %v2397
      %v2617 = vsel %vm1511, %v2595, %v2398
      %v2619 = vsel %vm1511, %v2598, %v2399
      %v2621 = vsel %vm1511, %v2601, %v2400
      %v2623 = vsel %vm1511, %v2604, %v2401
      %v2625 = vsel %vm1511, %v2607, %v2402
      %v2627 = vsel %vm1530, %v2609, %v2426
      %v2630 = vsel %vm1530, %v2611, %v2427
      %v2633 = vsel %vm1530, %v2613, %v2428
      %v2636 = vsel %vm1530, %v2615, %v2429
      %v2639 = vsel %vm1530, %v2617, %v2430
      %v2642 = vsel %vm1530, %v2619, %v2431
      %v2645 = vsel %vm1530, %v2621, %v2432
      %v2648 = vsel %vm1530, %v2623, %v2433
      %v2651 = vsel %vm1530, %v2625, %v2434
      %v2655 = vsel %vm467, %v2456, %v2485
      %v2658 = vsel %vm467, %v2457, %v2486
      %v2661 = vsel %vm467, %v2458, %v2487
      %v2664 = vsel %vm467, %v2459, %v2488
      %v2667 = vsel %vm467, %v2460, %v2489
      %v2670 = vsel %vm467, %v2461, %v2490
      %v2673 = vsel %vm467, %v2462, %v2491
      %v2676 = vsel %vm467, %v2463, %v2492
      %v2679 = vsel %vm467, %v2464, %v2493
      %v2681 = vsel %vm1511, %v2655, %v2514
      %v2683 = vsel %vm1511, %v2658, %v2515
      %v2685 = vsel %vm1511, %v2661, %v2516
      %v2687 = vsel %vm1511, %v2664, %v2517
      %v2689 = vsel %vm1511, %v2667, %v2518
      %v2691 = vsel %vm1511, %v2670, %v2519
      %v2693 = vsel %vm1511, %v2673, %v2520
      %v2695 = vsel %vm1511, %v2676, %v2521
      %v2697 = vsel %vm1511, %v2679, %v2522
      %v2699 = vsel %vm1530, %v2681, %v2543
      %v2702 = vsel %vm1530, %v2683, %v2544
      %v2705 = vsel %vm1530, %v2685, %v2545
      %v2708 = vsel %vm1530, %v2687, %v2546
      %v2711 = vsel %vm1530, %v2689, %v2547
      %v2714 = vsel %vm1530, %v2691, %v2548
      %v2717 = vsel %vm1530, %v2693, %v2549
      %v2720 = vsel %vm1530, %v2695, %v2550
      %v2723 = vsel %vm1530, %v2697, %v2551
      %v2725 = vld [vmem:[%s5] sm:$0xf]
      %v2727 = vsel %vm1637, %v2725, 0
      %v2730 = vsel %vm467, %v2572, 0
      %v2733 = vsel %vm467, %v2573, 0
      %v2736 = vsel %vm467, %v2574, 0
      %v2739 = vsel %vm467, %v2575, 0
      %v2742 = vsel %vm467, %v2576, 0
      %v2745 = vsel %vm467, %v2577, 0
      %v2748 = vsel %vm467, %v2578, 0
      %v2751 = vsel %vm467, %v2579, 0
      %v2754 = vsel %vm467, %v2580, 0
      %2756 = vmatprep.subr.bf16.mxu0 0
      %2757 = vmatpush1.bf16.msra.mxu0 0
      %2758 = vmatprep.subr.bf16.mxu0 0
      %2759 = vmatpush1.bf16.msra.mxu0 0
      %2760 = vmatprep.subr.bf16.mxu0 0
      %2761 = vmatpush1.bf16.msra.mxu0 0
      %2762 = vmatprep.subr.bf16.mxu0 0
      %2763 = vmatpush1.bf16.msra.mxu0 0
      %2764 = vmatprep.subr.bf16.mxu0 0
      %2765 = vmatpush1.bf16.msra.mxu0 0
      %2766 = vmatprep.subr.bf16.mxu0 %v2733
      %2767 = vmatpush1.bf16.msra.mxu0 %v2730
      %2768 = vmatprep.subr.bf16.mxu0 %v2702
      %2769 = vmatpush1.bf16.msra.mxu0 %v2699
      %2770 = vmatprep.subr.bf16.mxu0 %v2630
      %2771 = vmatpush1.bf16.msra.mxu0 %v2627
      %2772 = vmatprep.subr.bf16.mxu0 0
      %2773 = vmatpush2.bf16.msra.mxu0 0
      %2774 = vmatprep.subr.bf16.mxu0 0
      %2775 = vmatpush2.bf16.msra.mxu0 0
      %2776 = vmatprep.subr.bf16.mxu0 0
      %2777 = vmatpush2.bf16.msra.mxu0 0
      %2778 = vmatprep.subr.bf16.mxu0 0
      %2779 = vmatpush2.bf16.msra.mxu0 0
      %2780 = vmatprep.subr.bf16.mxu0 0
      %2781 = vmatpush2.bf16.msra.mxu0 0
      %2782 = vmatprep.subr.bf16.mxu0 0
      %2783 = vmatpush2.bf16.msra.mxu0 0
      %2784 = vmatprep.subr.bf16.mxu0 0
      %2785 = vmatpush2.bf16.msra.mxu0 0
      %2786 = vmatprep.subr.bf16.mxu0 0
      %2787 = vmatpush2.bf16.msra.mxu0 0
      %2788 = vmatprep.mubr.bf16.mxu0 0
      %2789 = vmatmul.mubr.bf16.gmra.mxu0 %v2727
      %v2790 = vpop.f32.mrf.mxu0
      %v2791 = vadd.f32 0.0, %v2790
      %v2792 = vpop.f32.mrf.mxu0
      %v2793 = vadd.f32 0.0, %v2792
      %v2794 = vpop.f32.mrf.mxu0
      %v2795 = vpop.f32.mrf.mxu0
      %2796 = vdwg.mxu0
      %2797 = vmatprep.subr.bf16.mxu0 0
      %2798 = vmatpush1.bf16.msra.mxu0 0
      %2799 = vmatprep.subr.bf16.mxu0 0
      %2800 = vmatpush1.bf16.msra.mxu0 0
      %2801 = vmatprep.subr.bf16.mxu0 0
      %2802 = vmatpush1.bf16.msra.mxu0 0
      %2803 = vmatprep.subr.bf16.mxu0 0
      %2804 = vmatpush1.bf16.msra.mxu0 0
      %2805 = vmatprep.subr.bf16.mxu0 0
      %2806 = vmatpush1.bf16.msra.mxu0 0
      %2807 = vmatprep.subr.bf16.mxu0 %v2739
      %2808 = vmatpush1.bf16.msra.mxu0 %v2736
      %2809 = vmatprep.subr.bf16.mxu0 %v2708
      %2810 = vmatpush1.bf16.msra.mxu0 %v2705
      %2811 = vmatprep.subr.bf16.mxu0 %v2636
      %2812 = vmatpush1.bf16.msra.mxu0 %v2633
      %2813 = vmatprep.subr.bf16.mxu0 0
      %2814 = vmatpush2.bf16.msra.mxu0 0
      %2815 = vmatprep.subr.bf16.mxu0 0
      %2816 = vmatpush2.bf16.msra.mxu0 0
      %2817 = vmatprep.subr.bf16.mxu0 0
      %2818 = vmatpush2.bf16.msra.mxu0 0
      %2819 = vmatprep.subr.bf16.mxu0 0
      %2820 = vmatpush2.bf16.msra.mxu0 0
      %2821 = vmatprep.subr.bf16.mxu0 0
      %2822 = vmatpush2.bf16.msra.mxu0 0
      %2823 = vmatprep.subr.bf16.mxu0 0
      %2824 = vmatpush2.bf16.msra.mxu0 0
      %2825 = vmatprep.subr.bf16.mxu0 0
      %2826 = vmatpush2.bf16.msra.mxu0 0
      %2827 = vmatprep.subr.bf16.mxu0 0
      %2828 = vmatpush2.bf16.msra.mxu0 0
      %2829 = vmatprep.mubr.bf16.mxu0 0
      %2830 = vmatmul.mubr.bf16.gmra.mxu0 %v2727
      %v2831 = vpop.f32.mrf.mxu0
      %v2832 = vadd.f32 0.0, %v2831
      %v2833 = vpop.f32.mrf.mxu0
      %v2834 = vadd.f32 0.0, %v2833
      %v2835 = vpop.f32.mrf.mxu0
      %v2836 = vpop.f32.mrf.mxu0
      %2837 = vdwg.mxu0
      %2838 = vmatprep.subr.bf16.mxu0 0
      %2839 = vmatpush1.bf16.msra.mxu0 0
      %2840 = vmatprep.subr.bf16.mxu0 0
      %2841 = vmatpush1.bf16.msra.mxu0 0
      %2842 = vmatprep.subr.bf16.mxu0 0
      %2843 = vmatpush1.bf16.msra.mxu0 0
      %2844 = vmatprep.subr.bf16.mxu0 0
      %2845 = vmatpush1.bf16.msra.mxu0 0
      %2846 = vmatprep.subr.bf16.mxu0 0
      %2847 = vmatpush1.bf16.msra.mxu0 0
      %2848 = vmatprep.subr.bf16.mxu0 %v2745
      %2849 = vmatpush1.bf16.msra.mxu0 %v2742
      %2850 = vmatprep.subr.bf16.mxu0 %v2714
      %2851 = vmatpush1.bf16.msra.mxu0 %v2711
      %2852 = vmatprep.subr.bf16.mxu0 %v2642
      %2853 = vmatpush1.bf16.msra.mxu0 %v2639
      %2854 = vmatprep.subr.bf16.mxu0 0
      %2855 = vmatpush2.bf16.msra.mxu0 0
      %2856 = vmatprep.subr.bf16.mxu0 0
      %2857 = vmatpush2.bf16.msra.mxu0 0
      %2858 = vmatprep.subr.bf16.mxu0 0
      %2859 = vmatpush2.bf16.msra.mxu0 0
      %2860 = vmatprep.subr.bf16.mxu0 0
      %2861 = vmatpush2.bf16.msra.mxu0 0
      %2862 = vmatprep.subr.bf16.mxu0 0
      %2863 = vmatpush2.bf16.msra.mxu0 0
      %2864 = vmatprep.subr.bf16.mxu0 0
      %2865 = vmatpush2.bf16.msra.mxu0 0
      %2866 = vmatprep.subr.bf16.mxu0 0
      %2867 = vmatpush2.bf16.msra.mxu0 0
      %2868 = vmatprep.subr.bf16.mxu0 0
      %2869 = vmatpush2.bf16.msra.mxu0 0
      %2870 = vmatprep.mubr.bf16.mxu0 0
      %2871 = vmatmul.mubr.bf16.gmra.mxu0 %v2727
      %v2872 = vpop.f32.mrf.mxu0
      %v2873 = vadd.f32 0.0, %v2872
      %v2874 = vpop.f32.mrf.mxu0
      %v2875 = vadd.f32 0.0, %v2874
      %v2876 = vpop.f32.mrf.mxu0
      %v2877 = vpop.f32.mrf.mxu0
      %2878 = vdwg.mxu0
      %2879 = vmatprep.subr.bf16.mxu0 0
      %2880 = vmatpush1.bf16.msra.mxu0 0
      %2881 = vmatprep.subr.bf16.mxu0 0
      %2882 = vmatpush1.bf16.msra.mxu0 0
      %2883 = vmatprep.subr.bf16.mxu0 0
      %2884 = vmatpush1.bf16.msra.mxu0 0
      %2885 = vmatprep.subr.bf16.mxu0 0
      %2886 = vmatpush1.bf16.msra.mxu0 0
      %2887 = vmatprep.subr.bf16.mxu0 0
      %2888 = vmatpush1.bf16.msra.mxu0 0
      %2889 = vmatprep.subr.bf16.mxu0 %v2751
      %2890 = vmatpush1.bf16.msra.mxu0 %v2748
      %2891 = vmatprep.subr.bf16.mxu0 %v2720
      %2892 = vmatpush1.bf16.msra.mxu0 %v2717
      %2893 = vmatprep.subr.bf16.mxu0 %v2648
      %2894 = vmatpush1.bf16.msra.mxu0 %v2645
      %2895 = vmatprep.subr.bf16.mxu0 0
      %2896 = vmatpush2.bf16.msra.mxu0 0
      %2897 = vmatprep.subr.bf16.mxu0 0
      %2898 = vmatpush2.bf16.msra.mxu0 0
      %2899 = vmatprep.subr.bf16.mxu0 0
      %2900 = vmatpush2.bf16.msra.mxu0 0
      %2901 = vmatprep.subr.bf16.mxu0 0
      %2902 = vmatpush2.bf16.msra.mxu0 0
      %2903 = vmatprep.subr.bf16.mxu0 0
      %2904 = vmatpush2.bf16.msra.mxu0 0
      %2905 = vmatprep.subr.bf16.mxu0 0
      %2906 = vmatpush2.bf16.msra.mxu0 0
      %2907 = vmatprep.subr.bf16.mxu0 0
      %2908 = vmatpush2.bf16.msra.mxu0 0
      %2909 = vmatprep.subr.bf16.mxu0 0
      %2910 = vmatpush2.bf16.msra.mxu0 0
      %2911 = vmatprep.mubr.bf16.mxu0 0
      %2912 = vmatmul.mubr.bf16.gmra.mxu0 %v2727
      %v2913 = vpop.f32.mrf.mxu0
      %v2914 = vadd.f32 0.0, %v2913
      %v2915 = vpop.f32.mrf.mxu0
      %v2916 = vadd.f32 0.0, %v2915
      %v2917 = vpop.f32.mrf.mxu0
      %v2918 = vpop.f32.mrf.mxu0
      %2919 = vdwg.mxu0
      %2920 = vmatprep.subr.bf16.mxu0 0
      %2921 = vmatpush1.bf16.msra.mxu0 0
      %2922 = vmatprep.subr.bf16.mxu0 0
      %2923 = vmatpush1.bf16.msra.mxu0 0
      %2924 = vmatprep.subr.bf16.mxu0 0
      %2925 = vmatpush1.bf16.msra.mxu0 0
      %2926 = vmatprep.subr.bf16.mxu0 0
      %2927 = vmatpush1.bf16.msra.mxu0 0
      %2928 = vmatprep.subr.bf16.mxu0 0
      %2929 = vmatpush1.bf16.msra.mxu0 0
      %2930 = vmatprep.subr.bf16.mxu0 0
      %2931 = vmatpush1.bf16.msra.mxu0 %v2754
      %2932 = vmatprep.subr.bf16.mxu0 0
      %2933 = vmatpush1.bf16.msra.mxu0 %v2723
      %2934 = vmatprep.subr.bf16.mxu0 0
      %2935 = vmatpush1.bf16.msra.mxu0 %v2651
      %2936 = vmatprep.subr.bf16.mxu0 0
      %2937 = vmatpush2.bf16.msra.mxu0 0
      %2938 = vmatprep.subr.bf16.mxu0 0
      %2939 = vmatpush2.bf16.msra.mxu0 0
      %2940 = vmatprep.subr.bf16.mxu0 0
      %2941 = vmatpush2.bf16.msra.mxu0 0
      %2942 = vmatprep.subr.bf16.mxu0 0
      %2943 = vmatpush2.bf16.msra.mxu0 0
      %2944 = vmatprep.subr.bf16.mxu0 0
      %2945 = vmatpush2.bf16.msra.mxu0 0
      %2946 = vmatprep.subr.bf16.mxu0 0
      %2947 = vmatpush2.bf16.msra.mxu0 0
      %2948 = vmatprep.subr.bf16.mxu0 0
      %2949 = vmatpush2.bf16.msra.mxu0 0
      %2950 = vmatprep.subr.bf16.mxu0 0
      %2951 = vmatpush2.bf16.msra.mxu0 0
      %2952 = vmatprep.mubr.bf16.mxu0 0
      %2953 = vmatmul.mubr.bf16.gmra.mxu0 %v2727
      %v2954 = vpop.f32.mrf.mxu0
      %v2955 = vadd.f32 0.0, %v2954
      %v2956 = vpop.f32.mrf.mxu0
      %v2957 = vpop.f32.mrf.mxu0
      %v2958 = vpop.f32.mrf.mxu0
      %2959 = vdwg.mxu0
      %v2960 = vld [vmem:[%s6] sm:$0xff]
      %2962 = vset.pattern.permute.xlu0 0
      %2963 = vperm.xlu0 %2962, %v2960
      %v2964 = vpop.permute.xlu0 %2963
      %v2966 = vmul.f32 %v2791, %v2964
      %v2967 = vmul.f32 %v2793, %v2964
      %v2968 = vmul.f32 %v2832, %v2964
      %v2969 = vmul.f32 %v2834, %v2964
      %v2970 = vmul.f32 %v2873, %v2964
      %v2971 = vmul.f32 %v2875, %v2964
      %v2972 = vmul.f32 %v2914, %v2964
      %v2973 = vmul.f32 %v2916, %v2964
      %v2974 = vmul.f32 %v2955, %v2964
      %v2975 = vld [vmem:[%s7] sm:$0xff]
      %2977 = vset.pattern.permute.xlu0 0
      %2978 = vperm.xlu0 %2977, %v2975
      %v2979 = vpop.permute.xlu0 %2978
      %v2981 = vadd.f32 %v2966, %v2979
      %v2982 = vadd.f32 %v2967, %v2979
      %v2983 = vadd.f32 %v2968, %v2979
      %v2984 = vadd.f32 %v2969, %v2979
      %v2985 = vadd.f32 %v2970, %v2979
      %v2986 = vadd.f32 %v2971, %v2979
      %v2987 = vadd.f32 %v2972, %v2979
      %v2988 = vadd.f32 %v2973, %v2979
      %v2989 = vadd.f32 %v2974, %v2979
      %v2990 = vmax.f32 %v2981, 0.0
      %v2991 = vmax.f32 %v2982, 0.0
      %v2992 = vmax.f32 %v2983, 0.0
      %v2993 = vmax.f32 %v2984, 0.0
      %v2994 = vmax.f32 %v2985, 0.0
      %v2995 = vmax.f32 %v2986, 0.0
      %v2996 = vmax.f32 %v2987, 0.0
      %v2997 = vmax.f32 %v2988, 0.0
      %v2998 = vmax.f32 %v2989, 0.0
      %v3017 = vrot.slane %v1923, 4
      %v3018 = vrot.slane %v1932, 4
      %v3019 = vsel %vm1511, %v3017, %v3018
      %v3020 = vrot.slane %v1924, 4
      %v3021 = vrot.slane %v1933, 4
      %v3022 = vsel %vm1511, %v3020, %v3021
      %v3023 = vrot.slane %v1925, 4
      %v3024 = vrot.slane %v1934, 4
      %v3025 = vsel %vm1511, %v3023, %v3024
      %v3026 = vrot.slane %v1926, 4
      %v3027 = vrot.slane %v1935, 4
      %v3028 = vsel %vm1511, %v3026, %v3027
      %v3029 = vrot.slane %v1927, 4
      %v3030 = vrot.slane %v1936, 4
      %v3031 = vsel %vm1511, %v3029, %v3030
      %v3032 = vrot.slane %v1928, 4
      %v3033 = vrot.slane %v1937, 4
      %v3034 = vsel %vm1511, %v3032, %v3033
      %v3035 = vrot.slane %v1929, 4
      %v3036 = vrot.slane %v1938, 4
      %v3037 = vsel %vm1511, %v3035, %v3036
      %v3038 = vrot.slane %v1930, 4
      %v3039 = vrot.slane %v1939, 4
      %v3040 = vsel %vm1511, %v3038, %v3039
      %v3041 = vrot.slane %v1931, 4
      %v3042 = vrot.slane %v1940, 4
      %v3043 = vsel %vm1511, %v3041, %v3042
      %v3053 = vadd.f32 %v2990, %v3019
      %v3054 = vadd.f32 %v2991, %v3022
      %v3055 = vadd.f32 %v2992, %v3025
      %v3056 = vadd.f32 %v2993, %v3028
      %v3057 = vadd.f32 %v2994, %v3031
      %v3058 = vadd.f32 %v2995, %v3034
      %v3059 = vadd.f32 %v2996, %v3037
      %v3060 = vadd.f32 %v2997, %v3040
      %v3061 = vadd.f32 %v2998, %v3043
      %v3062 = vld [vmem:[%s344] sm:$0xff]
      %v3063 = vld [vmem:[%s344 + $0x8] sm:$0x1]
      %v3066 = vlaneseq
      %v3067 = vshrl.u32 %v3066, 7
      %v3068 = vsub.s32 0, %v3067
      %v3069 = vrot.slane %v3062, %v3068
      %v3070 = vlaneseq
      %v3071 = vshrl.u32 %v3070, 7
      %v3072 = vsub.s32 1, %v3071
      %v3073 = vrot.slane %v3062, %v3072
      %v3074 = vlaneseq
      %v3075 = vshrl.u32 %v3074, 7
      %v3076 = vsub.s32 2, %v3075
      %v3077 = vrot.slane %v3062, %v3076
      %v3078 = vlaneseq
      %v3079 = vshrl.u32 %v3078, 7
      %v3080 = vsub.s32 3, %v3079
      %v3081 = vrot.slane %v3062, %v3080
      %v3082 = vlaneseq
      %v3083 = vshrl.u32 %v3082, 7
      %v3084 = vsub.s32 4, %v3083
      %v3085 = vrot.slane %v3062, %v3084
      %v3086 = vlaneseq
      %v3087 = vshrl.u32 %v3086, 7
      %v3088 = vsub.s32 5, %v3087
      %v3089 = vrot.slane %v3062, %v3088
      %v3090 = vlaneseq
      %v3091 = vshrl.u32 %v3090, 7
      %v3092 = vsub.s32 6, %v3091
      %v3093 = vrot.slane %v3062, %v3092
      %v3094 = vlaneseq
      %v3095 = vshrl.u32 %v3094, 7
      %v3096 = vsub.s32 7, %v3095
      %v3097 = vrot.slane %v3062, %v3096
      %v3098 = vlaneseq
      %v3099 = vshrl.u32 %v3098, 7
      %v3100 = vsub.s32 0, %v3099
      %v3101 = vrot.slane %v3063, %v3100
      %v3111 = vadd.f32 %v3053, %v3069
      %v3112 = vadd.f32 %v3054, %v3073
      %v3113 = vadd.f32 %v3055, %v3077
      %v3114 = vadd.f32 %v3056, %v3081
      %v3115 = vadd.f32 %v3057, %v3085
      %v3116 = vadd.f32 %v3058, %v3089
      %v3117 = vadd.f32 %v3059, %v3093
      %v3118 = vadd.f32 %v3060, %v3097
      %v3119 = vadd.f32 %v3061, %v3101
      %vm3120 = vcmask 261120
      %3121 = vst.msk [vmem:[%s349] sm:$0xff] %vm3120, %v3111
      %3123 = vrot.lane.b32.xlu0 %v3111, 124
      %v3124 = vpop.permute.xlu0 %3123
      %vm3126 = vcmask 523520
      %3127 = vst.msk [vmem:[%s349] sm:$0xff] %vm3126, %v3124
      %3128 = vrot.lane.b32.xlu0 %v3111, 120
      %v3129 = vpop.permute.xlu0 %3128
      %vm3131 = vcmask 785920
      %3132 = vst.msk [vmem:[%s349] sm:$0xff] %vm3131, %v3129
      %3134 = vrot.lane.b32.xlu0 %v3111, 116
      %v3135 = vpop.permute.xlu0 %3134
      %3136 = vrot.lane.b32.xlu0 %v3112, 116
      %v3137 = vpop.permute.xlu0 %3136
      %vm3138 = vcmask 949248
      %v3139 = vsel %vm3138, %v3135, %v3137
      %vm3141 = vcmask 1048320
      %3142 = vst.msk [vmem:[%s349] sm:$0xff] %vm3141, %v3139
      %3143 = vrot.lane.b32.xlu0 %v3112, 112
      %v3144 = vpop.permute.xlu0 %3143
      %3146 = vst.msk [vmem:[%s349 + $0x8] sm:$0xff] %vm3120, %v3144
      %3147 = vrot.lane.b32.xlu0 %v3112, 108
      %v3148 = vpop.permute.xlu0 %3147
      %3150 = vst.msk [vmem:[%s349 + $0x8] sm:$0xff] %vm3126, %v3148
      %3151 = vrot.lane.b32.xlu0 %v3112, 104
      %v3152 = vpop.permute.xlu0 %3151
      %3154 = vst.msk [vmem:[%s349 + $0x8] sm:$0xff] %vm3131, %v3152
      %3156 = vrot.lane.b32.xlu0 %v3112, 100
      %v3157 = vpop.permute.xlu0 %3156
      %3158 = vrot.lane.b32.xlu0 %v3113, 100
      %v3159 = vpop.permute.xlu0 %3158
      %vm3160 = vcmask 818176
      %v3161 = vsel %vm3160, %v3157, %v3159
      %3163 = vst.msk [vmem:[%s349 + $0x8] sm:$0xff] %vm3141, %v3161
      %3164 = vrot.lane.b32.xlu0 %v3113, 96
      %v3165 = vpop.permute.xlu0 %3164
      %3167 = vst.msk [vmem:[%s349 + $0x10] sm:$0xff] %vm3120, %v3165
      %3168 = vrot.lane.b32.xlu0 %v3113, 92
      %v3169 = vpop.permute.xlu0 %3168
      %3171 = vst.msk [vmem:[%s349 + $0x10] sm:$0xff] %vm3126, %v3169
      %3173 = vrot.lane.b32.xlu0 %v3113, 88
      %v3174 = vpop.permute.xlu0 %3173
      %3175 = vrot.lane.b32.xlu0 %v3114, 88
      %v3176 = vpop.permute.xlu0 %3175
      %vm3177 = vcmask 719872
      %v3178 = vsel %vm3177, %v3174, %v3176
      %3180 = vst.msk [vmem:[%s349 + $0x10] sm:$0xff] %vm3131, %v3178
      %3181 = vrot.lane.b32.xlu0 %v3114, 84
      %v3182 = vpop.permute.xlu0 %3181
      %3184 = vst.msk [vmem:[%s349 + $0x10] sm:$0xff] %vm3141, %v3182
      %3185 = vrot.lane.b32.xlu0 %v3114, 80
      %v3186 = vpop.permute.xlu0 %3185
      %3188 = vst.msk [vmem:[%s349 + $0x18] sm:$0xff] %vm3120, %v3186
      %3189 = vrot.lane.b32.xlu0 %v3114, 76
      %v3190 = vpop.permute.xlu0 %3189
      %3192 = vst.msk [vmem:[%s349 + $0x18] sm:$0xff] %vm3126, %v3190
      %3194 = vrot.lane.b32.xlu0 %v3114, 72
      %v3195 = vpop.permute.xlu0 %3194
      %3196 = vrot.lane.b32.xlu0 %v3115, 72
      %v3197 = vpop.permute.xlu0 %3196
      %vm3198 = vcmask 588800
      %v3199 = vsel %vm3198, %v3195, %v3197
      %3201 = vst.msk [vmem:[%s349 + $0x18] sm:$0xff] %vm3131, %v3199
      %3202 = vrot.lane.b32.xlu0 %v3115, 68
      %v3203 = vpop.permute.xlu0 %3202
      %3205 = vst.msk [vmem:[%s349 + $0x18] sm:$0xff] %vm3141, %v3203
      %3206 = vrot.lane.b32.xlu0 %v3115, 64
      %v3207 = vpop.permute.xlu0 %3206
      %3209 = vst.msk [vmem:[%s349 + $0x20] sm:$0xff] %vm3120, %v3207
      %3211 = vrot.lane.b32.xlu0 %v3115, 60
      %v3212 = vpop.permute.xlu0 %3211
      %3213 = vrot.lane.b32.xlu0 %v3116, 60
      %v3214 = vpop.permute.xlu0 %3213
      %vm3215 = vcmask 490496
      %v3216 = vsel %vm3215, %v3212, %v3214
      %3218 = vst.msk [vmem:[%s349 + $0x20] sm:$0xff] %vm3126, %v3216
      %3219 = vrot.lane.b32.xlu0 %v3116, 56
      %v3220 = vpop.permute.xlu0 %3219
      %3222 = vst.msk [vmem:[%s349 + $0x20] sm:$0xff] %vm3131, %v3220
      %3223 = vrot.lane.b32.xlu0 %v3116, 52
      %v3224 = vpop.permute.xlu0 %3223
      %3226 = vst.msk [vmem:[%s349 + $0x20] sm:$0xff] %vm3141, %v3224
      %3227 = vrot.lane.b32.xlu0 %v3116, 48
      %v3228 = vpop.permute.xlu0 %3227
      %3230 = vst.msk [vmem:[%s349 + $0x28] sm:$0xff] %vm3120, %v3228
      %3232 = vrot.lane.b32.xlu0 %v3116, 44
      %v3233 = vpop.permute.xlu0 %3232
      %3234 = vrot.lane.b32.xlu0 %v3117, 44
      %v3235 = vpop.permute.xlu0 %3234
      %vm3236 = vcmask 359424
      %v3237 = vsel %vm3236, %v3233, %v3235
      %3239 = vst.msk [vmem:[%s349 + $0x28] sm:$0xff] %vm3126, %v3237
      %3240 = vrot.lane.b32.xlu0 %v3117, 40
      %v3241 = vpop.permute.xlu0 %3240
      %3243 = vst.msk [vmem:[%s349 + $0x28] sm:$0xff] %vm3131, %v3241
      %3244 = vrot.lane.b32.xlu0 %v3117, 36
      %v3245 = vpop.permute.xlu0 %3244
      %3247 = vst.msk [vmem:[%s349 + $0x28] sm:$0xff] %vm3141, %v3245
      %3248 = vrot.lane.b32.xlu0 %v3117, 32
      %v3249 = vpop.permute.xlu0 %3248
      %3251 = vst.msk [vmem:[%s349 + $0x30] sm:$0xff] %vm3120, %v3249
      %3253 = vrot.lane.b32.xlu0 %v3118, 28
      %v3254 = vpop.permute.xlu0 %3253
      %3256 = vst.msk [vmem:[%s349 + $0x30] sm:$0xff] %vm3126, %v3254
      %3257 = vrot.lane.b32.xlu0 %v3118, 24
      %v3258 = vpop.permute.xlu0 %3257
      %3260 = vst.msk [vmem:[%s349 + $0x30] sm:$0xff] %vm3131, %v3258
      %3261 = vrot.lane.b32.xlu0 %v3118, 20
      %v3262 = vpop.permute.xlu0 %3261
      %3264 = vst.msk [vmem:[%s349 + $0x30] sm:$0xff] %vm3141, %v3262
      %3266 = vrot.lane.b32.xlu0 %v3118, 16
      %v3267 = vpop.permute.xlu0 %3266
      %3268 = vrot.lane.b32.xlu0 %v3119, 16
      %v3269 = vpop.permute.xlu0 %3268
      %v3270 = vsel %vm387, %v3267, %v3269
      %3272 = vst.msk [vmem:[%s349 + $0x38] sm:$0xff] %vm3120, %v3270
      %3273 = vrot.lane.b32.xlu0 %v3119, 12
      %v3274 = vpop.permute.xlu0 %3273
      %3276 = vst.msk [vmem:[%s349 + $0x38] sm:$0xff] %vm3126, %v3274
      %3277 = vrot.lane.b32.xlu0 %v3119, 8
      %v3278 = vpop.permute.xlu0 %3277
      %3280 = vst.msk [vmem:[%s349 + $0x38] sm:$0xff] %vm3131, %v3278
      %3281 = vrot.lane.b32.xlu0 %v3119, 4
      %v3282 = vpop.permute.xlu0 %3281
      %3284 = vst.msk [vmem:[%s349 + $0x38] sm:$0xff] %vm3141, %v3282
      %p3285 = scmp.lt.s32.totalorder %s20, 1
      %s3286 = scalar_select %p3285, %s20, 1
      %s3287 = smul.addr %s3286, 8
      %s3288 = smul.addr %s3287, 8
      %s3289 = scalar_lea.vmem %s9, %s3288
      // Predicated region
      $region57: #{simple_noise_res_up_conv_block.1} parent=55 // pred_check
        %p3290 = pneg %p237
      $region58: #{simple_noise_res_up_conv_block.1} parent=55 // pred_check_branch
        %3292 = sbr.rel (%p3290) target = $region60
      $region59: #{simple_noise_res_up_conv_block.1} parent=55 // pred_region
        _
      $region60: #{simple_noise_res_up_conv_block.1} parent=55 // pred_fallthru
        _
    $region56: #{simple_noise_res_up_conv_block.1} parent=5 // pred_fallthru
      _
    %p3293 = scmp.le.s32.totalorder 2, %s15
    // Predicated region
    $region61: #{simple_noise_res_up_conv_block.1} parent=5 // pred_check
      %p3294 = pneg %p3293
    $region62: #{simple_noise_res_up_conv_block.1} parent=5 // pred_check_branch
      %3296 = sbr.rel (%p3294) target = $region64
    $region63: #{simple_noise_res_up_conv_block.1} parent=5 // pred_region
      %s3297 = ssub.s32 %s15, 2
      // Predicated region
      $region65: #{simple_noise_res_up_conv_block.1} parent=63 // pred_check
        %p3298 = pneg %p243
      $region66: #{simple_noise_res_up_conv_block.1} parent=63 // pred_check_branch
        %3300 = sbr.rel (%p3298) target = $region68
      $region67: #{simple_noise_res_up_conv_block.1} parent=63 // pred_region
        %p3301 = scmp.lt.s32.totalorder %s21, 1
        %s3302 = scalar_select %p3301, %s21, 1
        %s3303 = smul.addr %s3302, 8
        %s3304 = smul.addr %s3303, 8
        %s3305 = scalar_lea.vmem %s9, %s3304
      $region68: #{simple_noise_res_up_conv_block.1} parent=63 // pred_fallthru
        _
    $region64: #{simple_noise_res_up_conv_block.1} parent=5 // pred_fallthru
      _
  $region6: #{simple_noise_res_up_conv_block.1} parent=0 // loop_footer
    %s19 = sadd.s32 1, %s15
  $region7: #{simple_noise_res_up_conv_block.1} parent=0 // loop_footer_branch
    %14 = sbr.rel target = $region3
  $region8: #{simple_noise_res_up_conv_block.1} parent=0 // loop_exit
    _

</llo_original>
